<compile_context>
chip_gen: v7x
topology: tpu7x:2x2x1
jax: 0.10.0
libtpu: 0.0.40
codegen_flags: <defaults>
</compile_context>

<pallas_src>
from functools import partial

import jax
import jax.numpy as jnp
from jax.experimental import pallas as pl
from jax.experimental.pallas import tpu as pltpu


# ----------------------------------------------------------------------------
# Pallas kernel (one grid step per batch element, no cross-step state)
# ----------------------------------------------------------------------------
def _mgac_kernel(
    x_ref,          # (1, D, NP)  f32   per-batch X, nodes on lanes
    adjT_ref,       # (NP, (SM+1)*NP) bf16  transposed adjacencies (+ full_adj), lane-stacked
    gcn_wT_ref,     # (SM, S, D)  f32
    gcn_bT_ref,     # (SM, S, 1)  f32
    attn_wT_ref,    # (SM, SM, S) f32   per-view transposed row blocks of attn weight
    attn_bT_ref,    # (SM, 1)     f32
    full_wT_ref,    # (S, D)      f32
    full_bT_ref,    # (S, 1)      f32
    back_wpT_ref,   # (D, S)      f32   back_w rows 0:S   (consumes z_p)
    back_wfT_ref,   # (D, S)      f32   back_w rows S:2S  (consumes full_out)
    back_bT_ref,    # (D, 1)      f32
    bias_wT_ref,    # (S, D)      f32
    bias_bT_ref,    # (S, 1)      f32
    fin_wpT_ref,    # (OUT, S)    f32
    fin_wfT_ref,    # (OUT, S)    f32
    fin_wbT_ref,    # (OUT, S)    f32
    fin_bT_ref,     # (OUT, 1)    f32
    out_ref,        # (1, OUT, NP) f32
    aw_ref,         # (1, SM, NP)  f32  per-batch attention weights
    *, selected_m: int, n_pad: int):
  x = x_ref[0]                                                          # (D, NP) f32

  # One MXU launch for all SM views + the adaptive graph (contract over nodes).
  # bf16 operands, f32 accumulation.
  ax_all = jnp.dot(x.astype(jnp.bfloat16), adjT_ref[...],
                   preferred_element_type=jnp.float32)                  # (D, (SM+1)*NP)

  # Per-view GCN + attention logits; view m's block starts at a 128-aligned lane.
  logits = attn_bT_ref[...]                                             # (SM, 1) -> broadcast
  gcn_outs = []
  for m in range(selected_m):
    ax_m = ax_all[:, m * n_pad:(m + 1) * n_pad]                         # (D, NP)
    g = jnp.dot(gcn_wT_ref[m], ax_m,
                preferred_element_type=jnp.float32) + gcn_bT_ref[m]     # (S, NP)
    g = jnp.maximum(g, 0.0)
    gcn_outs.append(g)
    logits = logits + jnp.dot(attn_wT_ref[m], g,
                              preferred_element_type=jnp.float32)       # (SM, NP)

  # Softmax over the SM view rows: 2-row sublane max/add on full-width vregs,
  # exact divide (no approx reciprocal -> no extra tolerance needed).
  mx = jnp.max(logits, axis=0, keepdims=True)                           # (1, NP)
  e = jnp.exp(logits - mx)                                              # (SM, NP)
  aw = e / jnp.sum(e, axis=0, keepdims=True)                            # (SM, NP)

  z_p = gcn_outs[0] * aw[0:1, :]
  for i in range(1, selected_m):
    z_p = z_p + gcn_outs[i] * aw[i:i + 1, :]                            # (S, NP)

  # Adaptive-graph branch: its propagation already fell out of ax_all.
  fx = ax_all[:, selected_m * n_pad:(selected_m + 1) * n_pad]           # (D, NP)
  full_out = (jnp.dot(full_wT_ref[...], fx, preferred_element_type=jnp.float32)
              + full_bT_ref[...])                                       # (S, NP)

  # Backcast / residual / final heads with row-split (transposed) weights.
  backcast = (jnp.dot(back_wpT_ref[...], z_p, preferred_element_type=jnp.float32)
              + jnp.dot(back_wfT_ref[...], full_out, preferred_element_type=jnp.float32)
              + back_bT_ref[...])                                       # (D, NP)
  residual = x - backcast                                               # f32 X here
  z_b = (jnp.dot(bias_wT_ref[...], residual, preferred_element_type=jnp.float32)
         + bias_bT_ref[...])                                            # (S, NP)
  final = (jnp.dot(fin_wpT_ref[...], z_p, preferred_element_type=jnp.float32)
           + jnp.dot(fin_wfT_ref[...], full_out, preferred_element_type=jnp.float32)
           + jnp.dot(fin_wbT_ref[...], z_b, preferred_element_type=jnp.float32)
           + fin_bT_ref[...])                                           # (OUT, NP)

  out_ref[0] = final
  aw_ref[0] = aw


# ----------------------------------------------------------------------------
# Wrapper
# ----------------------------------------------------------------------------
def mgac_forward(adj, X, params, m_args_list, single_output_dim, output_dim):
  B, N, D = X.shape
  S = single_output_dim
  OUT = output_dim
  SM = len(m_args_list)
  NP = ((N + 127) // 128) * 128   # node axis lives on lanes -> 128-align it

  idx = jnp.array(m_args_list, dtype=jnp.int32)

  # Batch-independent adaptive adjacency (module output #3 is the raw gram).
  emb = params["emb"]
  gram = emb @ emb.T
  full_adj = jax.nn.softmax(jax.nn.relu(gram), axis=1)

  # Stack SM selected adjacencies + the adaptive adjacency, transposed so the
  # output-node axis is on lanes; each view padded to NP (128-aligned blocks):
  #   adjT_stack[j, m*NP + i] = adj_m[i, j]
  all_adj = jnp.concatenate([adj[idx], full_adj[None]], axis=0)         # (SM+1, N, N)
  all_adjT = jnp.transpose(all_adj, (0, 2, 1))
  all_adjT = jnp.pad(all_adjT, ((0, 0), (0, NP - N), (0, NP - N)))
  adjT_stack = (jnp.transpose(all_adjT, (1, 0, 2))
                .reshape(NP, (SM + 1) * NP)
                .astype(jnp.bfloat16))                                  # halve dominant DMA

  # X with features on sublanes, nodes on lanes (zero padded; kept f32 for residual).
  xT = jnp.pad(jnp.transpose(X, (0, 2, 1)), ((0, 0), (0, 0), (0, NP - N)))

  # Transposed / row-split weights (so every head is a plain left-multiply).
  gcn_wT = jnp.transpose(params["gcn_w"][idx], (0, 2, 1))               # (SM, S, D)
  gcn_bT = params["gcn_b"][idx][:, :, None]                             # (SM, S, 1)
  attn_wT = jnp.transpose(params["attn_w"].reshape(SM, S, SM), (0, 2, 1))  # (SM, SM, S)
  attn_bT = params["attn_b"].reshape(SM, 1)
  full_wT = params["full_w"].T                                          # (S, D)
  full_bT = params["full_b"].reshape(S, 1)
  back_wpT = params["back_w"][:S].T                                     # (D, S)
  back_wfT = params["back_w"][S:].T                                     # (D, S)
  back_bT = params["back_b"].reshape(D, 1)
  bias_wT = params["bias_w"].T                                          # (S, D)
  bias_bT = params["bias_b"].reshape(S, 1)
  fin_wpT = params["fin_w"][:S].T                                       # (OUT, S)
  fin_wfT = params["fin_w"][S:2 * S].T
  fin_wbT = params["fin_w"][2 * S:].T
  fin_bT = params["fin_b"].reshape(OUT, 1)

  operands = (xT, adjT_stack, gcn_wT, gcn_bT, attn_wT, attn_bT,
              full_wT, full_bT, back_wpT, back_wfT, back_bT,
              bias_wT, bias_bT, fin_wpT, fin_wfT, fin_wbT, fin_bT)

  def const_spec(shape):
    nz = (0,) * len(shape)
    return pl.BlockSpec(shape, lambda b, nz=nz: nz)

  in_specs = [pl.BlockSpec((1, D, NP), lambda b: (b, 0, 0))]            # X per batch
  in_specs += [const_spec(op.shape) for op in operands[1:]]             # constants

  out_specs = (
      pl.BlockSpec((1, OUT, NP), lambda b: (b, 0, 0)),
      pl.BlockSpec((1, SM, NP), lambda b: (b, 0, 0)),
  )
  out_shape = (
      jax.ShapeDtypeStruct((B, OUT, NP), jnp.float32),
      jax.ShapeDtypeStruct((B, SM, NP), jnp.float32),
  )

  # Advisory cost estimate so XLA overlaps the gram/softmax + attn-mean with the call.
  flops = B * (2 * D * NP * (SM + 1) * NP                    # stacked adjacency matmul
               + SM * (2 * S * D * NP + 2 * SM * S * NP)     # per-view GCN + logits
               + 2 * S * D * NP                              # adaptive head
               + 2 * 2 * D * S * NP                          # backcast
               + 2 * S * D * NP                              # bias linear
               + 3 * 2 * OUT * S * NP)                       # final head
  bytes_accessed = (sum(int(op.size) * op.dtype.itemsize for op in operands)
                    + B * (OUT + SM) * NP * 4)
  cost = pl.CostEstimate(flops=int(flops),
                         transcendentals=int(B * SM * NP),
                         bytes_accessed=int(bytes_accessed))

  kernel = partial(_mgac_kernel, selected_m=SM, n_pad=NP)

  out_t, aw_t = pl.pallas_call(
      kernel,
      out_shape=out_shape,
      grid_spec=pltpu.PrefetchScalarGridSpec(
          num_scalar_prefetch=0,
          grid=(B,),
          in_specs=in_specs,
          out_specs=out_specs),
      compiler_params=pltpu.CompilerParams(
          dimension_semantics=("parallel",)),   # v7x: one batch per TensorCore
      cost_estimate=cost,
  )(*operands)

  # Transpose back and drop padded node lanes BEFORE anything reduces over N.
  out = jnp.transpose(out_t, (0, 2, 1))[:, :N, :]                       # (B, N, OUT)
  attn_mean = jnp.transpose(jnp.mean(aw_t, axis=0))[:N, :]              # (N, SM)
  # TODO(synk): fold the batch into a single grid step on v5e/v6e (single TC);
  # kept grid=(B,) "parallel" here so v7x's two TensorCores are both used.
  return out, attn_mean, gram


# ----------------------------------------------------------------------------
# Deterministic parameter construction (synthetic, no checkpoint loading)
# ----------------------------------------------------------------------------
def make_params(key, M, SM, D, S, out_dim, N):
  ks = jax.random.split(key, 12)

  def xavier(k, shape):
    fan_in, fan_out = shape[-2], shape[-1]
    scale = jnp.sqrt(2.0 / (fan_in + fan_out))
    return (scale * jax.random.normal(k, shape)).astype(jnp.float32)

  def small(k, shape):
    return (0.01 * jax.random.normal(k, shape)).astype(jnp.float32)

  return {
      "gcn_w": xavier(ks[0], (M, D, S)),
      "gcn_b": jnp.zeros((M, S), jnp.float32),          # bias init value 0.0
      "emb": xavier(ks[1], (N, S)),                     # full_node_embeddings
      "full_w": xavier(ks[2], (D, S)),
      "full_b": jnp.zeros((1, S), jnp.float32),
      "attn_w": xavier(ks[3], (SM * S, SM)),
      "attn_b": small(ks[4], (1, SM)),
      "back_w": xavier(ks[5], (2 * S, D)),
      "back_b": small(ks[6], (1, D)),
      "bias_w": xavier(ks[7], (D, S)),
      "bias_b": small(ks[8], (1, S)),
      "fin_w": xavier(ks[9], (3 * S, out_dim)),
      "fin_b": small(ks[10], (1, out_dim)),
  }


# ----------------------------------------------------------------------------
# Pure-JAX reference (mirrors the PyTorch forward) for validation
# ----------------------------------------------------------------------------
def mgac_ref(adj, X, params, m_args_list, S):
  gcn_outs = []
  for m in m_args_list:
    g = jax.nn.relu(adj[m] @ X @ params["gcn_w"][m] + params["gcn_b"][m])
    gcn_outs.append(g)
  pre = jnp.concatenate(gcn_outs, axis=-1)
  aw = jax.nn.softmax(pre @ params["attn_w"] + params["attn_b"][0], axis=-1)
  z_p = 0.0
  for i in range(len(m_args_list)):
    z_p = z_p + pre[..., i * S:(i + 1) * S] * aw[..., i:i + 1]
  emb = params["emb"]
  gram = emb @ emb.T
  full_adj = jax.nn.softmax(jax.nn.relu(gram), axis=1)
  full_out = full_adj @ X @ params["full_w"] + params["full_b"][0]
  z_g = jnp.concatenate([z_p, full_out], axis=-1)
  backcast = z_g @ params["back_w"] + params["back_b"][0]
  residual = X - backcast
  z_b = residual @ params["bias_w"] + params["bias_b"][0]
  final = jnp.concatenate([z_g, z_b], axis=-1) @ params["fin_w"] + params["fin_b"][0]
  return final, jnp.mean(aw, axis=0), gram


# ----------------------------------------------------------------------------
if __name__ == "__main__":
  # Module-implied sizes: num_nodes is hard-coded to 282 in MGAC.__init__.
  B = 2
  N = 282
  M = 3
  SM = 2
  m_args_list = [0, 2]
  D = 8          # input_dim
  S = 16         # single_output_dim
  OUT = 8        # output_dim

  key = jax.random.PRNGKey(0)
  k_adj, k_x, k_p = jax.random.split(key, 3)

  adj_raw = jax.random.uniform(k_adj, (M, N, N), jnp.float32)
  adj = adj_raw / jnp.sum(adj_raw, axis=-1, keepdims=True)   # row-normalized graphs
  X = jax.random.normal(k_x, (B, N, D), dtype=jnp.float32)

  params = make_params(k_p, M, SM, D, S, OUT, N)

  out, attn_mean, gram = mgac_forward(adj, X, params, m_args_list, S, OUT)
  jax.block_until_ready((out, attn_mean, gram))

  ref_out, ref_attn, ref_gram = mgac_ref(adj, X, params, m_args_list, S)
  # Tolerance covers the bf16 adjacency-matmul operands (f32 accumulation).
  assert jnp.allclose(out, ref_out, atol=5e-3, rtol=5e-3)
  assert jnp.allclose(attn_mean, ref_attn, atol=5e-3, rtol=5e-3)
  assert jnp.allclose(gram, ref_gram, atol=5e-3, rtol=5e-3)

  print("KERNEL_OK")
</pallas_src>

<mosaic_0001>
module attributes {stable_mosaic.version = 11 : i64} {
  func.func @_mgac_kernel(%arg0: i32, %arg1: memref<1x8x384xf32, #tpu.memory_space<vmem>>, %arg2: memref<384x1152xbf16, #tpu.memory_space<vmem>>, %arg3: memref<2x16x8xf32, #tpu.memory_space<vmem>>, %arg4: memref<2x16x1xf32, #tpu.memory_space<vmem>>, %arg5: memref<2x2x16xf32, #tpu.memory_space<vmem>>, %arg6: memref<2x1xf32, #tpu.memory_space<vmem>>, %arg7: memref<16x8xf32, #tpu.memory_space<vmem>>, %arg8: memref<16x1xf32, #tpu.memory_space<vmem>>, %arg9: memref<8x16xf32, #tpu.memory_space<vmem>>, %arg10: memref<8x16xf32, #tpu.memory_space<vmem>>, %arg11: memref<8x1xf32, #tpu.memory_space<vmem>>, %arg12: memref<16x8xf32, #tpu.memory_space<vmem>>, %arg13: memref<16x1xf32, #tpu.memory_space<vmem>>, %arg14: memref<8x16xf32, #tpu.memory_space<vmem>>, %arg15: memref<8x16xf32, #tpu.memory_space<vmem>>, %arg16: memref<8x16xf32, #tpu.memory_space<vmem>>, %arg17: memref<8x1xf32, #tpu.memory_space<vmem>>, %arg18: memref<1x8x384xf32, #tpu.memory_space<vmem>>, %arg19: memref<1x2x384xf32, #tpu.memory_space<vmem>>) attributes {dimension_semantics = [#tpu.dimension_semantics<parallel>], iteration_bounds = array<i64: 2>, scalar_prefetch = 0 : i64, scratch_operands = 0 : i64, tpu.core_type = #tpu.core_type<tc>, window_params = [{transform_indices = @transform_0, window_bounds = array<i64: 1, 8, 384>}, {pipeline_mode = #tpu.pipeline_mode<synchronous>, transform_indices = @transform_1, window_bounds = array<i64: 384, 1152>}, {pipeline_mode = #tpu.pipeline_mode<synchronous>, transform_indices = @transform_2, window_bounds = array<i64: 2, 16, 8>}, {pipeline_mode = #tpu.pipeline_mode<synchronous>, transform_indices = @transform_3, window_bounds = array<i64: 2, 16, 1>}, {pipeline_mode = #tpu.pipeline_mode<synchronous>, transform_indices = @transform_4, window_bounds = array<i64: 2, 2, 16>}, {pipeline_mode = #tpu.pipeline_mode<synchronous>, transform_indices = @transform_5, window_bounds = array<i64: 2, 1>}, {pipeline_mode = #tpu.pipeline_mode<synchronous>, transform_indices = @transform_6, window_bounds = array<i64: 16, 8>}, {pipeline_mode = #tpu.pipeline_mode<synchronous>, transform_indices = @transform_7, window_bounds = array<i64: 16, 1>}, {pipeline_mode = #tpu.pipeline_mode<synchronous>, transform_indices = @transform_8, window_bounds = array<i64: 8, 16>}, {pipeline_mode = #tpu.pipeline_mode<synchronous>, transform_indices = @transform_9, window_bounds = array<i64: 8, 16>}, {pipeline_mode = #tpu.pipeline_mode<synchronous>, transform_indices = @transform_10, window_bounds = array<i64: 8, 1>}, {pipeline_mode = #tpu.pipeline_mode<synchronous>, transform_indices = @transform_11, window_bounds = array<i64: 16, 8>}, {pipeline_mode = #tpu.pipeline_mode<synchronous>, transform_indices = @transform_12, window_bounds = array<i64: 16, 1>}, {pipeline_mode = #tpu.pipeline_mode<synchronous>, transform_indices = @transform_13, window_bounds = array<i64: 8, 16>}, {pipeline_mode = #tpu.pipeline_mode<synchronous>, transform_indices = @transform_14, window_bounds = array<i64: 8, 16>}, {pipeline_mode = #tpu.pipeline_mode<synchronous>, transform_indices = @transform_15, window_bounds = array<i64: 8, 16>}, {pipeline_mode = #tpu.pipeline_mode<synchronous>, transform_indices = @transform_16, window_bounds = array<i64: 8, 1>}, {transform_indices = @transform_17, window_bounds = array<i64: 1, 8, 384>}, {transform_indices = @transform_18, window_bounds = array<i64: 1, 2, 384>}]} {
    %c0 = arith.constant 0 : index
    %c0_0 = arith.constant 0 : index
    %c0_1 = arith.constant 0 : index
    %0 = vector.load %arg1[%c0, %c0_0, %c0_1] : memref<1x8x384xf32, #tpu.memory_space<vmem>>, vector<1x8x384xf32>
    %1 = vector.shape_cast %0 : vector<1x8x384xf32> to vector<8x384xf32>
    %2 = arith.truncf %1 : vector<8x384xf32> to vector<8x384xbf16>
    %c0_2 = arith.constant 0 : index
    %c0_3 = arith.constant 0 : index
    %3 = vector.load %arg2[%c0_2, %c0_3] : memref<384x1152xbf16, #tpu.memory_space<vmem>>, vector<384x1152xbf16>
    %cst = arith.constant dense<0.000000e+00> : vector<8x1152xf32>
    %4 = tpu.matmul %2, %3, %cst {dimension_numbers = #tpu.dot_dimension_numbers<[1], [0], [0], [1], [0, 0, 1, 1], [], []>} : vector<8x384xbf16>, vector<384x1152xbf16>, vector<8x1152xf32> -> vector<8x1152xf32>
    %c0_4 = arith.constant 0 : index
    %c0_5 = arith.constant 0 : index
    %5 = vector.load %arg6[%c0_4, %c0_5] : memref<2x1xf32, #tpu.memory_space<vmem>>, vector<2x1xf32>
    %6 = vector.extract_strided_slice %4 {offsets = [0, 0], sizes = [8, 384], strides = [1, 1]} : vector<8x1152xf32> to vector<8x384xf32>
    %c0_6 = arith.constant 0 : index
    %c0_7 = arith.constant 0 : index
    %c0_8 = arith.constant 0 : index
    %7 = vector.load %arg3[%c0_6, %c0_7, %c0_8] : memref<2x16x8xf32, #tpu.memory_space<vmem>>, vector<1x16x8xf32>
    %8 = vector.shape_cast %7 : vector<1x16x8xf32> to vector<16x8xf32>
    %cst_9 = arith.constant dense<0.000000e+00> : vector<16x384xf32>
    %9 = tpu.matmul %8, %6, %cst_9 {dimension_numbers = #tpu.dot_dimension_numbers<[1], [0], [0], [1], [0, 0, 1, 1], [], []>} : vector<16x8xf32>, vector<8x384xf32>, vector<16x384xf32> -> vector<16x384xf32>
    %c0_10 = arith.constant 0 : index
    %c0_11 = arith.constant 0 : index
    %c0_12 = arith.constant 0 : index
    %10 = vector.load %arg4[%c0_10, %c0_11, %c0_12] : memref<2x16x1xf32, #tpu.memory_space<vmem>>, vector<1x16x1xf32>
    %11 = vector.shape_cast %10 : vector<1x16x1xf32> to vector<16x1xf32>
    %12 = vector.broadcast %11 : vector<16x1xf32> to vector<16x384xf32>
    %13 = arith.addf %9, %12 : vector<16x384xf32>
    %cst_13 = arith.constant 0.000000e+00 : f32
    %14 = vector.broadcast %cst_13 : f32 to vector<16x384xf32>
    %15 = arith.maximumf %13, %14 : vector<16x384xf32>
    %c0_14 = arith.constant 0 : index
    %c0_15 = arith.constant 0 : index
    %c0_16 = arith.constant 0 : index
    %16 = vector.load %arg5[%c0_14, %c0_15, %c0_16] : memref<2x2x16xf32, #tpu.memory_space<vmem>>, vector<1x2x16xf32>
    %17 = vector.shape_cast %16 : vector<1x2x16xf32> to vector<2x16xf32>
    %cst_17 = arith.constant dense<0.000000e+00> : vector<2x384xf32>
    %18 = tpu.matmul %17, %15, %cst_17 {dimension_numbers = #tpu.dot_dimension_numbers<[1], [0], [0], [1], [0, 0, 1, 1], [], []>} : vector<2x16xf32>, vector<16x384xf32>, vector<2x384xf32> -> vector<2x384xf32>
    %19 = vector.broadcast %5 : vector<2x1xf32> to vector<2x384xf32>
    %20 = arith.addf %19, %18 : vector<2x384xf32>
    %21 = vector.extract_strided_slice %4 {offsets = [0, 384], sizes = [8, 384], strides = [1, 1]} : vector<8x1152xf32> to vector<8x384xf32>
    %c1 = arith.constant 1 : index
    %c0_18 = arith.constant 0 : index
    %c0_19 = arith.constant 0 : index
    %22 = vector.load %arg3[%c1, %c0_18, %c0_19] : memref<2x16x8xf32, #tpu.memory_space<vmem>>, vector<1x16x8xf32>
    %23 = vector.shape_cast %22 : vector<1x16x8xf32> to vector<16x8xf32>
    %cst_20 = arith.constant dense<0.000000e+00> : vector<16x384xf32>
    %24 = tpu.matmul %23, %21, %cst_20 {dimension_numbers = #tpu.dot_dimension_numbers<[1], [0], [0], [1], [0, 0, 1, 1], [], []>} : vector<16x8xf32>, vector<8x384xf32>, vector<16x384xf32> -> vector<16x384xf32>
    %c1_21 = arith.constant 1 : index
    %c0_22 = arith.constant 0 : index
    %c0_23 = arith.constant 0 : index
    %25 = vector.load %arg4[%c1_21, %c0_22, %c0_23] : memref<2x16x1xf32, #tpu.memory_space<vmem>>, vector<1x16x1xf32>
    %26 = vector.shape_cast %25 : vector<1x16x1xf32> to vector<16x1xf32>
    %27 = vector.broadcast %26 : vector<16x1xf32> to vector<16x384xf32>
    %28 = arith.addf %24, %27 : vector<16x384xf32>
    %cst_24 = arith.constant 0.000000e+00 : f32
    %29 = vector.broadcast %cst_24 : f32 to vector<16x384xf32>
    %30 = arith.maximumf %28, %29 : vector<16x384xf32>
    %c1_25 = arith.constant 1 : index
    %c0_26 = arith.constant 0 : index
    %c0_27 = arith.constant 0 : index
    %31 = vector.load %arg5[%c1_25, %c0_26, %c0_27] : memref<2x2x16xf32, #tpu.memory_space<vmem>>, vector<1x2x16xf32>
    %32 = vector.shape_cast %31 : vector<1x2x16xf32> to vector<2x16xf32>
    %cst_28 = arith.constant dense<0.000000e+00> : vector<2x384xf32>
    %33 = tpu.matmul %32, %30, %cst_28 {dimension_numbers = #tpu.dot_dimension_numbers<[1], [0], [0], [1], [0, 0, 1, 1], [], []>} : vector<2x16xf32>, vector<16x384xf32>, vector<2x384xf32> -> vector<2x384xf32>
    %34 = arith.addf %20, %33 : vector<2x384xf32>
    %cst_29 = arith.constant dense<0xFF800000> : vector<384xf32>
    %35 = vector.multi_reduction <maximumf>, %34, %cst_29 [0] : vector<2x384xf32> to vector<384xf32>
    %36 = vector.shape_cast %35 : vector<384xf32> to vector<1x384xf32>
    %37 = vector.broadcast %36 : vector<1x384xf32> to vector<2x384xf32>
    %38 = arith.subf %34, %37 : vector<2x384xf32>
    %39 = math.exp %38 : vector<2x384xf32>
    %cst_30 = arith.constant dense<0.000000e+00> : vector<384xf32>
    %40 = vector.multi_reduction <add>, %39, %cst_30 [0] : vector<2x384xf32> to vector<384xf32>
    %41 = vector.shape_cast %40 : vector<384xf32> to vector<1x384xf32>
    %42 = vector.broadcast %41 : vector<1x384xf32> to vector<2x384xf32>
    %43 = arith.divf %39, %42 : vector<2x384xf32>
    %44 = vector.extract_strided_slice %43 {offsets = [0, 0], sizes = [1, 384], strides = [1, 1]} : vector<2x384xf32> to vector<1x384xf32>
    %45 = vector.broadcast %44 : vector<1x384xf32> to vector<16x384xf32>
    %46 = arith.mulf %15, %45 : vector<16x384xf32>
    %47 = vector.extract_strided_slice %43 {offsets = [1, 0], sizes = [1, 384], strides = [1, 1]} : vector<2x384xf32> to vector<1x384xf32>
    %48 = vector.broadcast %47 : vector<1x384xf32> to vector<16x384xf32>
    %49 = arith.mulf %30, %48 : vector<16x384xf32>
    %50 = arith.addf %46, %49 : vector<16x384xf32>
    %51 = vector.extract_strided_slice %4 {offsets = [0, 768], sizes = [8, 384], strides = [1, 1]} : vector<8x1152xf32> to vector<8x384xf32>
    %c0_31 = arith.constant 0 : index
    %c0_32 = arith.constant 0 : index
    %52 = vector.load %arg7[%c0_31, %c0_32] : memref<16x8xf32, #tpu.memory_space<vmem>>, vector<16x8xf32>
    %cst_33 = arith.constant dense<0.000000e+00> : vector<16x384xf32>
    %53 = tpu.matmul %52, %51, %cst_33 {dimension_numbers = #tpu.dot_dimension_numbers<[1], [0], [0], [1], [0, 0, 1, 1], [], []>} : vector<16x8xf32>, vector<8x384xf32>, vector<16x384xf32> -> vector<16x384xf32>
    %c0_34 = arith.constant 0 : index
    %c0_35 = arith.constant 0 : index
    %54 = vector.load %arg8[%c0_34, %c0_35] : memref<16x1xf32, #tpu.memory_space<vmem>>, vector<16x1xf32>
    %55 = vector.broadcast %54 : vector<16x1xf32> to vector<16x384xf32>
    %56 = arith.addf %53, %55 : vector<16x384xf32>
    %c0_36 = arith.constant 0 : index
    %c0_37 = arith.constant 0 : index
    %57 = vector.load %arg9[%c0_36, %c0_37] : memref<8x16xf32, #tpu.memory_space<vmem>>, vector<8x16xf32>
    %cst_38 = arith.constant dense<0.000000e+00> : vector<8x384xf32>
    %58 = tpu.matmul %57, %50, %cst_38 {dimension_numbers = #tpu.dot_dimension_numbers<[1], [0], [0], [1], [0, 0, 1, 1], [], []>} : vector<8x16xf32>, vector<16x384xf32>, vector<8x384xf32> -> vector<8x384xf32>
    %c0_39 = arith.constant 0 : index
    %c0_40 = arith.constant 0 : index
    %59 = vector.load %arg10[%c0_39, %c0_40] : memref<8x16xf32, #tpu.memory_space<vmem>>, vector<8x16xf32>
    %cst_41 = arith.constant dense<0.000000e+00> : vector<8x384xf32>
    %60 = tpu.matmul %59, %56, %cst_41 {dimension_numbers = #tpu.dot_dimension_numbers<[1], [0], [0], [1], [0, 0, 1, 1], [], []>} : vector<8x16xf32>, vector<16x384xf32>, vector<8x384xf32> -> vector<8x384xf32>
    %61 = arith.addf %58, %60 : vector<8x384xf32>
    %c0_42 = arith.constant 0 : index
    %c0_43 = arith.constant 0 : index
    %62 = vector.load %arg11[%c0_42, %c0_43] : memref<8x1xf32, #tpu.memory_space<vmem>>, vector<8x1xf32>
    %63 = vector.broadcast %62 : vector<8x1xf32> to vector<8x384xf32>
    %64 = arith.addf %61, %63 : vector<8x384xf32>
    %65 = arith.subf %1, %64 : vector<8x384xf32>
    %c0_44 = arith.constant 0 : index
    %c0_45 = arith.constant 0 : index
    %66 = vector.load %arg12[%c0_44, %c0_45] : memref<16x8xf32, #tpu.memory_space<vmem>>, vector<16x8xf32>
    %cst_46 = arith.constant dense<0.000000e+00> : vector<16x384xf32>
    %67 = tpu.matmul %66, %65, %cst_46 {dimension_numbers = #tpu.dot_dimension_numbers<[1], [0], [0], [1], [0, 0, 1, 1], [], []>} : vector<16x8xf32>, vector<8x384xf32>, vector<16x384xf32> -> vector<16x384xf32>
    %c0_47 = arith.constant 0 : index
    %c0_48 = arith.constant 0 : index
    %68 = vector.load %arg13[%c0_47, %c0_48] : memref<16x1xf32, #tpu.memory_space<vmem>>, vector<16x1xf32>
    %69 = vector.broadcast %68 : vector<16x1xf32> to vector<16x384xf32>
    %70 = arith.addf %67, %69 : vector<16x384xf32>
    %c0_49 = arith.constant 0 : index
    %c0_50 = arith.constant 0 : index
    %71 = vector.load %arg14[%c0_49, %c0_50] : memref<8x16xf32, #tpu.memory_space<vmem>>, vector<8x16xf32>
    %cst_51 = arith.constant dense<0.000000e+00> : vector<8x384xf32>
    %72 = tpu.matmul %71, %50, %cst_51 {dimension_numbers = #tpu.dot_dimension_numbers<[1], [0], [0], [1], [0, 0, 1, 1], [], []>} : vector<8x16xf32>, vector<16x384xf32>, vector<8x384xf32> -> vector<8x384xf32>
    %c0_52 = arith.constant 0 : index
    %c0_53 = arith.constant 0 : index
    %73 = vector.load %arg15[%c0_52, %c0_53] : memref<8x16xf32, #tpu.memory_space<vmem>>, vector<8x16xf32>
    %cst_54 = arith.constant dense<0.000000e+00> : vector<8x384xf32>
    %74 = tpu.matmul %73, %56, %cst_54 {dimension_numbers = #tpu.dot_dimension_numbers<[1], [0], [0], [1], [0, 0, 1, 1], [], []>} : vector<8x16xf32>, vector<16x384xf32>, vector<8x384xf32> -> vector<8x384xf32>
    %75 = arith.addf %72, %74 : vector<8x384xf32>
    %c0_55 = arith.constant 0 : index
    %c0_56 = arith.constant 0 : index
    %76 = vector.load %arg16[%c0_55, %c0_56] : memref<8x16xf32, #tpu.memory_space<vmem>>, vector<8x16xf32>
    %cst_57 = arith.constant dense<0.000000e+00> : vector<8x384xf32>
    %77 = tpu.matmul %76, %70, %cst_57 {dimension_numbers = #tpu.dot_dimension_numbers<[1], [0], [0], [1], [0, 0, 1, 1], [], []>} : vector<8x16xf32>, vector<16x384xf32>, vector<8x384xf32> -> vector<8x384xf32>
    %78 = arith.addf %75, %77 : vector<8x384xf32>
    %c0_58 = arith.constant 0 : index
    %c0_59 = arith.constant 0 : index
    %79 = vector.load %arg17[%c0_58, %c0_59] : memref<8x1xf32, #tpu.memory_space<vmem>>, vector<8x1xf32>
    %80 = vector.broadcast %79 : vector<8x1xf32> to vector<8x384xf32>
    %81 = arith.addf %78, %80 : vector<8x384xf32>
    %c0_60 = arith.constant 0 : index
    %c0_61 = arith.constant 0 : index
    %c0_62 = arith.constant 0 : index
    %82 = vector.load %arg18[%c0_60, %c0_61, %c0_62] : memref<1x8x384xf32, #tpu.memory_space<vmem>>, vector<1x8x384xf32>
    %83 = vector.shape_cast %82 : vector<1x8x384xf32> to vector<8x384xf32>
    %84 = vector.shape_cast %81 : vector<8x384xf32> to vector<1x8x384xf32>
    tpu.vector_store %arg18[%c0_60, %c0_61, %c0_62], %84 {strides = array<i32>} : memref<1x8x384xf32, #tpu.memory_space<vmem>>, vector<1x8x384xf32>,
    %c0_63 = arith.constant 0 : index
    %c0_64 = arith.constant 0 : index
    %c0_65 = arith.constant 0 : index
    %85 = vector.load %arg19[%c0_63, %c0_64, %c0_65] : memref<1x2x384xf32, #tpu.memory_space<vmem>>, vector<1x2x384xf32>
    %86 = vector.shape_cast %85 : vector<1x2x384xf32> to vector<2x384xf32>
    %87 = vector.shape_cast %43 : vector<2x384xf32> to vector<1x2x384xf32>
    tpu.vector_store %arg19[%c0_63, %c0_64, %c0_65], %87 {strides = array<i32>} : memref<1x2x384xf32, #tpu.memory_space<vmem>>, vector<1x2x384xf32>,
    return
  }
  func.func @transform_0(%arg0: i32) -> (i32, i32, i32) {
    %c0_i32 = arith.constant 0 : i32
    %c0_i32_0 = arith.constant 0 : i32
    %c0_i32_1 = arith.constant 0 : i32
    return %arg0, %c0_i32, %c0_i32_0 : i32, i32, i32
  }
  func.func @transform_1(%arg0: i32) -> (i32, i32) {
    %c0_i32 = arith.constant 0 : i32
    %c0_i32_0 = arith.constant 0 : i32
    %c0_i32_1 = arith.constant 0 : i32
    return %c0_i32, %c0_i32_0 : i32, i32
  }
  func.func @transform_2(%arg0: i32) -> (i32, i32, i32) {
    %c0_i32 = arith.constant 0 : i32
    %c0_i32_0 = arith.constant 0 : i32
    %c0_i32_1 = arith.constant 0 : i32
    %c0_i32_2 = arith.constant 0 : i32
    return %c0_i32, %c0_i32_0, %c0_i32_1 : i32, i32, i32
  }
  func.func @transform_3(%arg0: i32) -> (i32, i32, i32) {
    %c0_i32 = arith.constant 0 : i32
    %c0_i32_0 = arith.constant 0 : i32
    %c0_i32_1 = arith.constant 0 : i32
    %c0_i32_2 = arith.constant 0 : i32
    return %c0_i32, %c0_i32_0, %c0_i32_1 : i32, i32, i32
  }
  func.func @transform_4(%arg0: i32) -> (i32, i32, i32) {
    %c0_i32 = arith.constant 0 : i32
    %c0_i32_0 = arith.constant 0 : i32
    %c0_i32_1 = arith.constant 0 : i32
    %c0_i32_2 = arith.constant 0 : i32
    return %c0_i32, %c0_i32_0, %c0_i32_1 : i32, i32, i32
  }
  func.func @transform_5(%arg0: i32) -> (i32, i32) {
    %c0_i32 = arith.constant 0 : i32
    %c0_i32_0 = arith.constant 0 : i32
    %c0_i32_1 = arith.constant 0 : i32
    return %c0_i32, %c0_i32_0 : i32, i32
  }
  func.func @transform_6(%arg0: i32) -> (i32, i32) {
    %c0_i32 = arith.constant 0 : i32
    %c0_i32_0 = arith.constant 0 : i32
    %c0_i32_1 = arith.constant 0 : i32
    return %c0_i32, %c0_i32_0 : i32, i32
  }
  func.func @transform_7(%arg0: i32) -> (i32, i32) {
    %c0_i32 = arith.constant 0 : i32
    %c0_i32_0 = arith.constant 0 : i32
    %c0_i32_1 = arith.constant 0 : i32
    return %c0_i32, %c0_i32_0 : i32, i32
  }
  func.func @transform_8(%arg0: i32) -> (i32, i32) {
    %c0_i32 = arith.constant 0 : i32
    %c0_i32_0 = arith.constant 0 : i32
    %c0_i32_1 = arith.constant 0 : i32
    return %c0_i32, %c0_i32_0 : i32, i32
  }
  func.func @transform_9(%arg0: i32) -> (i32, i32) {
    %c0_i32 = arith.constant 0 : i32
    %c0_i32_0 = arith.constant 0 : i32
    %c0_i32_1 = arith.constant 0 : i32
    return %c0_i32, %c0_i32_0 : i32, i32
  }
  func.func @transform_10(%arg0: i32) -> (i32, i32) {
    %c0_i32 = arith.constant 0 : i32
    %c0_i32_0 = arith.constant 0 : i32
    %c0_i32_1 = arith.constant 0 : i32
    return %c0_i32, %c0_i32_0 : i32, i32
  }
  func.func @transform_11(%arg0: i32) -> (i32, i32) {
    %c0_i32 = arith.constant 0 : i32
    %c0_i32_0 = arith.constant 0 : i32
    %c0_i32_1 = arith.constant 0 : i32
    return %c0_i32, %c0_i32_0 : i32, i32
  }
  func.func @transform_12(%arg0: i32) -> (i32, i32) {
    %c0_i32 = arith.constant 0 : i32
    %c0_i32_0 = arith.constant 0 : i32
    %c0_i32_1 = arith.constant 0 : i32
    return %c0_i32, %c0_i32_0 : i32, i32
  }
  func.func @transform_13(%arg0: i32) -> (i32, i32) {
    %c0_i32 = arith.constant 0 : i32
    %c0_i32_0 = arith.constant 0 : i32
    %c0_i32_1 = arith.constant 0 : i32
    return %c0_i32, %c0_i32_0 : i32, i32
  }
  func.func @transform_14(%arg0: i32) -> (i32, i32) {
    %c0_i32 = arith.constant 0 : i32
    %c0_i32_0 = arith.constant 0 : i32
    %c0_i32_1 = arith.constant 0 : i32
    return %c0_i32, %c0_i32_0 : i32, i32
  }
  func.func @transform_15(%arg0: i32) -> (i32, i32) {
    %c0_i32 = arith.constant 0 : i32
    %c0_i32_0 = arith.constant 0 : i32
    %c0_i32_1 = arith.constant 0 : i32
    return %c0_i32, %c0_i32_0 : i32, i32
  }
  func.func @transform_16(%arg0: i32) -> (i32, i32) {
    %c0_i32 = arith.constant 0 : i32
    %c0_i32_0 = arith.constant 0 : i32
    %c0_i32_1 = arith.constant 0 : i32
    return %c0_i32, %c0_i32_0 : i32, i32
  }
  func.func @transform_17(%arg0: i32) -> (i32, i32, i32) {
    %c0_i32 = arith.constant 0 : i32
    %c0_i32_0 = arith.constant 0 : i32
    %c0_i32_1 = arith.constant 0 : i32
    return %arg0, %c0_i32, %c0_i32_0 : i32, i32, i32
  }
  func.func @transform_18(%arg0: i32) -> (i32, i32, i32) {
    %c0_i32 = arith.constant 0 : i32
    %c0_i32_0 = arith.constant 0 : i32
    %c0_i32_1 = arith.constant 0 : i32
    return %arg0, %c0_i32, %c0_i32_0 : i32, i32, i32
  }
}

</mosaic_0001>

<llo_original>
// kernel: tpu_custom_call.1
$region0: #{tpu_custom_call.1}
  #allocation0 [shape = 'u32[]', space=smem, size = 0x4, offset = 0x4, fixed_abs, tag = 'smem constant byte address 0x4 - core index']
  #allocation1 [shape = 'u32[144,128]{1,0:T(1,128)}', space=vmem, size = 0x12000, scoped, tag = 'internal scratch']
  %s0 = inlined_call_operand.vmem [shape: f32[2,8,384], index: 0, kind: input, shape index: {}]
  %s1 = inlined_call_operand.hbm [shape: bf16[384,1152], index: 1, kind: input, shape index: {}]
  %s2 = inlined_call_operand.vmem [shape: f32[2,16,8], index: 2, kind: input, shape index: {}]
  %s3 = inlined_call_operand.vmem [shape: f32[2,16,1], index: 3, kind: input, shape index: {}]
  %s4 = inlined_call_operand.vmem [shape: f32[2,2,16], index: 4, kind: input, shape index: {}]
  %s5 = inlined_call_operand.vmem [shape: f32[2,1], index: 5, kind: input, shape index: {}]
  %s6 = inlined_call_operand.vmem [shape: f32[16,8], index: 6, kind: input, shape index: {}]
  %s7 = inlined_call_operand.vmem [shape: f32[16,1], index: 7, kind: input, shape index: {}]
  %s8 = inlined_call_operand.vmem [shape: f32[8,16], index: 8, kind: input, shape index: {}]
  %s9 = inlined_call_operand.vmem [shape: f32[8,16], index: 9, kind: input, shape index: {}]
  %s10 = inlined_call_operand.vmem [shape: f32[8,1], index: 10, kind: input, shape index: {}]
  %s11 = inlined_call_operand.vmem [shape: f32[16,8], index: 11, kind: input, shape index: {}]
  %s12 = inlined_call_operand.vmem [shape: f32[16,1], index: 12, kind: input, shape index: {}]
  %s13 = inlined_call_operand.vmem [shape: f32[8,16], index: 13, kind: input, shape index: {}]
  %s14 = inlined_call_operand.vmem [shape: f32[8,16], index: 14, kind: input, shape index: {}]
  %s15 = inlined_call_operand.vmem [shape: f32[8,16], index: 15, kind: input, shape index: {}]
  %s16 = inlined_call_operand.vmem [shape: f32[8,1], index: 16, kind: input, shape index: {}]
  %s17 = inlined_call_operand.hbm [shape: f32[2,8,384], index: 17, kind: output, shape index: {0}]
  %s18 = inlined_call_operand.hbm [shape: f32[2,2,384], index: 18, kind: output, shape index: {1}]
  %19 = xla_tuple %s17, %s18
  %s20 = sld [smem:[#allocation0]]
  $region113: #{tpu_custom_call.1} parent=0
    _
  %s22 = ssub.s32 1, %s20
  %s23 = scalar_select 0, %s22, %s20
  $region1: #{tpu_custom_call.1} parent=0
    #allocation2 [shape = 'u8[884736]{0}', space=vmem, size = 0xd8000, scoped, tag = 'input window, operand 1, single buffered']
    #allocation3 [shape = 's32[2]{0}', space=sflag, size = 0x8, scoped, tag = 'scoped memory for tpu_custom_call.1']
    #allocation4 [shape = 's32[2]{0}', space=sflag, size = 0x8, scoped, tag = 'scoped memory for tpu_custom_call.1']
    #allocation5 [shape = 'u8[24576]{0}', space=vmem, size = 0x6000, scoped, tag = 'output window, operand 0']
    #allocation6 [shape = 'u8[6144]{0}', space=vmem, size = 0x1800, scoped, tag = 'output window, operand 1']
    #allocation7 [shape = 's32[2]{0}', space=sflag, size = 0x8, scoped, tag = 'scoped memory for tpu_custom_call.1']
    %24 = vsyncpa [#allocation3], 0
    %25 = vsyncpa [#allocation4], 0
    %s26 = scalar_lea.sflag [#allocation4], 1
    %27 = vsyncpa %s26, 0
    %28 = vsyncpa [#allocation7], 0
    %s29 = scalar_lea.sflag [#allocation7], 1
    %30 = vsyncpa %s29, 0
    loop: start=0, step=1, limit=4
    $region2: #{tpu_custom_call.1} parent=1 // loop_pre_header
      _
    $region3: #{tpu_custom_call.1} parent=1 // loop_header
      %s32 = sphi 0, %s36
      %p33 = scmp.ge.s32.totalorder %s32, 4
      %s42 = sphi 0, %s44
      %s45 = sphi 0, %s42
      %s46 = sphi 0, %s45
      %s62 = sphi 0, %s46
      %s66 = sphi 0, %s66
      %s68 = sphi 0, %s66
      %s69 = sphi 0, %s68
      %s83 = sphi 0, %s69
      %s87 = sphi 0, %s87
      %s89 = sphi 0, %s87
      %s90 = sphi 0, %s89
      %s104 = sphi 0, %s90
      %s108 = sphi 0, %s108
      %s110 = sphi 0, %s108
      %s111 = sphi 0, %s110
      %s125 = sphi 0, %s111
      %s129 = sphi 0, %s129
      %s131 = sphi 0, %s129
      %s132 = sphi 0, %s131
      %s146 = sphi 0, %s132
      %s150 = sphi 0, %s150
      %s152 = sphi 0, %s150
      %s153 = sphi 0, %s152
      %s167 = sphi 0, %s153
      %s171 = sphi 0, %s171
      %s173 = sphi 0, %s171
      %s174 = sphi 0, %s173
      %s188 = sphi 0, %s174
      %s192 = sphi 0, %s192
      %s194 = sphi 0, %s192
      %s195 = sphi 0, %s194
      %s209 = sphi 0, %s195
      %s213 = sphi 0, %s213
      %s215 = sphi 0, %s213
      %s216 = sphi 0, %s215
      %s230 = sphi 0, %s216
      %s234 = sphi 0, %s234
      %s236 = sphi 0, %s234
      %s237 = sphi 0, %s236
      %s251 = sphi 0, %s237
      %s255 = sphi 0, %s255
      %s257 = sphi 0, %s255
      %s258 = sphi 0, %s257
      %s272 = sphi 0, %s258
      %s276 = sphi 0, %s276
      %s278 = sphi 0, %s276
      %s279 = sphi 0, %s278
      %s293 = sphi 0, %s279
      %s297 = sphi 0, %s297
      %s299 = sphi 0, %s297
      %s300 = sphi 0, %s299
      %s314 = sphi 0, %s300
      %s318 = sphi 0, %s318
      %s320 = sphi 0, %s318
      %s321 = sphi 0, %s320
      %s335 = sphi 0, %s321
      %s339 = sphi 0, %s339
      %s341 = sphi 0, %s339
      %s342 = sphi 0, %s341
      %s356 = sphi 0, %s342
      %s360 = sphi 0, %s360
      %s362 = sphi 0, %s360
      %s363 = sphi 0, %s362
      %s377 = sphi 0, %s363
      %s381 = sphi 0, %s381
      %s383 = sphi 0, %s381
      %s384 = sphi 0, %s383
      %s398 = sphi 0, %s384
      %s404 = sphi 0, %s406
      %s407 = sphi 0, %s404
      %s408 = sphi 0, %s407
      %s424 = sphi 0, %s408
      %s430 = sphi 0, %s432
      %s433 = sphi 0, %s430
      %s434 = sphi 0, %s433
      %s450 = sphi 0, %s434
    $region4: #{tpu_custom_call.1} parent=1 // loop_header_branch
      %35 = sbr.rel (%p33) target = $region8
    $region5: #{tpu_custom_call.1} parent=1 // loop_body
      %s37 = ssub.s32 %s32, 1
      %s38 = ssub.s32 %s32, 2
      %s39 = sadd.s32 %s32, 1
      %s40 = ssub.s32 %s32, %s39
      %p41 = scmp.eq.s32.totalorder %s40, 0
      %s43 = sadd.s32 %s42, 1
      %s44 = scalar_select %p41, %s42, %s43
      %p47 = pneg %p41
      %p48 = scmp.eq.s32.totalorder %s32, 1
      %p49 = por %p47, %p48
      %p50 = scmp.ne.s32.totalorder %s42, %s45
      %p51 = scmp.eq.s32.totalorder %s32, 0
      %p52 = por %p50, %p51
      %p53 = scmp.ne.s32.totalorder %s42, %s45
      %p54 = scmp.eq.s32.totalorder %s37, 1
      %p55 = por %p53, %p54
      %p56 = scmp.ne.s32.totalorder %s45, %s46
      %p57 = scmp.eq.s32.totalorder %s37, 0
      %p58 = por %p56, %p57
      %p59 = scmp.ne.s32.totalorder %s45, %s46
      %p60 = scmp.eq.s32.totalorder %s38, 1
      %p61 = por %p59, %p60
      %p63 = scmp.ne.s32.totalorder %s46, %s62
      %p64 = scmp.eq.s32.totalorder %s38, 0
      %p65 = por %p63, %p64
      %s67 = sadd.s32 %s66, 1
      %p70 = scmp.eq.s32.totalorder %s32, 1
      %p71 = scmp.ne.s32.totalorder %s66, %s68
      %p72 = scmp.eq.s32.totalorder %s32, 0
      %p73 = por %p71, %p72
      %p74 = scmp.ne.s32.totalorder %s66, %s68
      %p75 = scmp.eq.s32.totalorder %s37, 1
      %p76 = por %p74, %p75
      %p77 = scmp.ne.s32.totalorder %s68, %s69
      %p78 = scmp.eq.s32.totalorder %s37, 0
      %p79 = por %p77, %p78
      %p80 = scmp.ne.s32.totalorder %s68, %s69
      %p81 = scmp.eq.s32.totalorder %s38, 1
      %p82 = por %p80, %p81
      %p84 = scmp.ne.s32.totalorder %s69, %s83
      %p85 = scmp.eq.s32.totalorder %s38, 0
      %p86 = por %p84, %p85
      %s88 = sadd.s32 %s87, 1
      %p91 = scmp.eq.s32.totalorder %s32, 1
      %p92 = scmp.ne.s32.totalorder %s87, %s89
      %p93 = scmp.eq.s32.totalorder %s32, 0
      %p94 = por %p92, %p93
      %p95 = scmp.ne.s32.totalorder %s87, %s89
      %p96 = scmp.eq.s32.totalorder %s37, 1
      %p97 = por %p95, %p96
      %p98 = scmp.ne.s32.totalorder %s89, %s90
      %p99 = scmp.eq.s32.totalorder %s37, 0
      %p100 = por %p98, %p99
      %p101 = scmp.ne.s32.totalorder %s89, %s90
      %p102 = scmp.eq.s32.totalorder %s38, 1
      %p103 = por %p101, %p102
      %p105 = scmp.ne.s32.totalorder %s90, %s104
      %p106 = scmp.eq.s32.totalorder %s38, 0
      %p107 = por %p105, %p106
      %s109 = sadd.s32 %s108, 1
      %p112 = scmp.eq.s32.totalorder %s32, 1
      %p113 = scmp.ne.s32.totalorder %s108, %s110
      %p114 = scmp.eq.s32.totalorder %s32, 0
      %p115 = por %p113, %p114
      %p116 = scmp.ne.s32.totalorder %s108, %s110
      %p117 = scmp.eq.s32.totalorder %s37, 1
      %p118 = por %p116, %p117
      %p119 = scmp.ne.s32.totalorder %s110, %s111
      %p120 = scmp.eq.s32.totalorder %s37, 0
      %p121 = por %p119, %p120
      %p122 = scmp.ne.s32.totalorder %s110, %s111
      %p123 = scmp.eq.s32.totalorder %s38, 1
      %p124 = por %p122, %p123
      %p126 = scmp.ne.s32.totalorder %s111, %s125
      %p127 = scmp.eq.s32.totalorder %s38, 0
      %p128 = por %p126, %p127
      %s130 = sadd.s32 %s129, 1
      %p133 = scmp.eq.s32.totalorder %s32, 1
      %p134 = scmp.ne.s32.totalorder %s129, %s131
      %p135 = scmp.eq.s32.totalorder %s32, 0
      %p136 = por %p134, %p135
      %p137 = scmp.ne.s32.totalorder %s129, %s131
      %p138 = scmp.eq.s32.totalorder %s37, 1
      %p139 = por %p137, %p138
      %p140 = scmp.ne.s32.totalorder %s131, %s132
      %p141 = scmp.eq.s32.totalorder %s37, 0
      %p142 = por %p140, %p141
      %p143 = scmp.ne.s32.totalorder %s131, %s132
      %p144 = scmp.eq.s32.totalorder %s38, 1
      %p145 = por %p143, %p144
      %p147 = scmp.ne.s32.totalorder %s132, %s146
      %p148 = scmp.eq.s32.totalorder %s38, 0
      %p149 = por %p147, %p148
      %s151 = sadd.s32 %s150, 1
      %p154 = scmp.eq.s32.totalorder %s32, 1
      %p155 = scmp.ne.s32.totalorder %s150, %s152
      %p156 = scmp.eq.s32.totalorder %s32, 0
      %p157 = por %p155, %p156
      %p158 = scmp.ne.s32.totalorder %s150, %s152
      %p159 = scmp.eq.s32.totalorder %s37, 1
      %p160 = por %p158, %p159
      %p161 = scmp.ne.s32.totalorder %s152, %s153
      %p162 = scmp.eq.s32.totalorder %s37, 0
      %p163 = por %p161, %p162
      %p164 = scmp.ne.s32.totalorder %s152, %s153
      %p165 = scmp.eq.s32.totalorder %s38, 1
      %p166 = por %p164, %p165
      %p168 = scmp.ne.s32.totalorder %s153, %s167
      %p169 = scmp.eq.s32.totalorder %s38, 0
      %p170 = por %p168, %p169
      %s172 = sadd.s32 %s171, 1
      %p175 = scmp.eq.s32.totalorder %s32, 1
      %p176 = scmp.ne.s32.totalorder %s171, %s173
      %p177 = scmp.eq.s32.totalorder %s32, 0
      %p178 = por %p176, %p177
      %p179 = scmp.ne.s32.totalorder %s171, %s173
      %p180 = scmp.eq.s32.totalorder %s37, 1
      %p181 = por %p179, %p180
      %p182 = scmp.ne.s32.totalorder %s173, %s174
      %p183 = scmp.eq.s32.totalorder %s37, 0
      %p184 = por %p182, %p183
      %p185 = scmp.ne.s32.totalorder %s173, %s174
      %p186 = scmp.eq.s32.totalorder %s38, 1
      %p187 = por %p185, %p186
      %p189 = scmp.ne.s32.totalorder %s174, %s188
      %p190 = scmp.eq.s32.totalorder %s38, 0
      %p191 = por %p189, %p190
      %s193 = sadd.s32 %s192, 1
      %p196 = scmp.eq.s32.totalorder %s32, 1
      %p197 = scmp.ne.s32.totalorder %s192, %s194
      %p198 = scmp.eq.s32.totalorder %s32, 0
      %p199 = por %p197, %p198
      %p200 = scmp.ne.s32.totalorder %s192, %s194
      %p201 = scmp.eq.s32.totalorder %s37, 1
      %p202 = por %p200, %p201
      %p203 = scmp.ne.s32.totalorder %s194, %s195
      %p204 = scmp.eq.s32.totalorder %s37, 0
      %p205 = por %p203, %p204
      %p206 = scmp.ne.s32.totalorder %s194, %s195
      %p207 = scmp.eq.s32.totalorder %s38, 1
      %p208 = por %p206, %p207
      %p210 = scmp.ne.s32.totalorder %s195, %s209
      %p211 = scmp.eq.s32.totalorder %s38, 0
      %p212 = por %p210, %p211
      %s214 = sadd.s32 %s213, 1
      %p217 = scmp.eq.s32.totalorder %s32, 1
      %p218 = scmp.ne.s32.totalorder %s213, %s215
      %p219 = scmp.eq.s32.totalorder %s32, 0
      %p220 = por %p218, %p219
      %p221 = scmp.ne.s32.totalorder %s213, %s215
      %p222 = scmp.eq.s32.totalorder %s37, 1
      %p223 = por %p221, %p222
      %p224 = scmp.ne.s32.totalorder %s215, %s216
      %p225 = scmp.eq.s32.totalorder %s37, 0
      %p226 = por %p224, %p225
      %p227 = scmp.ne.s32.totalorder %s215, %s216
      %p228 = scmp.eq.s32.totalorder %s38, 1
      %p229 = por %p227, %p228
      %p231 = scmp.ne.s32.totalorder %s216, %s230
      %p232 = scmp.eq.s32.totalorder %s38, 0
      %p233 = por %p231, %p232
      %s235 = sadd.s32 %s234, 1
      %p238 = scmp.eq.s32.totalorder %s32, 1
      %p239 = scmp.ne.s32.totalorder %s234, %s236
      %p240 = scmp.eq.s32.totalorder %s32, 0
      %p241 = por %p239, %p240
      %p242 = scmp.ne.s32.totalorder %s234, %s236
      %p243 = scmp.eq.s32.totalorder %s37, 1
      %p244 = por %p242, %p243
      %p245 = scmp.ne.s32.totalorder %s236, %s237
      %p246 = scmp.eq.s32.totalorder %s37, 0
      %p247 = por %p245, %p246
      %p248 = scmp.ne.s32.totalorder %s236, %s237
      %p249 = scmp.eq.s32.totalorder %s38, 1
      %p250 = por %p248, %p249
      %p252 = scmp.ne.s32.totalorder %s237, %s251
      %p253 = scmp.eq.s32.totalorder %s38, 0
      %p254 = por %p252, %p253
      %s256 = sadd.s32 %s255, 1
      %p259 = scmp.eq.s32.totalorder %s32, 1
      %p260 = scmp.ne.s32.totalorder %s255, %s257
      %p261 = scmp.eq.s32.totalorder %s32, 0
      %p262 = por %p260, %p261
      %p263 = scmp.ne.s32.totalorder %s255, %s257
      %p264 = scmp.eq.s32.totalorder %s37, 1
      %p265 = por %p263, %p264
      %p266 = scmp.ne.s32.totalorder %s257, %s258
      %p267 = scmp.eq.s32.totalorder %s37, 0
      %p268 = por %p266, %p267
      %p269 = scmp.ne.s32.totalorder %s257, %s258
      %p270 = scmp.eq.s32.totalorder %s38, 1
      %p271 = por %p269, %p270
      %p273 = scmp.ne.s32.totalorder %s258, %s272
      %p274 = scmp.eq.s32.totalorder %s38, 0
      %p275 = por %p273, %p274
      %s277 = sadd.s32 %s276, 1
      %p280 = scmp.eq.s32.totalorder %s32, 1
      %p281 = scmp.ne.s32.totalorder %s276, %s278
      %p282 = scmp.eq.s32.totalorder %s32, 0
      %p283 = por %p281, %p282
      %p284 = scmp.ne.s32.totalorder %s276, %s278
      %p285 = scmp.eq.s32.totalorder %s37, 1
      %p286 = por %p284, %p285
      %p287 = scmp.ne.s32.totalorder %s278, %s279
      %p288 = scmp.eq.s32.totalorder %s37, 0
      %p289 = por %p287, %p288
      %p290 = scmp.ne.s32.totalorder %s278, %s279
      %p291 = scmp.eq.s32.totalorder %s38, 1
      %p292 = por %p290, %p291
      %p294 = scmp.ne.s32.totalorder %s279, %s293
      %p295 = scmp.eq.s32.totalorder %s38, 0
      %p296 = por %p294, %p295
      %s298 = sadd.s32 %s297, 1
      %p301 = scmp.eq.s32.totalorder %s32, 1
      %p302 = scmp.ne.s32.totalorder %s297, %s299
      %p303 = scmp.eq.s32.totalorder %s32, 0
      %p304 = por %p302, %p303
      %p305 = scmp.ne.s32.totalorder %s297, %s299
      %p306 = scmp.eq.s32.totalorder %s37, 1
      %p307 = por %p305, %p306
      %p308 = scmp.ne.s32.totalorder %s299, %s300
      %p309 = scmp.eq.s32.totalorder %s37, 0
      %p310 = por %p308, %p309
      %p311 = scmp.ne.s32.totalorder %s299, %s300
      %p312 = scmp.eq.s32.totalorder %s38, 1
      %p313 = por %p311, %p312
      %p315 = scmp.ne.s32.totalorder %s300, %s314
      %p316 = scmp.eq.s32.totalorder %s38, 0
      %p317 = por %p315, %p316
      %s319 = sadd.s32 %s318, 1
      %p322 = scmp.eq.s32.totalorder %s32, 1
      %p323 = scmp.ne.s32.totalorder %s318, %s320
      %p324 = scmp.eq.s32.totalorder %s32, 0
      %p325 = por %p323, %p324
      %p326 = scmp.ne.s32.totalorder %s318, %s320
      %p327 = scmp.eq.s32.totalorder %s37, 1
      %p328 = por %p326, %p327
      %p329 = scmp.ne.s32.totalorder %s320, %s321
      %p330 = scmp.eq.s32.totalorder %s37, 0
      %p331 = por %p329, %p330
      %p332 = scmp.ne.s32.totalorder %s320, %s321
      %p333 = scmp.eq.s32.totalorder %s38, 1
      %p334 = por %p332, %p333
      %p336 = scmp.ne.s32.totalorder %s321, %s335
      %p337 = scmp.eq.s32.totalorder %s38, 0
      %p338 = por %p336, %p337
      %s340 = sadd.s32 %s339, 1
      %p343 = scmp.eq.s32.totalorder %s32, 1
      %p344 = scmp.ne.s32.totalorder %s339, %s341
      %p345 = scmp.eq.s32.totalorder %s32, 0
      %p346 = por %p344, %p345
      %p347 = scmp.ne.s32.totalorder %s339, %s341
      %p348 = scmp.eq.s32.totalorder %s37, 1
      %p349 = por %p347, %p348
      %p350 = scmp.ne.s32.totalorder %s341, %s342
      %p351 = scmp.eq.s32.totalorder %s37, 0
      %p352 = por %p350, %p351
      %p353 = scmp.ne.s32.totalorder %s341, %s342
      %p354 = scmp.eq.s32.totalorder %s38, 1
      %p355 = por %p353, %p354
      %p357 = scmp.ne.s32.totalorder %s342, %s356
      %p358 = scmp.eq.s32.totalorder %s38, 0
      %p359 = por %p357, %p358
      %s361 = sadd.s32 %s360, 1
      %p364 = scmp.eq.s32.totalorder %s32, 1
      %p365 = scmp.ne.s32.totalorder %s360, %s362
      %p366 = scmp.eq.s32.totalorder %s32, 0
      %p367 = por %p365, %p366
      %p368 = scmp.ne.s32.totalorder %s360, %s362
      %p369 = scmp.eq.s32.totalorder %s37, 1
      %p370 = por %p368, %p369
      %p371 = scmp.ne.s32.totalorder %s362, %s363
      %p372 = scmp.eq.s32.totalorder %s37, 0
      %p373 = por %p371, %p372
      %p374 = scmp.ne.s32.totalorder %s362, %s363
      %p375 = scmp.eq.s32.totalorder %s38, 1
      %p376 = por %p374, %p375
      %p378 = scmp.ne.s32.totalorder %s363, %s377
      %p379 = scmp.eq.s32.totalorder %s38, 0
      %p380 = por %p378, %p379
      %s382 = sadd.s32 %s381, 1
      %p385 = scmp.eq.s32.totalorder %s32, 1
      %p386 = scmp.ne.s32.totalorder %s381, %s383
      %p387 = scmp.eq.s32.totalorder %s32, 0
      %p388 = por %p386, %p387
      %p389 = scmp.ne.s32.totalorder %s381, %s383
      %p390 = scmp.eq.s32.totalorder %s37, 1
      %p391 = por %p389, %p390
      %p392 = scmp.ne.s32.totalorder %s383, %s384
      %p393 = scmp.eq.s32.totalorder %s37, 0
      %p394 = por %p392, %p393
      %p395 = scmp.ne.s32.totalorder %s383, %s384
      %p396 = scmp.eq.s32.totalorder %s38, 1
      %p397 = por %p395, %p396
      %p399 = scmp.ne.s32.totalorder %s384, %s398
      %p400 = scmp.eq.s32.totalorder %s38, 0
      %p401 = por %p399, %p400
      %s402 = ssub.s32 %s32, %s39
      %p403 = scmp.eq.s32.totalorder %s402, 0
      %s405 = sadd.s32 %s404, 1
      %s406 = scalar_select %p403, %s404, %s405
      %p409 = pneg %p403
      %p410 = scmp.eq.s32.totalorder %s32, 1
      %p411 = por %p409, %p410
      %p412 = scmp.ne.s32.totalorder %s404, %s407
      %p413 = scmp.eq.s32.totalorder %s32, 0
      %p414 = por %p412, %p413
      %p415 = scmp.ne.s32.totalorder %s404, %s407
      %p416 = scmp.eq.s32.totalorder %s37, 1
      %p417 = por %p415, %p416
      %p418 = scmp.ne.s32.totalorder %s407, %s408
      %p419 = scmp.eq.s32.totalorder %s37, 0
      %p420 = por %p418, %p419
      %p421 = scmp.ne.s32.totalorder %s407, %s408
      %p422 = scmp.eq.s32.totalorder %s38, 1
      %p423 = por %p421, %p422
      %p425 = scmp.ne.s32.totalorder %s408, %s424
      %p426 = scmp.eq.s32.totalorder %s38, 0
      %p427 = por %p425, %p426
      %s428 = ssub.s32 %s32, %s39
      %p429 = scmp.eq.s32.totalorder %s428, 0
      %s431 = sadd.s32 %s430, 1
      %s432 = scalar_select %p429, %s430, %s431
      %p435 = pneg %p429
      %p436 = scmp.eq.s32.totalorder %s32, 1
      %p437 = por %p435, %p436
      %p438 = scmp.ne.s32.totalorder %s430, %s433
      %p439 = scmp.eq.s32.totalorder %s32, 0
      %p440 = por %p438, %p439
      %p441 = scmp.ne.s32.totalorder %s430, %s433
      %p442 = scmp.eq.s32.totalorder %s37, 1
      %p443 = por %p441, %p442
      %p444 = scmp.ne.s32.totalorder %s433, %s434
      %p445 = scmp.eq.s32.totalorder %s37, 0
      %p446 = por %p444, %p445
      %p447 = scmp.ne.s32.totalorder %s433, %s434
      %p448 = scmp.eq.s32.totalorder %s38, 1
      %p449 = por %p447, %p448
      %p451 = scmp.ne.s32.totalorder %s434, %s450
      %p452 = scmp.eq.s32.totalorder %s38, 0
      %p453 = por %p451, %p452
      %p454 = scmp.le.s32.totalorder 1, %s32
      %p455 = scmp.lt.s32.totalorder %s32, 3
      %p456 = pnand %p454, %p455
      %p457 = pneg %p456
      // Predicated region
      $region9: #{tpu_custom_call.1} parent=5 // pred_check
        _
      $region10: #{tpu_custom_call.1} parent=5 // pred_check_branch
        %459 = sbr.rel (%p456) target = $region12
      $region11: #{tpu_custom_call.1} parent=5 // pred_region
        %s460 = ssub.s32 %s32, 1
        // Predicated region
        $region13: #{tpu_custom_call.1} parent=11 // pred_check
          %p461 = pneg %p79
        $region14: #{tpu_custom_call.1} parent=11 // pred_check_branch
          %463 = sbr.rel (%p461) target = $region16
        $region15: #{tpu_custom_call.1} parent=11 // pred_region
          %s465 = ssub.s32 27648, 27648
          %466 = vsyncadd [#allocation3], %s465
          %s467 = sshll.u32 [#allocation2], 4
          %s468 = int_to_ptr.vmem [resolvable:$true] %s467
          %473 = dma.hbm_to_vmem [thread:$0]  %s1, 27648, %s468, [#allocation3], 576, 576, 36
        $region16: #{tpu_custom_call.1} parent=11 // pred_fallthru
          _
        // Predicated region
        $region17: #{tpu_custom_call.1} parent=11 // pred_check
          %p474 = pneg %p100
        $region18: #{tpu_custom_call.1} parent=11 // pred_check_branch
          %476 = sbr.rel (%p474) target = $region20
        $region19: #{tpu_custom_call.1} parent=11 // pred_region
          _
        $region20: #{tpu_custom_call.1} parent=11 // pred_fallthru
          _
        // Predicated region
        $region21: #{tpu_custom_call.1} parent=11 // pred_check
          %p477 = pneg %p121
        $region22: #{tpu_custom_call.1} parent=11 // pred_check_branch
          %479 = sbr.rel (%p477) target = $region24
        $region23: #{tpu_custom_call.1} parent=11 // pred_region
          _
        $region24: #{tpu_custom_call.1} parent=11 // pred_fallthru
          _
        // Predicated region
        $region25: #{tpu_custom_call.1} parent=11 // pred_check
          %p480 = pneg %p142
        $region26: #{tpu_custom_call.1} parent=11 // pred_check_branch
          %482 = sbr.rel (%p480) target = $region28
        $region27: #{tpu_custom_call.1} parent=11 // pred_region
          _
        $region28: #{tpu_custom_call.1} parent=11 // pred_fallthru
          _
        // Predicated region
        $region29: #{tpu_custom_call.1} parent=11 // pred_check
          %p483 = pneg %p163
        $region30: #{tpu_custom_call.1} parent=11 // pred_check_branch
          %485 = sbr.rel (%p483) target = $region32
        $region31: #{tpu_custom_call.1} parent=11 // pred_region
          _
        $region32: #{tpu_custom_call.1} parent=11 // pred_fallthru
          _
        // Predicated region
        $region33: #{tpu_custom_call.1} parent=11 // pred_check
          %p486 = pneg %p184
        $region34: #{tpu_custom_call.1} parent=11 // pred_check_branch
          %488 = sbr.rel (%p486) target = $region36
        $region35: #{tpu_custom_call.1} parent=11 // pred_region
          _
        $region36: #{tpu_custom_call.1} parent=11 // pred_fallthru
          _
        // Predicated region
        $region37: #{tpu_custom_call.1} parent=11 // pred_check
          %p489 = pneg %p205
        $region38: #{tpu_custom_call.1} parent=11 // pred_check_branch
          %491 = sbr.rel (%p489) target = $region40
        $region39: #{tpu_custom_call.1} parent=11 // pred_region
          _
        $region40: #{tpu_custom_call.1} parent=11 // pred_fallthru
          _
        // Predicated region
        $region41: #{tpu_custom_call.1} parent=11 // pred_check
          %p492 = pneg %p226
        $region42: #{tpu_custom_call.1} parent=11 // pred_check_branch
          %494 = sbr.rel (%p492) target = $region44
        $region43: #{tpu_custom_call.1} parent=11 // pred_region
          _
        $region44: #{tpu_custom_call.1} parent=11 // pred_fallthru
          _
        // Predicated region
        $region45: #{tpu_custom_call.1} parent=11 // pred_check
          %p495 = pneg %p247
        $region46: #{tpu_custom_call.1} parent=11 // pred_check_branch
          %497 = sbr.rel (%p495) target = $region48
        $region47: #{tpu_custom_call.1} parent=11 // pred_region
          _
        $region48: #{tpu_custom_call.1} parent=11 // pred_fallthru
          _
        // Predicated region
        $region49: #{tpu_custom_call.1} parent=11 // pred_check
          %p498 = pneg %p268
        $region50: #{tpu_custom_call.1} parent=11 // pred_check_branch
          %500 = sbr.rel (%p498) target = $region52
        $region51: #{tpu_custom_call.1} parent=11 // pred_region
          _
        $region52: #{tpu_custom_call.1} parent=11 // pred_fallthru
          _
        // Predicated region
        $region53: #{tpu_custom_call.1} parent=11 // pred_check
          %p501 = pneg %p289
        $region54: #{tpu_custom_call.1} parent=11 // pred_check_branch
          %503 = sbr.rel (%p501) target = $region56
        $region55: #{tpu_custom_call.1} parent=11 // pred_region
          _
        $region56: #{tpu_custom_call.1} parent=11 // pred_fallthru
          _
        // Predicated region
        $region57: #{tpu_custom_call.1} parent=11 // pred_check
          %p504 = pneg %p310
        $region58: #{tpu_custom_call.1} parent=11 // pred_check_branch
          %506 = sbr.rel (%p504) target = $region60
        $region59: #{tpu_custom_call.1} parent=11 // pred_region
          _
        $region60: #{tpu_custom_call.1} parent=11 // pred_fallthru
          _
        // Predicated region
        $region61: #{tpu_custom_call.1} parent=11 // pred_check
          %p507 = pneg %p331
        $region62: #{tpu_custom_call.1} parent=11 // pred_check_branch
          %509 = sbr.rel (%p507) target = $region64
        $region63: #{tpu_custom_call.1} parent=11 // pred_region
          _
        $region64: #{tpu_custom_call.1} parent=11 // pred_fallthru
          _
        // Predicated region
        $region65: #{tpu_custom_call.1} parent=11 // pred_check
          %p510 = pneg %p352
        $region66: #{tpu_custom_call.1} parent=11 // pred_check_branch
          %512 = sbr.rel (%p510) target = $region68
        $region67: #{tpu_custom_call.1} parent=11 // pred_region
          _
        $region68: #{tpu_custom_call.1} parent=11 // pred_fallthru
          _
        // Predicated region
        $region69: #{tpu_custom_call.1} parent=11 // pred_check
          %p513 = pneg %p373
        $region70: #{tpu_custom_call.1} parent=11 // pred_check_branch
          %515 = sbr.rel (%p513) target = $region72
        $region71: #{tpu_custom_call.1} parent=11 // pred_region
          _
        $region72: #{tpu_custom_call.1} parent=11 // pred_fallthru
          _
        // Predicated region
        $region73: #{tpu_custom_call.1} parent=11 // pred_check
          %p516 = pneg %p394
        $region74: #{tpu_custom_call.1} parent=11 // pred_check_branch
          %518 = sbr.rel (%p516) target = $region76
        $region75: #{tpu_custom_call.1} parent=11 // pred_region
          _
        $region76: #{tpu_custom_call.1} parent=11 // pred_fallthru
          _
      $region12: #{tpu_custom_call.1} parent=5 // pred_fallthru
        _
      %p519 = scmp.lt.s32.totalorder %s32, 2
      // Predicated region
      $region77: #{tpu_custom_call.1} parent=5 // pred_check
        %p520 = pneg %p519
      $region78: #{tpu_custom_call.1} parent=5 // pred_check_branch
        %522 = sbr.rel (%p520) target = $region80
      $region79: #{tpu_custom_call.1} parent=5 // pred_region
        // Predicated region
        $region81: #{tpu_custom_call.1} parent=79 // pred_check
          %p523 = pneg %p52
        $region82: #{tpu_custom_call.1} parent=79 // pred_check_branch
          %525 = sbr.rel (%p523) target = $region84
        $region83: #{tpu_custom_call.1} parent=79 // pred_region
          %p526 = scmp.lt.s32.totalorder %s32, 1
          %s527 = scalar_select %p526, %s32, 1
          %s528 = smul.addr %s527, 3
          %s529 = smul.addr %s528, 8
          %s530 = scalar_lea.vmem %s0, %s529
        $region84: #{tpu_custom_call.1} parent=79 // pred_fallthru
          _
      $region80: #{tpu_custom_call.1} parent=5 // pred_fallthru
        _
      %p531 = scmp.le.s32.totalorder 1, %s32
      %p532 = scmp.lt.s32.totalorder %s32, 3
      %p533 = pnand %p531, %p532
      %p534 = pneg %p533
      // Predicated region
      $region85: #{tpu_custom_call.1} parent=5 // pred_check
        _
      $region86: #{tpu_custom_call.1} parent=5 // pred_check_branch
        %536 = sbr.rel (%p533) target = $region88
      $region87: #{tpu_custom_call.1} parent=5 // pred_region
        %s537 = ssub.s32 %s32, 1
        // Predicated region
        $region89: #{tpu_custom_call.1} parent=87 // pred_check
          %p538 = pneg %p79
        $region90: #{tpu_custom_call.1} parent=87 // pred_check_branch
          %540 = sbr.rel (%p538) target = $region92
        $region91: #{tpu_custom_call.1} parent=87 // pred_region
          %541 = dma.done [#allocation3], 27648
        $region92: #{tpu_custom_call.1} parent=87 // pred_fallthru
          _
        %p542 = scmp.lt.s32.totalorder %s37, 1
        %s543 = scalar_select %p542, %s37, 1
        %s544 = smul.addr %s543, 3
        %s545 = smul.addr %s544, 8
        %s546 = scalar_lea.vmem %s0, %s545
        %p547 = pneg %p58
        %p548 = pneg %p55
        %p549 = pneg %p79
        %p550 = pneg %p76
        %p551 = pneg %p100
        %p552 = pneg %p97
        %p553 = pneg %p121
        %p554 = pneg %p118
        %p555 = pneg %p142
        %p556 = pneg %p139
        %p557 = pneg %p163
        %p558 = pneg %p160
        %p559 = pneg %p184
        %p560 = pneg %p181
        %p561 = pneg %p205
        %p562 = pneg %p202
        %p563 = pneg %p226
        %p564 = pneg %p223
        %p565 = pneg %p247
        %p566 = pneg %p244
        %p567 = pneg %p268
        %p568 = pneg %p265
        %p569 = pneg %p289
        %p570 = pneg %p286
        %p571 = pneg %p310
        %p572 = pneg %p307
        %p573 = pneg %p331
        %p574 = pneg %p328
        %p575 = pneg %p352
        %p576 = pneg %p349
        %p577 = pneg %p373
        %p578 = pneg %p370
        %p579 = pneg %p394
        %p580 = pneg %p391
        %p581 = pneg %p420
        %p582 = pneg %p417
        %s583 = sand.u32 %s407, 1
        %s584 = scalar_lea.sflag [#allocation4], %s583
        %s585 = sand.u32 %s407, 1
        %s586 = smul.addr %s585, 24
        %s587 = scalar_lea.vmem [#allocation5], %s586
        %p588 = pneg %p446
        %p589 = pneg %p443
        %s590 = sand.u32 %s433, 1
        %s591 = scalar_lea.sflag [#allocation7], %s590
        %s592 = sand.u32 %s433, 1
        %s593 = smul.addr %s592, 6
        %s594 = scalar_lea.vmem [#allocation6], %s593
        %p595 = scmp.lt.s32.totalorder %s37, 1
        %s596 = scalar_select %p595, %s37, 1
        %s597 = smul.addr %s596, 3
        %s598 = smul.addr %s597, 8
        %s599 = scalar_lea.vmem %s0, %s598
        %v601 = vld [vmem:[%s599] sm:$0xff]
        %v602 = vld [vmem:[%s599 + $0x8] sm:$0xff]
        %v603 = vld [vmem:[%s599 + $0x10] sm:$0xff]
        %v604 = vpack.c.bf16 %v601, %v601
        %v605 = vpack.c.bf16 %v602, %v602
        %v606 = vpack.c.bf16 %v603, %v603
        %v607 = vld [vmem:[#allocation2] sm:$0xff]
        %v608 = vld [vmem:[#allocation2 + $0x8] sm:$0xff]
        %v609 = vld [vmem:[#allocation2 + $0x10] sm:$0xff]
        %v610 = vld [vmem:[#allocation2 + $0x18] sm:$0xff]
        %v611 = vld [vmem:[#allocation2 + $0x20] sm:$0xf]
        %v612 = vld [vmem:[#allocation2 + $0x24] sm:$0xff]
        %v613 = vld [vmem:[#allocation2 + $0x2c] sm:$0xff]
        %v614 = vld [vmem:[#allocation2 + $0x34] sm:$0xff]
        %v615 = vld [vmem:[#allocation2 + $0x3c] sm:$0xff]
        %v616 = vld [vmem:[#allocation2 + $0x44] sm:$0xf]
        %v617 = vld [vmem:[#allocation2 + $0x48] sm:$0xff]
        %v618 = vld [vmem:[#allocation2 + $0x50] sm:$0xff]
        %v619 = vld [vmem:[#allocation2 + $0x58] sm:$0xff]
        %v620 = vld [vmem:[#allocation2 + $0x60] sm:$0xff]
        %v621 = vld [vmem:[#allocation2 + $0x68] sm:$0xf]
        %v622 = vld [vmem:[#allocation2 + $0x6c] sm:$0xff]
        %v623 = vld [vmem:[#allocation2 + $0x74] sm:$0xff]
        %v624 = vld [vmem:[#allocation2 + $0x7c] sm:$0xff]
        %v625 = vld [vmem:[#allocation2 + $0x84] sm:$0xff]
        %v626 = vld [vmem:[#allocation2 + $0x8c] sm:$0xf]
        %v627 = vld [vmem:[#allocation2 + $0x90] sm:$0xff]
        %v628 = vld [vmem:[#allocation2 + $0x98] sm:$0xff]
        %v629 = vld [vmem:[#allocation2 + $0xa0] sm:$0xff]
        %v630 = vld [vmem:[#allocation2 + $0xa8] sm:$0xff]
        %v631 = vld [vmem:[#allocation2 + $0xb0] sm:$0xf]
        %v632 = vld [vmem:[#allocation2 + $0xb4] sm:$0xff]
        %v633 = vld [vmem:[#allocation2 + $0xbc] sm:$0xff]
        %v634 = vld [vmem:[#allocation2 + $0xc4] sm:$0xff]
        %v635 = vld [vmem:[#allocation2 + $0xcc] sm:$0xff]
        %v636 = vld [vmem:[#allocation2 + $0xd4] sm:$0xf]
        %v637 = vld [vmem:[#allocation2 + $0xd8] sm:$0xff]
        %v638 = vld [vmem:[#allocation2 + $0xe0] sm:$0xff]
        %v639 = vld [vmem:[#allocation2 + $0xe8] sm:$0xff]
        %v640 = vld [vmem:[#allocation2 + $0xf0] sm:$0xff]
        %v641 = vld [vmem:[#allocation2 + $0xf8] sm:$0xf]
        %v642 = vld [vmem:[#allocation2 + $0xfc] sm:$0xff]
        %v643 = vld [vmem:[#allocation2 + $0x104] sm:$0xff]
        %v644 = vld [vmem:[#allocation2 + $0x10c] sm:$0xff]
        %v645 = vld [vmem:[#allocation2 + $0x114] sm:$0xff]
        %v646 = vld [vmem:[#allocation2 + $0x11c] sm:$0xf]
        %v647 = vld [vmem:[#allocation2 + $0x120] sm:$0xff]
        %v648 = vld [vmem:[#allocation2 + $0x128] sm:$0xff]
        %v649 = vld [vmem:[#allocation2 + $0x130] sm:$0xff]
        %v650 = vld [vmem:[#allocation2 + $0x138] sm:$0xff]
        %v651 = vld [vmem:[#allocation2 + $0x140] sm:$0xf]
        %v652 = vld [vmem:[#allocation2 + $0x144] sm:$0xff]
        %v653 = vld [vmem:[#allocation2 + $0x14c] sm:$0xff]
        %v654 = vld [vmem:[#allocation2 + $0x154] sm:$0xff]
        %v655 = vld [vmem:[#allocation2 + $0x15c] sm:$0xff]
        %v656 = vld [vmem:[#allocation2 + $0x164] sm:$0xf]
        %v657 = vld [vmem:[#allocation2 + $0x168] sm:$0xff]
        %v658 = vld [vmem:[#allocation2 + $0x170] sm:$0xff]
        %v659 = vld [vmem:[#allocation2 + $0x178] sm:$0xff]
        %v660 = vld [vmem:[#allocation2 + $0x180] sm:$0xff]
        %v661 = vld [vmem:[#allocation2 + $0x188] sm:$0xf]
        %v662 = vld [vmem:[#allocation2 + $0x18c] sm:$0xff]
        %v663 = vld [vmem:[#allocation2 + $0x194] sm:$0xff]
        %v664 = vld [vmem:[#allocation2 + $0x19c] sm:$0xff]
        %v665 = vld [vmem:[#allocation2 + $0x1a4] sm:$0xff]
        %v666 = vld [vmem:[#allocation2 + $0x1ac] sm:$0xf]
        %v667 = vld [vmem:[#allocation2 + $0x1b0] sm:$0xff]
        %v668 = vld [vmem:[#allocation2 + $0x1b8] sm:$0xff]
        %v669 = vld [vmem:[#allocation2 + $0x1c0] sm:$0xff]
        %v670 = vld [vmem:[#allocation2 + $0x1c8] sm:$0xff]
        %v671 = vld [vmem:[#allocation2 + $0x1d0] sm:$0xf]
        %v672 = vld [vmem:[#allocation2 + $0x1d4] sm:$0xff]
        %v673 = vld [vmem:[#allocation2 + $0x1dc] sm:$0xff]
        %v674 = vld [vmem:[#allocation2 + $0x1e4] sm:$0xff]
        %v675 = vld [vmem:[#allocation2 + $0x1ec] sm:$0xff]
        %v676 = vld [vmem:[#allocation2 + $0x1f4] sm:$0xf]
        %v677 = vld [vmem:[#allocation2 + $0x1f8] sm:$0xff]
        %v678 = vld [vmem:[#allocation2 + $0x200] sm:$0xff]
        %v679 = vld [vmem:[#allocation2 + $0x208] sm:$0xff]
        %v680 = vld [vmem:[#allocation2 + $0x210] sm:$0xff]
        %v681 = vld [vmem:[#allocation2 + $0x218] sm:$0xf]
        %v682 = vld [vmem:[#allocation2 + $0x21c] sm:$0xff]
        %v683 = vld [vmem:[#allocation2 + $0x224] sm:$0xff]
        %v684 = vld [vmem:[#allocation2 + $0x22c] sm:$0xff]
        %v685 = vld [vmem:[#allocation2 + $0x234] sm:$0xff]
        %v686 = vld [vmem:[#allocation2 + $0x23c] sm:$0xf]
        %v687 = vld [vmem:[#allocation2 + $0x240] sm:$0xff]
        %v688 = vld [vmem:[#allocation2 + $0x248] sm:$0xff]
        %v689 = vld [vmem:[#allocation2 + $0x250] sm:$0xff]
        %v690 = vld [vmem:[#allocation2 + $0x258] sm:$0xff]
        %v691 = vld [vmem:[#allocation2 + $0x260] sm:$0xf]
        %v692 = vld [vmem:[#allocation2 + $0x264] sm:$0xff]
        %v693 = vld [vmem:[#allocation2 + $0x26c] sm:$0xff]
        %v694 = vld [vmem:[#allocation2 + $0x274] sm:$0xff]
        %v695 = vld [vmem:[#allocation2 + $0x27c] sm:$0xff]
        %v696 = vld [vmem:[#allocation2 + $0x284] sm:$0xf]
        %v697 = vld [vmem:[#allocation2 + $0x288] sm:$0xff]
        %v698 = vld [vmem:[#allocation2 + $0x290] sm:$0xff]
        %v699 = vld [vmem:[#allocation2 + $0x298] sm:$0xff]
        %v700 = vld [vmem:[#allocation2 + $0x2a0] sm:$0xff]
        %v701 = vld [vmem:[#allocation2 + $0x2a8] sm:$0xf]
        %v702 = vld [vmem:[#allocation2 + $0x2ac] sm:$0xff]
        %v703 = vld [vmem:[#allocation2 + $0x2b4] sm:$0xff]
        %v704 = vld [vmem:[#allocation2 + $0x2bc] sm:$0xff]
        %v705 = vld [vmem:[#allocation2 + $0x2c4] sm:$0xff]
        %v706 = vld [vmem:[#allocation2 + $0x2cc] sm:$0xf]
        %v707 = vld [vmem:[#allocation2 + $0x2d0] sm:$0xff]
        %v708 = vld [vmem:[#allocation2 + $0x2d8] sm:$0xff]
        %v709 = vld [vmem:[#allocation2 + $0x2e0] sm:$0xff]
        %v710 = vld [vmem:[#allocation2 + $0x2e8] sm:$0xff]
        %v711 = vld [vmem:[#allocation2 + $0x2f0] sm:$0xf]
        %v712 = vld [vmem:[#allocation2 + $0x2f4] sm:$0xff]
        %v713 = vld [vmem:[#allocation2 + $0x2fc] sm:$0xff]
        %v714 = vld [vmem:[#allocation2 + $0x304] sm:$0xff]
        %v715 = vld [vmem:[#allocation2 + $0x30c] sm:$0xff]
        %v716 = vld [vmem:[#allocation2 + $0x314] sm:$0xf]
        %v717 = vld [vmem:[#allocation2 + $0x318] sm:$0xff]
        %v718 = vld [vmem:[#allocation2 + $0x320] sm:$0xff]
        %v719 = vld [vmem:[#allocation2 + $0x328] sm:$0xff]
        %v720 = vld [vmem:[#allocation2 + $0x330] sm:$0xff]
        %v721 = vld [vmem:[#allocation2 + $0x338] sm:$0xf]
        %v722 = vld [vmem:[#allocation2 + $0x33c] sm:$0xff]
        %v723 = vld [vmem:[#allocation2 + $0x344] sm:$0xff]
        %v724 = vld [vmem:[#allocation2 + $0x34c] sm:$0xff]
        %v725 = vld [vmem:[#allocation2 + $0x354] sm:$0xff]
        %v726 = vld [vmem:[#allocation2 + $0x35c] sm:$0xf]
        %v727 = vld [vmem:[#allocation2 + $0x360] sm:$0xff]
        %v728 = vld [vmem:[#allocation2 + $0x368] sm:$0xff]
        %v729 = vld [vmem:[#allocation2 + $0x370] sm:$0xff]
        %v730 = vld [vmem:[#allocation2 + $0x378] sm:$0xff]
        %v731 = vld [vmem:[#allocation2 + $0x380] sm:$0xf]
        %v732 = vld [vmem:[#allocation2 + $0x384] sm:$0xff]
        %v733 = vld [vmem:[#allocation2 + $0x38c] sm:$0xff]
        %v734 = vld [vmem:[#allocation2 + $0x394] sm:$0xff]
        %v735 = vld [vmem:[#allocation2 + $0x39c] sm:$0xff]
        %v736 = vld [vmem:[#allocation2 + $0x3a4] sm:$0xf]
        %v737 = vld [vmem:[#allocation2 + $0x3a8] sm:$0xff]
        %v738 = vld [vmem:[#allocation2 + $0x3b0] sm:$0xff]
        %v739 = vld [vmem:[#allocation2 + $0x3b8] sm:$0xff]
        %v740 = vld [vmem:[#allocation2 + $0x3c0] sm:$0xff]
        %v741 = vld [vmem:[#allocation2 + $0x3c8] sm:$0xf]
        %v742 = vld [vmem:[#allocation2 + $0x3cc] sm:$0xff]
        %v743 = vld [vmem:[#allocation2 + $0x3d4] sm:$0xff]
        %v744 = vld [vmem:[#allocation2 + $0x3dc] sm:$0xff]
        %v745 = vld [vmem:[#allocation2 + $0x3e4] sm:$0xff]
        %v746 = vld [vmem:[#allocation2 + $0x3ec] sm:$0xf]
        %v747 = vld [vmem:[#allocation2 + $0x3f0] sm:$0xff]
        %v748 = vld [vmem:[#allocation2 + $0x3f8] sm:$0xff]
        %v749 = vld [vmem:[#allocation2 + $0x400] sm:$0xff]
        %v750 = vld [vmem:[#allocation2 + $0x408] sm:$0xff]
        %v751 = vld [vmem:[#allocation2 + $0x410] sm:$0xf]
        %v752 = vld [vmem:[#allocation2 + $0x414] sm:$0xff]
        %v753 = vld [vmem:[#allocation2 + $0x41c] sm:$0xff]
        %v754 = vld [vmem:[#allocation2 + $0x424] sm:$0xff]
        %v755 = vld [vmem:[#allocation2 + $0x42c] sm:$0xff]
        %v756 = vld [vmem:[#allocation2 + $0x434] sm:$0xf]
        %v757 = vld [vmem:[#allocation2 + $0x438] sm:$0xff]
        %v758 = vld [vmem:[#allocation2 + $0x440] sm:$0xff]
        %v759 = vld [vmem:[#allocation2 + $0x448] sm:$0xff]
        %v760 = vld [vmem:[#allocation2 + $0x450] sm:$0xff]
        %v761 = vld [vmem:[#allocation2 + $0x458] sm:$0xf]
        %v762 = vld [vmem:[#allocation2 + $0x45c] sm:$0xff]
        %v763 = vld [vmem:[#allocation2 + $0x464] sm:$0xff]
        %v764 = vld [vmem:[#allocation2 + $0x46c] sm:$0xff]
        %v765 = vld [vmem:[#allocation2 + $0x474] sm:$0xff]
        %v766 = vld [vmem:[#allocation2 + $0x47c] sm:$0xf]
        %v767 = vld [vmem:[#allocation2 + $0x480] sm:$0xff]
        %v768 = vld [vmem:[#allocation2 + $0x488] sm:$0xff]
        %v769 = vld [vmem:[#allocation2 + $0x490] sm:$0xff]
        %v770 = vld [vmem:[#allocation2 + $0x498] sm:$0xff]
        %v771 = vld [vmem:[#allocation2 + $0x4a0] sm:$0xf]
        %v772 = vld [vmem:[#allocation2 + $0x4a4] sm:$0xff]
        %v773 = vld [vmem:[#allocation2 + $0x4ac] sm:$0xff]
        %v774 = vld [vmem:[#allocation2 + $0x4b4] sm:$0xff]
        %v775 = vld [vmem:[#allocation2 + $0x4bc] sm:$0xff]
        %v776 = vld [vmem:[#allocation2 + $0x4c4] sm:$0xf]
        %v777 = vld [vmem:[#allocation2 + $0x4c8] sm:$0xff]
        %v778 = vld [vmem:[#allocation2 + $0x4d0] sm:$0xff]
        %v779 = vld [vmem:[#allocation2 + $0x4d8] sm:$0xff]
        %v780 = vld [vmem:[#allocation2 + $0x4e0] sm:$0xff]
        %v781 = vld [vmem:[#allocation2 + $0x4e8] sm:$0xf]
        %v782 = vld [vmem:[#allocation2 + $0x4ec] sm:$0xff]
        %v783 = vld [vmem:[#allocation2 + $0x4f4] sm:$0xff]
        %v784 = vld [vmem:[#allocation2 + $0x4fc] sm:$0xff]
        %v785 = vld [vmem:[#allocation2 + $0x504] sm:$0xff]
        %v786 = vld [vmem:[#allocation2 + $0x50c] sm:$0xf]
        %v787 = vld [vmem:[#allocation2 + $0x510] sm:$0xff]
        %v788 = vld [vmem:[#allocation2 + $0x518] sm:$0xff]
        %v789 = vld [vmem:[#allocation2 + $0x520] sm:$0xff]
        %v790 = vld [vmem:[#allocation2 + $0x528] sm:$0xff]
        %v791 = vld [vmem:[#allocation2 + $0x530] sm:$0xf]
        %v792 = vld [vmem:[#allocation2 + $0x534] sm:$0xff]
        %v793 = vld [vmem:[#allocation2 + $0x53c] sm:$0xff]
        %v794 = vld [vmem:[#allocation2 + $0x544] sm:$0xff]
        %v795 = vld [vmem:[#allocation2 + $0x54c] sm:$0xff]
        %v796 = vld [vmem:[#allocation2 + $0x554] sm:$0xf]
        %v797 = vld [vmem:[#allocation2 + $0x558] sm:$0xff]
        %v798 = vld [vmem:[#allocation2 + $0x560] sm:$0xff]
        %v799 = vld [vmem:[#allocation2 + $0x568] sm:$0xff]
        %v800 = vld [vmem:[#allocation2 + $0x570] sm:$0xff]
        %v801 = vld [vmem:[#allocation2 + $0x578] sm:$0xf]
        %v802 = vld [vmem:[#allocation2 + $0x57c] sm:$0xff]
        %v803 = vld [vmem:[#allocation2 + $0x584] sm:$0xff]
        %v804 = vld [vmem:[#allocation2 + $0x58c] sm:$0xff]
        %v805 = vld [vmem:[#allocation2 + $0x594] sm:$0xff]
        %v806 = vld [vmem:[#allocation2 + $0x59c] sm:$0xf]
        %v807 = vld [vmem:[#allocation2 + $0x5a0] sm:$0xff]
        %v808 = vld [vmem:[#allocation2 + $0x5a8] sm:$0xff]
        %v809 = vld [vmem:[#allocation2 + $0x5b0] sm:$0xff]
        %v810 = vld [vmem:[#allocation2 + $0x5b8] sm:$0xff]
        %v811 = vld [vmem:[#allocation2 + $0x5c0] sm:$0xf]
        %v812 = vld [vmem:[#allocation2 + $0x5c4] sm:$0xff]
        %v813 = vld [vmem:[#allocation2 + $0x5cc] sm:$0xff]
        %v814 = vld [vmem:[#allocation2 + $0x5d4] sm:$0xff]
        %v815 = vld [vmem:[#allocation2 + $0x5dc] sm:$0xff]
        %v816 = vld [vmem:[#allocation2 + $0x5e4] sm:$0xf]
        %v817 = vld [vmem:[#allocation2 + $0x5e8] sm:$0xff]
        %v818 = vld [vmem:[#allocation2 + $0x5f0] sm:$0xff]
        %v819 = vld [vmem:[#allocation2 + $0x5f8] sm:$0xff]
        %v820 = vld [vmem:[#allocation2 + $0x600] sm:$0xff]
        %v821 = vld [vmem:[#allocation2 + $0x608] sm:$0xf]
        %v822 = vld [vmem:[#allocation2 + $0x60c] sm:$0xff]
        %v823 = vld [vmem:[#allocation2 + $0x614] sm:$0xff]
        %v824 = vld [vmem:[#allocation2 + $0x61c] sm:$0xff]
        %v825 = vld [vmem:[#allocation2 + $0x624] sm:$0xff]
        %v826 = vld [vmem:[#allocation2 + $0x62c] sm:$0xf]
        %v827 = vld [vmem:[#allocation2 + $0x630] sm:$0xff]
        %v828 = vld [vmem:[#allocation2 + $0x638] sm:$0xff]
        %v829 = vld [vmem:[#allocation2 + $0x640] sm:$0xff]
        %v830 = vld [vmem:[#allocation2 + $0x648] sm:$0xff]
        %v831 = vld [vmem:[#allocation2 + $0x650] sm:$0xf]
        %v832 = vld [vmem:[#allocation2 + $0x654] sm:$0xff]
        %v833 = vld [vmem:[#allocation2 + $0x65c] sm:$0xff]
        %v834 = vld [vmem:[#allocation2 + $0x664] sm:$0xff]
        %v835 = vld [vmem:[#allocation2 + $0x66c] sm:$0xff]
        %v836 = vld [vmem:[#allocation2 + $0x674] sm:$0xf]
        %v837 = vld [vmem:[#allocation2 + $0x678] sm:$0xff]
        %v838 = vld [vmem:[#allocation2 + $0x680] sm:$0xff]
        %v839 = vld [vmem:[#allocation2 + $0x688] sm:$0xff]
        %v840 = vld [vmem:[#allocation2 + $0x690] sm:$0xff]
        %v841 = vld [vmem:[#allocation2 + $0x698] sm:$0xf]
        %v842 = vld [vmem:[#allocation2 + $0x69c] sm:$0xff]
        %v843 = vld [vmem:[#allocation2 + $0x6a4] sm:$0xff]
        %v844 = vld [vmem:[#allocation2 + $0x6ac] sm:$0xff]
        %v845 = vld [vmem:[#allocation2 + $0x6b4] sm:$0xff]
        %v846 = vld [vmem:[#allocation2 + $0x6bc] sm:$0xf]
        %v1087 = vunpack.c.l.b16 %v607
        %v1088 = vunpack.c.h.b16 %v607
        %v1089 = vunpack.c.l.b16 %v608
        %v1090 = vunpack.c.h.b16 %v608
        %v1091 = vunpack.c.l.b16 %v609
        %v1092 = vunpack.c.h.b16 %v609
        %v1093 = vunpack.c.l.b16 %v610
        %v1094 = vunpack.c.h.b16 %v610
        %v1095 = vunpack.c.l.b16 %v611
        %v1096 = vunpack.c.l.b16 %v612
        %v1097 = vunpack.c.h.b16 %v612
        %v1098 = vunpack.c.l.b16 %v613
        %v1099 = vunpack.c.h.b16 %v613
        %v1100 = vunpack.c.l.b16 %v614
        %v1101 = vunpack.c.h.b16 %v614
        %v1102 = vunpack.c.l.b16 %v615
        %v1103 = vunpack.c.h.b16 %v615
        %v1104 = vunpack.c.l.b16 %v616
        %v1105 = vunpack.c.l.b16 %v617
        %v1106 = vunpack.c.h.b16 %v617
        %v1107 = vunpack.c.l.b16 %v618
        %v1108 = vunpack.c.h.b16 %v618
        %v1109 = vunpack.c.l.b16 %v619
        %v1110 = vunpack.c.h.b16 %v619
        %v1111 = vunpack.c.l.b16 %v620
        %v1112 = vunpack.c.h.b16 %v620
        %v1113 = vunpack.c.l.b16 %v621
        %v1114 = vunpack.c.l.b16 %v622
        %v1115 = vunpack.c.h.b16 %v622
        %v1116 = vunpack.c.l.b16 %v623
        %v1117 = vunpack.c.h.b16 %v623
        %v1118 = vunpack.c.l.b16 %v624
        %v1119 = vunpack.c.h.b16 %v624
        %v1120 = vunpack.c.l.b16 %v625
        %v1121 = vunpack.c.h.b16 %v625
        %v1122 = vunpack.c.l.b16 %v626
        %v1123 = vunpack.c.l.b16 %v627
        %v1124 = vunpack.c.h.b16 %v627
        %v1125 = vunpack.c.l.b16 %v628
        %v1126 = vunpack.c.h.b16 %v628
        %v1127 = vunpack.c.l.b16 %v629
        %v1128 = vunpack.c.h.b16 %v629
        %v1129 = vunpack.c.l.b16 %v630
        %v1130 = vunpack.c.h.b16 %v630
        %v1131 = vunpack.c.l.b16 %v631
        %v1132 = vunpack.c.l.b16 %v632
        %v1133 = vunpack.c.h.b16 %v632
        %v1134 = vunpack.c.l.b16 %v633
        %v1135 = vunpack.c.h.b16 %v633
        %v1136 = vunpack.c.l.b16 %v634
        %v1137 = vunpack.c.h.b16 %v634
        %v1138 = vunpack.c.l.b16 %v635
        %v1139 = vunpack.c.h.b16 %v635
        %v1140 = vunpack.c.l.b16 %v636
        %v1141 = vunpack.c.l.b16 %v637
        %v1142 = vunpack.c.h.b16 %v637
        %v1143 = vunpack.c.l.b16 %v638
        %v1144 = vunpack.c.h.b16 %v638
        %v1145 = vunpack.c.l.b16 %v639
        %v1146 = vunpack.c.h.b16 %v639
        %v1147 = vunpack.c.l.b16 %v640
        %v1148 = vunpack.c.h.b16 %v640
        %v1149 = vunpack.c.l.b16 %v641
        %v1150 = vunpack.c.l.b16 %v642
        %v1151 = vunpack.c.h.b16 %v642
        %v1152 = vunpack.c.l.b16 %v643
        %v1153 = vunpack.c.h.b16 %v643
        %v1154 = vunpack.c.l.b16 %v644
        %v1155 = vunpack.c.h.b16 %v644
        %v1156 = vunpack.c.l.b16 %v645
        %v1157 = vunpack.c.h.b16 %v645
        %v1158 = vunpack.c.l.b16 %v646
        %v1159 = vunpack.c.l.b16 %v647
        %v1160 = vunpack.c.h.b16 %v647
        %v1161 = vunpack.c.l.b16 %v648
        %v1162 = vunpack.c.h.b16 %v648
        %v1163 = vunpack.c.l.b16 %v649
        %v1164 = vunpack.c.h.b16 %v649
        %v1165 = vunpack.c.l.b16 %v650
        %v1166 = vunpack.c.h.b16 %v650
        %v1167 = vunpack.c.l.b16 %v651
        %v1168 = vunpack.c.l.b16 %v652
        %v1169 = vunpack.c.h.b16 %v652
        %v1170 = vunpack.c.l.b16 %v653
        %v1171 = vunpack.c.h.b16 %v653
        %v1172 = vunpack.c.l.b16 %v654
        %v1173 = vunpack.c.h.b16 %v654
        %v1174 = vunpack.c.l.b16 %v655
        %v1175 = vunpack.c.h.b16 %v655
        %v1176 = vunpack.c.l.b16 %v656
        %v1177 = vunpack.c.l.b16 %v657
        %v1178 = vunpack.c.h.b16 %v657
        %v1179 = vunpack.c.l.b16 %v658
        %v1180 = vunpack.c.h.b16 %v658
        %v1181 = vunpack.c.l.b16 %v659
        %v1182 = vunpack.c.h.b16 %v659
        %v1183 = vunpack.c.l.b16 %v660
        %v1184 = vunpack.c.h.b16 %v660
        %v1185 = vunpack.c.l.b16 %v661
        %v1186 = vunpack.c.l.b16 %v662
        %v1187 = vunpack.c.h.b16 %v662
        %v1188 = vunpack.c.l.b16 %v663
        %v1189 = vunpack.c.h.b16 %v663
        %v1190 = vunpack.c.l.b16 %v664
        %v1191 = vunpack.c.h.b16 %v664
        %v1192 = vunpack.c.l.b16 %v665
        %v1193 = vunpack.c.h.b16 %v665
        %v1194 = vunpack.c.l.b16 %v666
        %v1195 = vunpack.c.l.b16 %v667
        %v1196 = vunpack.c.h.b16 %v667
        %v1197 = vunpack.c.l.b16 %v668
        %v1198 = vunpack.c.h.b16 %v668
        %v1199 = vunpack.c.l.b16 %v669
        %v1200 = vunpack.c.h.b16 %v669
        %v1201 = vunpack.c.l.b16 %v670
        %v1202 = vunpack.c.h.b16 %v670
        %v1203 = vunpack.c.l.b16 %v671
        %v1204 = vunpack.c.l.b16 %v672
        %v1205 = vunpack.c.h.b16 %v672
        %v1206 = vunpack.c.l.b16 %v673
        %v1207 = vunpack.c.h.b16 %v673
        %v1208 = vunpack.c.l.b16 %v674
        %v1209 = vunpack.c.h.b16 %v674
        %v1210 = vunpack.c.l.b16 %v675
        %v1211 = vunpack.c.h.b16 %v675
        %v1212 = vunpack.c.l.b16 %v676
        %v1213 = vunpack.c.l.b16 %v677
        %v1214 = vunpack.c.h.b16 %v677
        %v1215 = vunpack.c.l.b16 %v678
        %v1216 = vunpack.c.h.b16 %v678
        %v1217 = vunpack.c.l.b16 %v679
        %v1218 = vunpack.c.h.b16 %v679
        %v1219 = vunpack.c.l.b16 %v680
        %v1220 = vunpack.c.h.b16 %v680
        %v1221 = vunpack.c.l.b16 %v681
        %v1222 = vunpack.c.l.b16 %v682
        %v1223 = vunpack.c.h.b16 %v682
        %v1224 = vunpack.c.l.b16 %v683
        %v1225 = vunpack.c.h.b16 %v683
        %v1226 = vunpack.c.l.b16 %v684
        %v1227 = vunpack.c.h.b16 %v684
        %v1228 = vunpack.c.l.b16 %v685
        %v1229 = vunpack.c.h.b16 %v685
        %v1230 = vunpack.c.l.b16 %v686
        %v1231 = vunpack.c.l.b16 %v687
        %v1232 = vunpack.c.h.b16 %v687
        %v1233 = vunpack.c.l.b16 %v688
        %v1234 = vunpack.c.h.b16 %v688
        %v1235 = vunpack.c.l.b16 %v689
        %v1236 = vunpack.c.h.b16 %v689
        %v1237 = vunpack.c.l.b16 %v690
        %v1238 = vunpack.c.h.b16 %v690
        %v1239 = vunpack.c.l.b16 %v691
        %v1240 = vunpack.c.l.b16 %v692
        %v1241 = vunpack.c.h.b16 %v692
        %v1242 = vunpack.c.l.b16 %v693
        %v1243 = vunpack.c.h.b16 %v693
        %v1244 = vunpack.c.l.b16 %v694
        %v1245 = vunpack.c.h.b16 %v694
        %v1246 = vunpack.c.l.b16 %v695
        %v1247 = vunpack.c.h.b16 %v695
        %v1248 = vunpack.c.l.b16 %v696
        %v1249 = vunpack.c.l.b16 %v697
        %v1250 = vunpack.c.h.b16 %v697
        %v1251 = vunpack.c.l.b16 %v698
        %v1252 = vunpack.c.h.b16 %v698
        %v1253 = vunpack.c.l.b16 %v699
        %v1254 = vunpack.c.h.b16 %v699
        %v1255 = vunpack.c.l.b16 %v700
        %v1256 = vunpack.c.h.b16 %v700
        %v1257 = vunpack.c.l.b16 %v701
        %v1258 = vunpack.c.l.b16 %v702
        %v1259 = vunpack.c.h.b16 %v702
        %v1260 = vunpack.c.l.b16 %v703
        %v1261 = vunpack.c.h.b16 %v703
        %v1262 = vunpack.c.l.b16 %v704
        %v1263 = vunpack.c.h.b16 %v704
        %v1264 = vunpack.c.l.b16 %v705
        %v1265 = vunpack.c.h.b16 %v705
        %v1266 = vunpack.c.l.b16 %v706
        %v1267 = vunpack.c.l.b16 %v707
        %v1268 = vunpack.c.h.b16 %v707
        %v1269 = vunpack.c.l.b16 %v708
        %v1270 = vunpack.c.h.b16 %v708
        %v1271 = vunpack.c.l.b16 %v709
        %v1272 = vunpack.c.h.b16 %v709
        %v1273 = vunpack.c.l.b16 %v710
        %v1274 = vunpack.c.h.b16 %v710
        %v1275 = vunpack.c.l.b16 %v711
        %v1276 = vunpack.c.l.b16 %v712
        %v1277 = vunpack.c.h.b16 %v712
        %v1278 = vunpack.c.l.b16 %v713
        %v1279 = vunpack.c.h.b16 %v713
        %v1280 = vunpack.c.l.b16 %v714
        %v1281 = vunpack.c.h.b16 %v714
        %v1282 = vunpack.c.l.b16 %v715
        %v1283 = vunpack.c.h.b16 %v715
        %v1284 = vunpack.c.l.b16 %v716
        %v1285 = vunpack.c.l.b16 %v717
        %v1286 = vunpack.c.h.b16 %v717
        %v1287 = vunpack.c.l.b16 %v718
        %v1288 = vunpack.c.h.b16 %v718
        %v1289 = vunpack.c.l.b16 %v719
        %v1290 = vunpack.c.h.b16 %v719
        %v1291 = vunpack.c.l.b16 %v720
        %v1292 = vunpack.c.h.b16 %v720
        %v1293 = vunpack.c.l.b16 %v721
        %v1294 = vunpack.c.l.b16 %v722
        %v1295 = vunpack.c.h.b16 %v722
        %v1296 = vunpack.c.l.b16 %v723
        %v1297 = vunpack.c.h.b16 %v723
        %v1298 = vunpack.c.l.b16 %v724
        %v1299 = vunpack.c.h.b16 %v724
        %v1300 = vunpack.c.l.b16 %v725
        %v1301 = vunpack.c.h.b16 %v725
        %v1302 = vunpack.c.l.b16 %v726
        %v1303 = vunpack.c.l.b16 %v727
        %v1304 = vunpack.c.h.b16 %v727
        %v1305 = vunpack.c.l.b16 %v728
        %v1306 = vunpack.c.h.b16 %v728
        %v1307 = vunpack.c.l.b16 %v729
        %v1308 = vunpack.c.h.b16 %v729
        %v1309 = vunpack.c.l.b16 %v730
        %v1310 = vunpack.c.h.b16 %v730
        %v1311 = vunpack.c.l.b16 %v731
        %v1312 = vunpack.c.l.b16 %v732
        %v1313 = vunpack.c.h.b16 %v732
        %v1314 = vunpack.c.l.b16 %v733
        %v1315 = vunpack.c.h.b16 %v733
        %v1316 = vunpack.c.l.b16 %v734
        %v1317 = vunpack.c.h.b16 %v734
        %v1318 = vunpack.c.l.b16 %v735
        %v1319 = vunpack.c.h.b16 %v735
        %v1320 = vunpack.c.l.b16 %v736
        %v1321 = vunpack.c.l.b16 %v737
        %v1322 = vunpack.c.h.b16 %v737
        %v1323 = vunpack.c.l.b16 %v738
        %v1324 = vunpack.c.h.b16 %v738
        %v1325 = vunpack.c.l.b16 %v739
        %v1326 = vunpack.c.h.b16 %v739
        %v1327 = vunpack.c.l.b16 %v740
        %v1328 = vunpack.c.h.b16 %v740
        %v1329 = vunpack.c.l.b16 %v741
        %v1330 = vunpack.c.l.b16 %v742
        %v1331 = vunpack.c.h.b16 %v742
        %v1332 = vunpack.c.l.b16 %v743
        %v1333 = vunpack.c.h.b16 %v743
        %v1334 = vunpack.c.l.b16 %v744
        %v1335 = vunpack.c.h.b16 %v744
        %v1336 = vunpack.c.l.b16 %v745
        %v1337 = vunpack.c.h.b16 %v745
        %v1338 = vunpack.c.l.b16 %v746
        %v1339 = vunpack.c.l.b16 %v747
        %v1340 = vunpack.c.h.b16 %v747
        %v1341 = vunpack.c.l.b16 %v748
        %v1342 = vunpack.c.h.b16 %v748
        %v1343 = vunpack.c.l.b16 %v749
        %v1344 = vunpack.c.h.b16 %v749
        %v1345 = vunpack.c.l.b16 %v750
        %v1346 = vunpack.c.h.b16 %v750
        %v1347 = vunpack.c.l.b16 %v751
        %v1348 = vunpack.c.l.b16 %v752
        %v1349 = vunpack.c.h.b16 %v752
        %v1350 = vunpack.c.l.b16 %v753
        %v1351 = vunpack.c.h.b16 %v753
        %v1352 = vunpack.c.l.b16 %v754
        %v1353 = vunpack.c.h.b16 %v754
        %v1354 = vunpack.c.l.b16 %v755
        %v1355 = vunpack.c.h.b16 %v755
        %v1356 = vunpack.c.l.b16 %v756
        %v1357 = vunpack.c.l.b16 %v757
        %v1358 = vunpack.c.h.b16 %v757
        %v1359 = vunpack.c.l.b16 %v758
        %v1360 = vunpack.c.h.b16 %v758
        %v1361 = vunpack.c.l.b16 %v759
        %v1362 = vunpack.c.h.b16 %v759
        %v1363 = vunpack.c.l.b16 %v760
        %v1364 = vunpack.c.h.b16 %v760
        %v1365 = vunpack.c.l.b16 %v761
        %v1366 = vunpack.c.l.b16 %v762
        %v1367 = vunpack.c.h.b16 %v762
        %v1368 = vunpack.c.l.b16 %v763
        %v1369 = vunpack.c.h.b16 %v763
        %v1370 = vunpack.c.l.b16 %v764
        %v1371 = vunpack.c.h.b16 %v764
        %v1372 = vunpack.c.l.b16 %v765
        %v1373 = vunpack.c.h.b16 %v765
        %v1374 = vunpack.c.l.b16 %v766
        %v1375 = vunpack.c.l.b16 %v767
        %v1376 = vunpack.c.h.b16 %v767
        %v1377 = vunpack.c.l.b16 %v768
        %v1378 = vunpack.c.h.b16 %v768
        %v1379 = vunpack.c.l.b16 %v769
        %v1380 = vunpack.c.h.b16 %v769
        %v1381 = vunpack.c.l.b16 %v770
        %v1382 = vunpack.c.h.b16 %v770
        %v1383 = vunpack.c.l.b16 %v771
        %v1384 = vunpack.c.l.b16 %v772
        %v1385 = vunpack.c.h.b16 %v772
        %v1386 = vunpack.c.l.b16 %v773
        %v1387 = vunpack.c.h.b16 %v773
        %v1388 = vunpack.c.l.b16 %v774
        %v1389 = vunpack.c.h.b16 %v774
        %v1390 = vunpack.c.l.b16 %v775
        %v1391 = vunpack.c.h.b16 %v775
        %v1392 = vunpack.c.l.b16 %v776
        %v1393 = vunpack.c.l.b16 %v777
        %v1394 = vunpack.c.h.b16 %v777
        %v1395 = vunpack.c.l.b16 %v778
        %v1396 = vunpack.c.h.b16 %v778
        %v1397 = vunpack.c.l.b16 %v779
        %v1398 = vunpack.c.h.b16 %v779
        %v1399 = vunpack.c.l.b16 %v780
        %v1400 = vunpack.c.h.b16 %v780
        %v1401 = vunpack.c.l.b16 %v781
        %v1402 = vunpack.c.l.b16 %v782
        %v1403 = vunpack.c.h.b16 %v782
        %v1404 = vunpack.c.l.b16 %v783
        %v1405 = vunpack.c.h.b16 %v783
        %v1406 = vunpack.c.l.b16 %v784
        %v1407 = vunpack.c.h.b16 %v784
        %v1408 = vunpack.c.l.b16 %v785
        %v1409 = vunpack.c.h.b16 %v785
        %v1410 = vunpack.c.l.b16 %v786
        %v1411 = vunpack.c.l.b16 %v787
        %v1412 = vunpack.c.h.b16 %v787
        %v1413 = vunpack.c.l.b16 %v788
        %v1414 = vunpack.c.h.b16 %v788
        %v1415 = vunpack.c.l.b16 %v789
        %v1416 = vunpack.c.h.b16 %v789
        %v1417 = vunpack.c.l.b16 %v790
        %v1418 = vunpack.c.h.b16 %v790
        %v1419 = vunpack.c.l.b16 %v791
        %v1420 = vunpack.c.l.b16 %v792
        %v1421 = vunpack.c.h.b16 %v792
        %v1422 = vunpack.c.l.b16 %v793
        %v1423 = vunpack.c.h.b16 %v793
        %v1424 = vunpack.c.l.b16 %v794
        %v1425 = vunpack.c.h.b16 %v794
        %v1426 = vunpack.c.l.b16 %v795
        %v1427 = vunpack.c.h.b16 %v795
        %v1428 = vunpack.c.l.b16 %v796
        %v1429 = vunpack.c.l.b16 %v797
        %v1430 = vunpack.c.h.b16 %v797
        %v1431 = vunpack.c.l.b16 %v798
        %v1432 = vunpack.c.h.b16 %v798
        %v1433 = vunpack.c.l.b16 %v799
        %v1434 = vunpack.c.h.b16 %v799
        %v1435 = vunpack.c.l.b16 %v800
        %v1436 = vunpack.c.h.b16 %v800
        %v1437 = vunpack.c.l.b16 %v801
        %v1438 = vunpack.c.l.b16 %v802
        %v1439 = vunpack.c.h.b16 %v802
        %v1440 = vunpack.c.l.b16 %v803
        %v1441 = vunpack.c.h.b16 %v803
        %v1442 = vunpack.c.l.b16 %v804
        %v1443 = vunpack.c.h.b16 %v804
        %v1444 = vunpack.c.l.b16 %v805
        %v1445 = vunpack.c.h.b16 %v805
        %v1446 = vunpack.c.l.b16 %v806
        %v1447 = vunpack.c.l.b16 %v807
        %v1448 = vunpack.c.h.b16 %v807
        %v1449 = vunpack.c.l.b16 %v808
        %v1450 = vunpack.c.h.b16 %v808
        %v1451 = vunpack.c.l.b16 %v809
        %v1452 = vunpack.c.h.b16 %v809
        %v1453 = vunpack.c.l.b16 %v810
        %v1454 = vunpack.c.h.b16 %v810
        %v1455 = vunpack.c.l.b16 %v811
        %v1456 = vunpack.c.l.b16 %v812
        %v1457 = vunpack.c.h.b16 %v812
        %v1458 = vunpack.c.l.b16 %v813
        %v1459 = vunpack.c.h.b16 %v813
        %v1460 = vunpack.c.l.b16 %v814
        %v1461 = vunpack.c.h.b16 %v814
        %v1462 = vunpack.c.l.b16 %v815
        %v1463 = vunpack.c.h.b16 %v815
        %v1464 = vunpack.c.l.b16 %v816
        %v1465 = vunpack.c.l.b16 %v817
        %v1466 = vunpack.c.h.b16 %v817
        %v1467 = vunpack.c.l.b16 %v818
        %v1468 = vunpack.c.h.b16 %v818
        %v1469 = vunpack.c.l.b16 %v819
        %v1470 = vunpack.c.h.b16 %v819
        %v1471 = vunpack.c.l.b16 %v820
        %v1472 = vunpack.c.h.b16 %v820
        %v1473 = vunpack.c.l.b16 %v821
        %v1474 = vunpack.c.l.b16 %v822
        %v1475 = vunpack.c.h.b16 %v822
        %v1476 = vunpack.c.l.b16 %v823
        %v1477 = vunpack.c.h.b16 %v823
        %v1478 = vunpack.c.l.b16 %v824
        %v1479 = vunpack.c.h.b16 %v824
        %v1480 = vunpack.c.l.b16 %v825
        %v1481 = vunpack.c.h.b16 %v825
        %v1482 = vunpack.c.l.b16 %v826
        %v1483 = vunpack.c.l.b16 %v827
        %v1484 = vunpack.c.h.b16 %v827
        %v1485 = vunpack.c.l.b16 %v828
        %v1486 = vunpack.c.h.b16 %v828
        %v1487 = vunpack.c.l.b16 %v829
        %v1488 = vunpack.c.h.b16 %v829
        %v1489 = vunpack.c.l.b16 %v830
        %v1490 = vunpack.c.h.b16 %v830
        %v1491 = vunpack.c.l.b16 %v831
        %v1492 = vunpack.c.l.b16 %v832
        %v1493 = vunpack.c.h.b16 %v832
        %v1494 = vunpack.c.l.b16 %v833
        %v1495 = vunpack.c.h.b16 %v833
        %v1496 = vunpack.c.l.b16 %v834
        %v1497 = vunpack.c.h.b16 %v834
        %v1498 = vunpack.c.l.b16 %v835
        %v1499 = vunpack.c.h.b16 %v835
        %v1500 = vunpack.c.l.b16 %v836
        %v1501 = vunpack.c.l.b16 %v837
        %v1502 = vunpack.c.h.b16 %v837
        %v1503 = vunpack.c.l.b16 %v838
        %v1504 = vunpack.c.h.b16 %v838
        %v1505 = vunpack.c.l.b16 %v839
        %v1506 = vunpack.c.h.b16 %v839
        %v1507 = vunpack.c.l.b16 %v840
        %v1508 = vunpack.c.h.b16 %v840
        %v1509 = vunpack.c.l.b16 %v841
        %v1510 = vunpack.c.l.b16 %v842
        %v1511 = vunpack.c.h.b16 %v842
        %v1512 = vunpack.c.l.b16 %v843
        %v1513 = vunpack.c.h.b16 %v843
        %v1514 = vunpack.c.l.b16 %v844
        %v1515 = vunpack.c.h.b16 %v844
        %v1516 = vunpack.c.l.b16 %v845
        %v1517 = vunpack.c.h.b16 %v845
        %v1518 = vunpack.c.l.b16 %v846
        %v1519 = vpack.c.b16 %v1096, %v1087
        %v1520 = vpack.c.b16 %v1097, %v1088
        %v1521 = vpack.c.b16 %v1098, %v1089
        %v1522 = vpack.c.b16 %v1099, %v1090
        %v1523 = vpack.c.b16 %v1100, %v1091
        %v1524 = vpack.c.b16 %v1101, %v1092
        %v1525 = vpack.c.b16 %v1102, %v1093
        %v1526 = vpack.c.b16 %v1103, %v1094
        %v1527 = vpack.c.b16 %v1104, %v1095
        %v1528 = vpack.c.b16 %v1114, %v1105
        %v1529 = vpack.c.b16 %v1115, %v1106
        %v1530 = vpack.c.b16 %v1116, %v1107
        %v1531 = vpack.c.b16 %v1117, %v1108
        %v1532 = vpack.c.b16 %v1118, %v1109
        %v1533 = vpack.c.b16 %v1119, %v1110
        %v1534 = vpack.c.b16 %v1120, %v1111
        %v1535 = vpack.c.b16 %v1121, %v1112
        %v1536 = vpack.c.b16 %v1122, %v1113
        %v1537 = vpack.c.b16 %v1132, %v1123
        %v1538 = vpack.c.b16 %v1133, %v1124
        %v1539 = vpack.c.b16 %v1134, %v1125
        %v1540 = vpack.c.b16 %v1135, %v1126
        %v1541 = vpack.c.b16 %v1136, %v1127
        %v1542 = vpack.c.b16 %v1137, %v1128
        %v1543 = vpack.c.b16 %v1138, %v1129
        %v1544 = vpack.c.b16 %v1139, %v1130
        %v1545 = vpack.c.b16 %v1140, %v1131
        %v1546 = vpack.c.b16 %v1150, %v1141
        %v1547 = vpack.c.b16 %v1151, %v1142
        %v1548 = vpack.c.b16 %v1152, %v1143
        %v1549 = vpack.c.b16 %v1153, %v1144
        %v1550 = vpack.c.b16 %v1154, %v1145
        %v1551 = vpack.c.b16 %v1155, %v1146
        %v1552 = vpack.c.b16 %v1156, %v1147
        %v1553 = vpack.c.b16 %v1157, %v1148
        %v1554 = vpack.c.b16 %v1158, %v1149
        %v1555 = vpack.c.b16 %v1168, %v1159
        %v1556 = vpack.c.b16 %v1169, %v1160
        %v1557 = vpack.c.b16 %v1170, %v1161
        %v1558 = vpack.c.b16 %v1171, %v1162
        %v1559 = vpack.c.b16 %v1172, %v1163
        %v1560 = vpack.c.b16 %v1173, %v1164
        %v1561 = vpack.c.b16 %v1174, %v1165
        %v1562 = vpack.c.b16 %v1175, %v1166
        %v1563 = vpack.c.b16 %v1176, %v1167
        %v1564 = vpack.c.b16 %v1186, %v1177
        %v1565 = vpack.c.b16 %v1187, %v1178
        %v1566 = vpack.c.b16 %v1188, %v1179
        %v1567 = vpack.c.b16 %v1189, %v1180
        %v1568 = vpack.c.b16 %v1190, %v1181
        %v1569 = vpack.c.b16 %v1191, %v1182
        %v1570 = vpack.c.b16 %v1192, %v1183
        %v1571 = vpack.c.b16 %v1193, %v1184
        %v1572 = vpack.c.b16 %v1194, %v1185
        %v1573 = vpack.c.b16 %v1204, %v1195
        %v1574 = vpack.c.b16 %v1205, %v1196
        %v1575 = vpack.c.b16 %v1206, %v1197
        %v1576 = vpack.c.b16 %v1207, %v1198
        %v1577 = vpack.c.b16 %v1208, %v1199
        %v1578 = vpack.c.b16 %v1209, %v1200
        %v1579 = vpack.c.b16 %v1210, %v1201
        %v1580 = vpack.c.b16 %v1211, %v1202
        %v1581 = vpack.c.b16 %v1212, %v1203
        %v1582 = vpack.c.b16 %v1222, %v1213
        %v1583 = vpack.c.b16 %v1223, %v1214
        %v1584 = vpack.c.b16 %v1224, %v1215
        %v1585 = vpack.c.b16 %v1225, %v1216
        %v1586 = vpack.c.b16 %v1226, %v1217
        %v1587 = vpack.c.b16 %v1227, %v1218
        %v1588 = vpack.c.b16 %v1228, %v1219
        %v1589 = vpack.c.b16 %v1229, %v1220
        %v1590 = vpack.c.b16 %v1230, %v1221
        %v1591 = vpack.c.b16 %v1240, %v1231
        %v1592 = vpack.c.b16 %v1241, %v1232
        %v1593 = vpack.c.b16 %v1242, %v1233
        %v1594 = vpack.c.b16 %v1243, %v1234
        %v1595 = vpack.c.b16 %v1244, %v1235
        %v1596 = vpack.c.b16 %v1245, %v1236
        %v1597 = vpack.c.b16 %v1246, %v1237
        %v1598 = vpack.c.b16 %v1247, %v1238
        %v1599 = vpack.c.b16 %v1248, %v1239
        %v1600 = vpack.c.b16 %v1258, %v1249
        %v1601 = vpack.c.b16 %v1259, %v1250
        %v1602 = vpack.c.b16 %v1260, %v1251
        %v1603 = vpack.c.b16 %v1261, %v1252
        %v1604 = vpack.c.b16 %v1262, %v1253
        %v1605 = vpack.c.b16 %v1263, %v1254
        %v1606 = vpack.c.b16 %v1264, %v1255
        %v1607 = vpack.c.b16 %v1265, %v1256
        %v1608 = vpack.c.b16 %v1266, %v1257
        %v1609 = vpack.c.b16 %v1276, %v1267
        %v1610 = vpack.c.b16 %v1277, %v1268
        %v1611 = vpack.c.b16 %v1278, %v1269
        %v1612 = vpack.c.b16 %v1279, %v1270
        %v1613 = vpack.c.b16 %v1280, %v1271
        %v1614 = vpack.c.b16 %v1281, %v1272
        %v1615 = vpack.c.b16 %v1282, %v1273
        %v1616 = vpack.c.b16 %v1283, %v1274
        %v1617 = vpack.c.b16 %v1284, %v1275
        %v1618 = vpack.c.b16 %v1294, %v1285
        %v1619 = vpack.c.b16 %v1295, %v1286
        %v1620 = vpack.c.b16 %v1296, %v1287
        %v1621 = vpack.c.b16 %v1297, %v1288
        %v1622 = vpack.c.b16 %v1298, %v1289
        %v1623 = vpack.c.b16 %v1299, %v1290
        %v1624 = vpack.c.b16 %v1300, %v1291
        %v1625 = vpack.c.b16 %v1301, %v1292
        %v1626 = vpack.c.b16 %v1302, %v1293
        %v1627 = vpack.c.b16 %v1312, %v1303
        %v1628 = vpack.c.b16 %v1313, %v1304
        %v1629 = vpack.c.b16 %v1314, %v1305
        %v1630 = vpack.c.b16 %v1315, %v1306
        %v1631 = vpack.c.b16 %v1316, %v1307
        %v1632 = vpack.c.b16 %v1317, %v1308
        %v1633 = vpack.c.b16 %v1318, %v1309
        %v1634 = vpack.c.b16 %v1319, %v1310
        %v1635 = vpack.c.b16 %v1320, %v1311
        %v1636 = vpack.c.b16 %v1330, %v1321
        %v1637 = vpack.c.b16 %v1331, %v1322
        %v1638 = vpack.c.b16 %v1332, %v1323
        %v1639 = vpack.c.b16 %v1333, %v1324
        %v1640 = vpack.c.b16 %v1334, %v1325
        %v1641 = vpack.c.b16 %v1335, %v1326
        %v1642 = vpack.c.b16 %v1336, %v1327
        %v1643 = vpack.c.b16 %v1337, %v1328
        %v1644 = vpack.c.b16 %v1338, %v1329
        %v1645 = vpack.c.b16 %v1348, %v1339
        %v1646 = vpack.c.b16 %v1349, %v1340
        %v1647 = vpack.c.b16 %v1350, %v1341
        %v1648 = vpack.c.b16 %v1351, %v1342
        %v1649 = vpack.c.b16 %v1352, %v1343
        %v1650 = vpack.c.b16 %v1353, %v1344
        %v1651 = vpack.c.b16 %v1354, %v1345
        %v1652 = vpack.c.b16 %v1355, %v1346
        %v1653 = vpack.c.b16 %v1356, %v1347
        %v1654 = vpack.c.b16 %v1366, %v1357
        %v1655 = vpack.c.b16 %v1367, %v1358
        %v1656 = vpack.c.b16 %v1368, %v1359
        %v1657 = vpack.c.b16 %v1369, %v1360
        %v1658 = vpack.c.b16 %v1370, %v1361
        %v1659 = vpack.c.b16 %v1371, %v1362
        %v1660 = vpack.c.b16 %v1372, %v1363
        %v1661 = vpack.c.b16 %v1373, %v1364
        %v1662 = vpack.c.b16 %v1374, %v1365
        %v1663 = vpack.c.b16 %v1384, %v1375
        %v1664 = vpack.c.b16 %v1385, %v1376
        %v1665 = vpack.c.b16 %v1386, %v1377
        %v1666 = vpack.c.b16 %v1387, %v1378
        %v1667 = vpack.c.b16 %v1388, %v1379
        %v1668 = vpack.c.b16 %v1389, %v1380
        %v1669 = vpack.c.b16 %v1390, %v1381
        %v1670 = vpack.c.b16 %v1391, %v1382
        %v1671 = vpack.c.b16 %v1392, %v1383
        %v1672 = vpack.c.b16 %v1402, %v1393
        %v1673 = vpack.c.b16 %v1403, %v1394
        %v1674 = vpack.c.b16 %v1404, %v1395
        %v1675 = vpack.c.b16 %v1405, %v1396
        %v1676 = vpack.c.b16 %v1406, %v1397
        %v1677 = vpack.c.b16 %v1407, %v1398
        %v1678 = vpack.c.b16 %v1408, %v1399
        %v1679 = vpack.c.b16 %v1409, %v1400
        %v1680 = vpack.c.b16 %v1410, %v1401
        %v1681 = vpack.c.b16 %v1420, %v1411
        %v1682 = vpack.c.b16 %v1421, %v1412
        %v1683 = vpack.c.b16 %v1422, %v1413
        %v1684 = vpack.c.b16 %v1423, %v1414
        %v1685 = vpack.c.b16 %v1424, %v1415
        %v1686 = vpack.c.b16 %v1425, %v1416
        %v1687 = vpack.c.b16 %v1426, %v1417
        %v1688 = vpack.c.b16 %v1427, %v1418
        %v1689 = vpack.c.b16 %v1428, %v1419
        %v1690 = vpack.c.b16 %v1438, %v1429
        %v1691 = vpack.c.b16 %v1439, %v1430
        %v1692 = vpack.c.b16 %v1440, %v1431
        %v1693 = vpack.c.b16 %v1441, %v1432
        %v1694 = vpack.c.b16 %v1442, %v1433
        %v1695 = vpack.c.b16 %v1443, %v1434
        %v1696 = vpack.c.b16 %v1444, %v1435
        %v1697 = vpack.c.b16 %v1445, %v1436
        %v1698 = vpack.c.b16 %v1446, %v1437
        %v1699 = vpack.c.b16 %v1456, %v1447
        %v1700 = vpack.c.b16 %v1457, %v1448
        %v1701 = vpack.c.b16 %v1458, %v1449
        %v1702 = vpack.c.b16 %v1459, %v1450
        %v1703 = vpack.c.b16 %v1460, %v1451
        %v1704 = vpack.c.b16 %v1461, %v1452
        %v1705 = vpack.c.b16 %v1462, %v1453
        %v1706 = vpack.c.b16 %v1463, %v1454
        %v1707 = vpack.c.b16 %v1464, %v1455
        %v1708 = vpack.c.b16 %v1474, %v1465
        %v1709 = vpack.c.b16 %v1475, %v1466
        %v1710 = vpack.c.b16 %v1476, %v1467
        %v1711 = vpack.c.b16 %v1477, %v1468
        %v1712 = vpack.c.b16 %v1478, %v1469
        %v1713 = vpack.c.b16 %v1479, %v1470
        %v1714 = vpack.c.b16 %v1480, %v1471
        %v1715 = vpack.c.b16 %v1481, %v1472
        %v1716 = vpack.c.b16 %v1482, %v1473
        %v1717 = vpack.c.b16 %v1492, %v1483
        %v1718 = vpack.c.b16 %v1493, %v1484
        %v1719 = vpack.c.b16 %v1494, %v1485
        %v1720 = vpack.c.b16 %v1495, %v1486
        %v1721 = vpack.c.b16 %v1496, %v1487
        %v1722 = vpack.c.b16 %v1497, %v1488
        %v1723 = vpack.c.b16 %v1498, %v1489
        %v1724 = vpack.c.b16 %v1499, %v1490
        %v1725 = vpack.c.b16 %v1500, %v1491
        %v1726 = vpack.c.b16 %v1510, %v1501
        %v1727 = vpack.c.b16 %v1511, %v1502
        %v1728 = vpack.c.b16 %v1512, %v1503
        %v1729 = vpack.c.b16 %v1513, %v1504
        %v1730 = vpack.c.b16 %v1514, %v1505
        %v1731 = vpack.c.b16 %v1515, %v1506
        %v1732 = vpack.c.b16 %v1516, %v1507
        %v1733 = vpack.c.b16 %v1517, %v1508
        %v1734 = vpack.c.b16 %v1518, %v1509
        %1951 = vmatprep.subr.bf16.mxu0 %v1520
        %1952 = vmatpush1.bf16.msra.mxu0 %v1519
        %1953 = vmatprep.subr.bf16.mxu0 %v1529
        %1954 = vmatpush1.bf16.msra.mxu0 %v1528
        %1955 = vmatprep.subr.bf16.mxu0 %v1538
        %1956 = vmatpush1.bf16.msra.mxu0 %v1537
        %1957 = vmatprep.subr.bf16.mxu0 %v1547
        %1958 = vmatpush1.bf16.msra.mxu0 %v1546
        %1959 = vmatprep.subr.bf16.mxu0 %v1556
        %1960 = vmatpush1.bf16.msra.mxu0 %v1555
        %1961 = vmatprep.subr.bf16.mxu0 %v1565
        %1962 = vmatpush1.bf16.msra.mxu0 %v1564
        %1963 = vmatprep.subr.bf16.mxu0 %v1574
        %1964 = vmatpush1.bf16.msra.mxu0 %v1573
        %1965 = vmatprep.subr.bf16.mxu0 %v1583
        %1966 = vmatpush1.bf16.msra.mxu0 %v1582
        %1967 = vmatprep.subr.bf16.mxu0 %v1592
        %1968 = vmatpush1.bf16.msra.mxu0 %v1591
        %1969 = vmatprep.subr.bf16.mxu0 %v1601
        %1970 = vmatpush1.bf16.msra.mxu0 %v1600
        %1971 = vmatprep.subr.bf16.mxu0 %v1610
        %1972 = vmatpush1.bf16.msra.mxu0 %v1609
        %1973 = vmatprep.subr.bf16.mxu0 %v1619
        %1974 = vmatpush1.bf16.msra.mxu0 %v1618
        %1975 = vmatprep.subr.bf16.mxu0 %v1628
        %1976 = vmatpush1.bf16.msra.mxu0 %v1627
        %1977 = vmatprep.subr.bf16.mxu0 %v1637
        %1978 = vmatpush1.bf16.msra.mxu0 %v1636
        %1979 = vmatprep.subr.bf16.mxu0 %v1646
        %1980 = vmatpush1.bf16.msra.mxu0 %v1645
        %1981 = vmatprep.subr.bf16.mxu0 %v1655
        %1982 = vmatpush1.bf16.msra.mxu0 %v1654
        %1983 = vmatprep.mubr.bf16.mxu0 %v605
        %1984 = vmatmul.mubr.bf16.gmra.mrb[0].mxu0 %v604
        %v1985 = vpop.f32.mrb[0].mxu0
        %v1986 = vadd.f32 0.0, %v1985
        %v1987 = vpop.f32.mrb[0].mxu0
        %v1988 = vadd.f32 0.0, %v1987
        %v1989 = vpop.f32.mrb[0].mxu0
        %v1990 = vpop.f32.mrb[0].mxu0
        %1991 = vdwg.mxu0
        %1992 = vmatprep.subr.bf16.mxu0 %v1664
        %1993 = vmatpush1.bf16.msra.mxu0 %v1663
        %1994 = vmatprep.subr.bf16.mxu0 %v1673
        %1995 = vmatpush1.bf16.msra.mxu0 %v1672
        %1996 = vmatprep.subr.bf16.mxu0 %v1682
        %1997 = vmatpush1.bf16.msra.mxu0 %v1681
        %1998 = vmatprep.subr.bf16.mxu0 %v1691
        %1999 = vmatpush1.bf16.msra.mxu0 %v1690
        %2000 = vmatprep.subr.bf16.mxu0 %v1700
        %2001 = vmatpush1.bf16.msra.mxu0 %v1699
        %2002 = vmatprep.subr.bf16.mxu0 %v1709
        %2003 = vmatpush1.bf16.msra.mxu0 %v1708
        %2004 = vmatprep.subr.bf16.mxu0 %v1718
        %2005 = vmatpush1.bf16.msra.mxu0 %v1717
        %2006 = vmatprep.subr.bf16.mxu0 %v1727
        %2007 = vmatpush1.bf16.msra.mxu0 %v1726
        %2008 = vmatprep.subr.bf16.mxu0 0
        %2009 = vmatpush1.bf16.msra.mxu0 0
        %2010 = vmatprep.subr.bf16.mxu0 0
        %2011 = vmatpush1.bf16.msra.mxu0 0
        %2012 = vmatprep.subr.bf16.mxu0 0
        %2013 = vmatpush1.bf16.msra.mxu0 0
        %2014 = vmatprep.subr.bf16.mxu0 0
        %2015 = vmatpush1.bf16.msra.mxu0 0
        %2016 = vmatprep.subr.bf16.mxu0 0
        %2017 = vmatpush1.bf16.msra.mxu0 0
        %2018 = vmatprep.subr.bf16.mxu0 0
        %2019 = vmatpush1.bf16.msra.mxu0 0
        %2020 = vmatprep.subr.bf16.mxu0 0
        %2021 = vmatpush1.bf16.msra.mxu0 0
        %2022 = vmatprep.subr.bf16.mxu0 0
        %2023 = vmatpush1.bf16.msra.mxu0 0
        %2024 = vmatprep.mubr.bf16.mxu0 0
        %2025 = vmatmul.mubr.bf16.gmra.mrb[0].mxu0 %v606
        %v2026 = vpop.f32.mrb[0].mxu0
        %v2027 = vadd.f32 %v1986, %v2026
        %v2028 = vpop.f32.mrb[0].mxu0
        %v2029 = vadd.f32 %v1988, %v2028
        %v2030 = vpop.f32.mrb[0].mxu0
        %v2031 = vpop.f32.mrb[0].mxu0
        %2032 = vdwg.mxu0
        %2033 = vmatprep.subr.bf16.mxu0 %v1522
        %2034 = vmatpush1.bf16.msra.mxu0 %v1521
        %2035 = vmatprep.subr.bf16.mxu0 %v1531
        %2036 = vmatpush1.bf16.msra.mxu0 %v1530
        %2037 = vmatprep.subr.bf16.mxu0 %v1540
        %2038 = vmatpush1.bf16.msra.mxu0 %v1539
        %2039 = vmatprep.subr.bf16.mxu0 %v1549
        %2040 = vmatpush1.bf16.msra.mxu0 %v1548
        %2041 = vmatprep.subr.bf16.mxu0 %v1558
        %2042 = vmatpush1.bf16.msra.mxu0 %v1557
        %2043 = vmatprep.subr.bf16.mxu0 %v1567
        %2044 = vmatpush1.bf16.msra.mxu0 %v1566
        %2045 = vmatprep.subr.bf16.mxu0 %v1576
        %2046 = vmatpush1.bf16.msra.mxu0 %v1575
        %2047 = vmatprep.subr.bf16.mxu0 %v1585
        %2048 = vmatpush1.bf16.msra.mxu0 %v1584
        %2049 = vmatprep.subr.bf16.mxu0 %v1594
        %2050 = vmatpush1.bf16.msra.mxu0 %v1593
        %2051 = vmatprep.subr.bf16.mxu0 %v1603
        %2052 = vmatpush1.bf16.msra.mxu0 %v1602
        %2053 = vmatprep.subr.bf16.mxu0 %v1612
        %2054 = vmatpush1.bf16.msra.mxu0 %v1611
        %2055 = vmatprep.subr.bf16.mxu0 %v1621
        %2056 = vmatpush1.bf16.msra.mxu0 %v1620
        %2057 = vmatprep.subr.bf16.mxu0 %v1630
        %2058 = vmatpush1.bf16.msra.mxu0 %v1629
        %2059 = vmatprep.subr.bf16.mxu0 %v1639
        %2060 = vmatpush1.bf16.msra.mxu0 %v1638
        %2061 = vmatprep.subr.bf16.mxu0 %v1648
        %2062 = vmatpush1.bf16.msra.mxu0 %v1647
        %2063 = vmatprep.subr.bf16.mxu0 %v1657
        %2064 = vmatpush1.bf16.msra.mxu0 %v1656
        %2065 = vmatprep.mubr.bf16.mxu0 %v605
        %2066 = vmatmul.mubr.bf16.gmra.mrb[0].mxu0 %v604
        %v2067 = vpop.f32.mrb[0].mxu0
        %v2068 = vadd.f32 0.0, %v2067
        %v2069 = vpop.f32.mrb[0].mxu0
        %v2070 = vadd.f32 0.0, %v2069
        %v2071 = vpop.f32.mrb[0].mxu0
        %v2072 = vpop.f32.mrb[0].mxu0
        %2073 = vdwg.mxu0
        %2074 = vmatprep.subr.bf16.mxu0 %v1666
        %2075 = vmatpush1.bf16.msra.mxu0 %v1665
        %2076 = vmatprep.subr.bf16.mxu0 %v1675
        %2077 = vmatpush1.bf16.msra.mxu0 %v1674
        %2078 = vmatprep.subr.bf16.mxu0 %v1684
        %2079 = vmatpush1.bf16.msra.mxu0 %v1683
        %2080 = vmatprep.subr.bf16.mxu0 %v1693
        %2081 = vmatpush1.bf16.msra.mxu0 %v1692
        %2082 = vmatprep.subr.bf16.mxu0 %v1702
        %2083 = vmatpush1.bf16.msra.mxu0 %v1701
        %2084 = vmatprep.subr.bf16.mxu0 %v1711
        %2085 = vmatpush1.bf16.msra.mxu0 %v1710
        %2086 = vmatprep.subr.bf16.mxu0 %v1720
        %2087 = vmatpush1.bf16.msra.mxu0 %v1719
        %2088 = vmatprep.subr.bf16.mxu0 %v1729
        %2089 = vmatpush1.bf16.msra.mxu0 %v1728
        %2090 = vmatprep.subr.bf16.mxu0 0
        %2091 = vmatpush1.bf16.msra.mxu0 0
        %2092 = vmatprep.subr.bf16.mxu0 0
        %2093 = vmatpush1.bf16.msra.mxu0 0
        %2094 = vmatprep.subr.bf16.mxu0 0
        %2095 = vmatpush1.bf16.msra.mxu0 0
        %2096 = vmatprep.subr.bf16.mxu0 0
        %2097 = vmatpush1.bf16.msra.mxu0 0
        %2098 = vmatprep.subr.bf16.mxu0 0
        %2099 = vmatpush1.bf16.msra.mxu0 0
        %2100 = vmatprep.subr.bf16.mxu0 0
        %2101 = vmatpush1.bf16.msra.mxu0 0
        %2102 = vmatprep.subr.bf16.mxu0 0
        %2103 = vmatpush1.bf16.msra.mxu0 0
        %2104 = vmatprep.subr.bf16.mxu0 0
        %2105 = vmatpush1.bf16.msra.mxu0 0
        %2106 = vmatprep.mubr.bf16.mxu0 0
        %2107 = vmatmul.mubr.bf16.gmra.mrb[0].mxu0 %v606
        %v2108 = vpop.f32.mrb[0].mxu0
        %v2109 = vadd.f32 %v2068, %v2108
        %v2110 = vpop.f32.mrb[0].mxu0
        %v2111 = vadd.f32 %v2070, %v2110
        %v2112 = vpop.f32.mrb[0].mxu0
        %v2113 = vpop.f32.mrb[0].mxu0
        %2114 = vdwg.mxu0
        %2115 = vmatprep.subr.bf16.mxu0 %v1524
        %2116 = vmatpush1.bf16.msra.mxu0 %v1523
        %2117 = vmatprep.subr.bf16.mxu0 %v1533
        %2118 = vmatpush1.bf16.msra.mxu0 %v1532
        %2119 = vmatprep.subr.bf16.mxu0 %v1542
        %2120 = vmatpush1.bf16.msra.mxu0 %v1541
        %2121 = vmatprep.subr.bf16.mxu0 %v1551
        %2122 = vmatpush1.bf16.msra.mxu0 %v1550
        %2123 = vmatprep.subr.bf16.mxu0 %v1560
        %2124 = vmatpush1.bf16.msra.mxu0 %v1559
        %2125 = vmatprep.subr.bf16.mxu0 %v1569
        %2126 = vmatpush1.bf16.msra.mxu0 %v1568
        %2127 = vmatprep.subr.bf16.mxu0 %v1578
        %2128 = vmatpush1.bf16.msra.mxu0 %v1577
        %2129 = vmatprep.subr.bf16.mxu0 %v1587
        %2130 = vmatpush1.bf16.msra.mxu0 %v1586
        %2131 = vmatprep.subr.bf16.mxu0 %v1596
        %2132 = vmatpush1.bf16.msra.mxu0 %v1595
        %2133 = vmatprep.subr.bf16.mxu0 %v1605
        %2134 = vmatpush1.bf16.msra.mxu0 %v1604
        %2135 = vmatprep.subr.bf16.mxu0 %v1614
        %2136 = vmatpush1.bf16.msra.mxu0 %v1613
        %2137 = vmatprep.subr.bf16.mxu0 %v1623
        %2138 = vmatpush1.bf16.msra.mxu0 %v1622
        %2139 = vmatprep.subr.bf16.mxu0 %v1632
        %2140 = vmatpush1.bf16.msra.mxu0 %v1631
        %2141 = vmatprep.subr.bf16.mxu0 %v1641
        %2142 = vmatpush1.bf16.msra.mxu0 %v1640
        %2143 = vmatprep.subr.bf16.mxu0 %v1650
        %2144 = vmatpush1.bf16.msra.mxu0 %v1649
        %2145 = vmatprep.subr.bf16.mxu0 %v1659
        %2146 = vmatpush1.bf16.msra.mxu0 %v1658
        %2147 = vmatprep.mubr.bf16.mxu0 %v605
        %2148 = vmatmul.mubr.bf16.gmra.mrb[0].mxu0 %v604
        %v2149 = vpop.f32.mrb[0].mxu0
        %v2150 = vadd.f32 0.0, %v2149
        %v2151 = vpop.f32.mrb[0].mxu0
        %v2152 = vadd.f32 0.0, %v2151
        %v2153 = vpop.f32.mrb[0].mxu0
        %v2154 = vpop.f32.mrb[0].mxu0
        %2155 = vdwg.mxu0
        %2156 = vmatprep.subr.bf16.mxu0 %v1668
        %2157 = vmatpush1.bf16.msra.mxu0 %v1667
        %2158 = vmatprep.subr.bf16.mxu0 %v1677
        %2159 = vmatpush1.bf16.msra.mxu0 %v1676
        %2160 = vmatprep.subr.bf16.mxu0 %v1686
        %2161 = vmatpush1.bf16.msra.mxu0 %v1685
        %2162 = vmatprep.subr.bf16.mxu0 %v1695
        %2163 = vmatpush1.bf16.msra.mxu0 %v1694
        %2164 = vmatprep.subr.bf16.mxu0 %v1704
        %2165 = vmatpush1.bf16.msra.mxu0 %v1703
        %2166 = vmatprep.subr.bf16.mxu0 %v1713
        %2167 = vmatpush1.bf16.msra.mxu0 %v1712
        %2168 = vmatprep.subr.bf16.mxu0 %v1722
        %2169 = vmatpush1.bf16.msra.mxu0 %v1721
        %2170 = vmatprep.subr.bf16.mxu0 %v1731
        %2171 = vmatpush1.bf16.msra.mxu0 %v1730
        %2172 = vmatprep.subr.bf16.mxu0 0
        %2173 = vmatpush1.bf16.msra.mxu0 0
        %2174 = vmatprep.subr.bf16.mxu0 0
        %2175 = vmatpush1.bf16.msra.mxu0 0
        %2176 = vmatprep.subr.bf16.mxu0 0
        %2177 = vmatpush1.bf16.msra.mxu0 0
        %2178 = vmatprep.subr.bf16.mxu0 0
        %2179 = vmatpush1.bf16.msra.mxu0 0
        %2180 = vmatprep.subr.bf16.mxu0 0
        %2181 = vmatpush1.bf16.msra.mxu0 0
        %2182 = vmatprep.subr.bf16.mxu0 0
        %2183 = vmatpush1.bf16.msra.mxu0 0
        %2184 = vmatprep.subr.bf16.mxu0 0
        %2185 = vmatpush1.bf16.msra.mxu0 0
        %2186 = vmatprep.subr.bf16.mxu0 0
        %2187 = vmatpush1.bf16.msra.mxu0 0
        %2188 = vmatprep.mubr.bf16.mxu0 0
        %2189 = vmatmul.mubr.bf16.gmra.mrb[0].mxu0 %v606
        %v2190 = vpop.f32.mrb[0].mxu0
        %v2191 = vadd.f32 %v2150, %v2190
        %v2192 = vpop.f32.mrb[0].mxu0
        %v2193 = vadd.f32 %v2152, %v2192
        %v2194 = vpop.f32.mrb[0].mxu0
        %v2195 = vpop.f32.mrb[0].mxu0
        %2196 = vdwg.mxu0
        %2197 = vmatprep.subr.bf16.mxu0 %v1526
        %2198 = vmatpush1.bf16.msra.mxu0 %v1525
        %2199 = vmatprep.subr.bf16.mxu0 %v1535
        %2200 = vmatpush1.bf16.msra.mxu0 %v1534
        %2201 = vmatprep.subr.bf16.mxu0 %v1544
        %2202 = vmatpush1.bf16.msra.mxu0 %v1543
        %2203 = vmatprep.subr.bf16.mxu0 %v1553
        %2204 = vmatpush1.bf16.msra.mxu0 %v1552
        %2205 = vmatprep.subr.bf16.mxu0 %v1562
        %2206 = vmatpush1.bf16.msra.mxu0 %v1561
        %2207 = vmatprep.subr.bf16.mxu0 %v1571
        %2208 = vmatpush1.bf16.msra.mxu0 %v1570
        %2209 = vmatprep.subr.bf16.mxu0 %v1580
        %2210 = vmatpush1.bf16.msra.mxu0 %v1579
        %2211 = vmatprep.subr.bf16.mxu0 %v1589
        %2212 = vmatpush1.bf16.msra.mxu0 %v1588
        %2213 = vmatprep.subr.bf16.mxu0 %v1598
        %2214 = vmatpush1.bf16.msra.mxu0 %v1597
        %2215 = vmatprep.subr.bf16.mxu0 %v1607
        %2216 = vmatpush1.bf16.msra.mxu0 %v1606
        %2217 = vmatprep.subr.bf16.mxu0 %v1616
        %2218 = vmatpush1.bf16.msra.mxu0 %v1615
        %2219 = vmatprep.subr.bf16.mxu0 %v1625
        %2220 = vmatpush1.bf16.msra.mxu0 %v1624
        %2221 = vmatprep.subr.bf16.mxu0 %v1634
        %2222 = vmatpush1.bf16.msra.mxu0 %v1633
        %2223 = vmatprep.subr.bf16.mxu0 %v1643
        %2224 = vmatpush1.bf16.msra.mxu0 %v1642
        %2225 = vmatprep.subr.bf16.mxu0 %v1652
        %2226 = vmatpush1.bf16.msra.mxu0 %v1651
        %2227 = vmatprep.subr.bf16.mxu0 %v1661
        %2228 = vmatpush1.bf16.msra.mxu0 %v1660
        %2229 = vmatprep.mubr.bf16.mxu0 %v605
        %2230 = vmatmul.mubr.bf16.gmra.mrb[0].mxu0 %v604
        %v2231 = vpop.f32.mrb[0].mxu0
        %v2232 = vadd.f32 0.0, %v2231
        %v2233 = vpop.f32.mrb[0].mxu0
        %v2234 = vadd.f32 0.0, %v2233
        %v2235 = vpop.f32.mrb[0].mxu0
        %v2236 = vpop.f32.mrb[0].mxu0
        %2237 = vdwg.mxu0
        %2238 = vmatprep.subr.bf16.mxu0 %v1670
        %2239 = vmatpush1.bf16.msra.mxu0 %v1669
        %2240 = vmatprep.subr.bf16.mxu0 %v1679
        %2241 = vmatpush1.bf16.msra.mxu0 %v1678
        %2242 = vmatprep.subr.bf16.mxu0 %v1688
        %2243 = vmatpush1.bf16.msra.mxu0 %v1687
        %2244 = vmatprep.subr.bf16.mxu0 %v1697
        %2245 = vmatpush1.bf16.msra.mxu0 %v1696
        %2246 = vmatprep.subr.bf16.mxu0 %v1706
        %2247 = vmatpush1.bf16.msra.mxu0 %v1705
        %2248 = vmatprep.subr.bf16.mxu0 %v1715
        %2249 = vmatpush1.bf16.msra.mxu0 %v1714
        %2250 = vmatprep.subr.bf16.mxu0 %v1724
        %2251 = vmatpush1.bf16.msra.mxu0 %v1723
        %2252 = vmatprep.subr.bf16.mxu0 %v1733
        %2253 = vmatpush1.bf16.msra.mxu0 %v1732
        %2254 = vmatprep.subr.bf16.mxu0 0
        %2255 = vmatpush1.bf16.msra.mxu0 0
        %2256 = vmatprep.subr.bf16.mxu0 0
        %2257 = vmatpush1.bf16.msra.mxu0 0
        %2258 = vmatprep.subr.bf16.mxu0 0
        %2259 = vmatpush1.bf16.msra.mxu0 0
        %2260 = vmatprep.subr.bf16.mxu0 0
        %2261 = vmatpush1.bf16.msra.mxu0 0
        %2262 = vmatprep.subr.bf16.mxu0 0
        %2263 = vmatpush1.bf16.msra.mxu0 0
        %2264 = vmatprep.subr.bf16.mxu0 0
        %2265 = vmatpush1.bf16.msra.mxu0 0
        %2266 = vmatprep.subr.bf16.mxu0 0
        %2267 = vmatpush1.bf16.msra.mxu0 0
        %2268 = vmatprep.subr.bf16.mxu0 0
        %2269 = vmatpush1.bf16.msra.mxu0 0
        %2270 = vmatprep.mubr.bf16.mxu0 0
        %2271 = vmatmul.mubr.bf16.gmra.mrb[0].mxu0 %v606
        %v2272 = vpop.f32.mrb[0].mxu0
        %v2273 = vadd.f32 %v2232, %v2272
        %v2274 = vpop.f32.mrb[0].mxu0
        %v2275 = vadd.f32 %v2234, %v2274
        %v2276 = vpop.f32.mrb[0].mxu0
        %v2277 = vpop.f32.mrb[0].mxu0
        %2278 = vdwg.mxu0
        %2279 = vmatprep.subr.bf16.mxu0 0
        %2280 = vmatpush1.bf16.msra.mxu0 %v1527
        %2281 = vmatprep.subr.bf16.mxu0 0
        %2282 = vmatpush1.bf16.msra.mxu0 %v1536
        %2283 = vmatprep.subr.bf16.mxu0 0
        %2284 = vmatpush1.bf16.msra.mxu0 %v1545
        %2285 = vmatprep.subr.bf16.mxu0 0
        %2286 = vmatpush1.bf16.msra.mxu0 %v1554
        %2287 = vmatprep.subr.bf16.mxu0 0
        %2288 = vmatpush1.bf16.msra.mxu0 %v1563
        %2289 = vmatprep.subr.bf16.mxu0 0
        %2290 = vmatpush1.bf16.msra.mxu0 %v1572
        %2291 = vmatprep.subr.bf16.mxu0 0
        %2292 = vmatpush1.bf16.msra.mxu0 %v1581
        %2293 = vmatprep.subr.bf16.mxu0 0
        %2294 = vmatpush1.bf16.msra.mxu0 %v1590
        %2295 = vmatprep.subr.bf16.mxu0 0
        %2296 = vmatpush1.bf16.msra.mxu0 %v1599
        %2297 = vmatprep.subr.bf16.mxu0 0
        %2298 = vmatpush1.bf16.msra.mxu0 %v1608
        %2299 = vmatprep.subr.bf16.mxu0 0
        %2300 = vmatpush1.bf16.msra.mxu0 %v1617
        %2301 = vmatprep.subr.bf16.mxu0 0
        %2302 = vmatpush1.bf16.msra.mxu0 %v1626
        %2303 = vmatprep.subr.bf16.mxu0 0
        %2304 = vmatpush1.bf16.msra.mxu0 %v1635
        %2305 = vmatprep.subr.bf16.mxu0 0
        %2306 = vmatpush1.bf16.msra.mxu0 %v1644
        %2307 = vmatprep.subr.bf16.mxu0 0
        %2308 = vmatpush1.bf16.msra.mxu0 %v1653
        %2309 = vmatprep.subr.bf16.mxu0 0
        %2310 = vmatpush1.bf16.msra.mxu0 %v1662
        %2311 = vmatprep.mubr.bf16.mxu0 %v605
        %2312 = vmatmul.mubr.bf16.gmra.mrb[0].mxu0 %v604
        %v2313 = vpop.f32.mrb[0].mxu0
        %v2314 = vadd.f32 0.0, %v2313
        %v2315 = vpop.f32.mrb[0].mxu0
        %v2316 = vpop.f32.mrb[0].mxu0
        %v2317 = vpop.f32.mrb[0].mxu0
        %2318 = vdwg.mxu0
        %2319 = vmatprep.subr.bf16.mxu0 0
        %2320 = vmatpush1.bf16.msra.mxu0 %v1671
        %2321 = vmatprep.subr.bf16.mxu0 0
        %2322 = vmatpush1.bf16.msra.mxu0 %v1680
        %2323 = vmatprep.subr.bf16.mxu0 0
        %2324 = vmatpush1.bf16.msra.mxu0 %v1689
        %2325 = vmatprep.subr.bf16.mxu0 0
        %2326 = vmatpush1.bf16.msra.mxu0 %v1698
        %2327 = vmatprep.subr.bf16.mxu0 0
        %2328 = vmatpush1.bf16.msra.mxu0 %v1707
        %2329 = vmatprep.subr.bf16.mxu0 0
        %2330 = vmatpush1.bf16.msra.mxu0 %v1716
        %2331 = vmatprep.subr.bf16.mxu0 0
        %2332 = vmatpush1.bf16.msra.mxu0 %v1725
        %2333 = vmatprep.subr.bf16.mxu0 0
        %2334 = vmatpush1.bf16.msra.mxu0 %v1734
        %2335 = vmatprep.subr.bf16.mxu0 0
        %2336 = vmatpush1.bf16.msra.mxu0 0
        %2337 = vmatprep.subr.bf16.mxu0 0
        %2338 = vmatpush1.bf16.msra.mxu0 0
        %2339 = vmatprep.subr.bf16.mxu0 0
        %2340 = vmatpush1.bf16.msra.mxu0 0
        %2341 = vmatprep.subr.bf16.mxu0 0
        %2342 = vmatpush1.bf16.msra.mxu0 0
        %2343 = vmatprep.subr.bf16.mxu0 0
        %2344 = vmatpush1.bf16.msra.mxu0 0
        %2345 = vmatprep.subr.bf16.mxu0 0
        %2346 = vmatpush1.bf16.msra.mxu0 0
        %2347 = vmatprep.subr.bf16.mxu0 0
        %2348 = vmatpush1.bf16.msra.mxu0 0
        %2349 = vmatprep.subr.bf16.mxu0 0
        %2350 = vmatpush1.bf16.msra.mxu0 0
        %2351 = vmatprep.mubr.bf16.mxu0 0
        %2352 = vmatmul.mubr.bf16.gmra.mrb[0].mxu0 %v606
        %v2353 = vpop.f32.mrb[0].mxu0
        %v2354 = vadd.f32 %v2314, %v2353
        %v2355 = vpop.f32.mrb[0].mxu0
        %v2356 = vpop.f32.mrb[0].mxu0
        %v2357 = vpop.f32.mrb[0].mxu0
        %2358 = vdwg.mxu0
        %v2359 = vld [vmem:[%s5] sm:$0x3]
        %v2360 = vld [vmem:[%s2] sm:$0xff]
        %v2361 = vld [vmem:[%s2 + $0x8] sm:$0xff]
        %v2362 = vld [vmem:[%s3] sm:$0xff]
        %v2363 = vld [vmem:[%s3 + $0x8] sm:$0xff]
        %2365 = vset.pattern.permute.xlu0 0
        %2366 = vperm.xlu0 %2365, %v2362
        %v2367 = vpop.permute.xlu0 %2366
        %2370 = vset.pattern.permute.xlu0 0
        %2371 = vperm.xlu0 %2370, %v2363
        %v2372 = vpop.permute.xlu0 %2371
        %vm2374 = vcmask 64512
        %v2376 = vsel %vm2374, %v2360, 0
        %v2379 = vsel %vm2374, %v2361, 0
        %2381 = vmatprep.subr.mxu0 %v2029
        %2382 = vmatpush1.msra.mxu0 %v2027
        %2383 = vmatprep.subr.mxu0 0.0
        %2384 = vmatpush1.msra.mxu0 0.0
        %2385 = vmatprep.subr.mxu0 0.0
        %2386 = vmatpush1.msra.mxu0 0.0
        %2387 = vmatprep.subr.mxu0 0.0
        %2388 = vmatpush1.msra.mxu0 0.0
        %2389 = vmatprep.subr.mxu0 0.0
        %2390 = vmatpush1.msra.mxu0 0.0
        %2391 = vmatprep.subr.mxu0 0.0
        %2392 = vmatpush1.msra.mxu0 0.0
        %2393 = vmatprep.subr.mxu0 0.0
        %2394 = vmatpush1.msra.mxu0 0.0
        %2395 = vmatprep.subr.mxu0 0.0
        %2396 = vmatpush1.msra.mxu0 0.0
        %2397 = vmatprep.subr.mxu0 0.0
        %2398 = vmatpush1.msra.mxu0 0.0
        %2399 = vmatprep.subr.mxu0 0.0
        %2400 = vmatpush1.msra.mxu0 0.0
        %2401 = vmatprep.subr.mxu0 0.0
        %2402 = vmatpush1.msra.mxu0 0.0
        %2403 = vmatprep.subr.mxu0 0.0
        %2404 = vmatpush1.msra.mxu0 0.0
        %2405 = vmatprep.subr.mxu0 0.0
        %2406 = vmatpush1.msra.mxu0 0.0
        %2407 = vmatprep.subr.mxu0 0.0
        %2408 = vmatpush1.msra.mxu0 0.0
        %2409 = vmatprep.subr.mxu0 0.0
        %2410 = vmatpush1.msra.mxu0 0.0
        %2411 = vmatprep.subr.mxu0 0.0
        %2412 = vmatpush1.msra.mxu0 0.0
        %2413 = vmatprep.subr.mxu0 0.0
        %2414 = vmatpush1.msra.mxu0 0.0
        %2415 = vmatprep.subr.mxu0 0.0
        %2416 = vmatpush1.msra.mxu0 0.0
        %2417 = vmatprep.subr.mxu0 0.0
        %2418 = vmatpush1.msra.mxu0 0.0
        %2419 = vmatprep.subr.mxu0 0.0
        %2420 = vmatpush1.msra.mxu0 0.0
        %2421 = vmatprep.subr.mxu0 0.0
        %2422 = vmatpush1.msra.mxu0 0.0
        %2423 = vmatprep.subr.mxu0 0.0
        %2424 = vmatpush1.msra.mxu0 0.0
        %2425 = vmatprep.subr.mxu0 0.0
        %2426 = vmatpush1.msra.mxu0 0.0
        %2427 = vmatprep.subr.mxu0 0.0
        %2428 = vmatpush1.msra.mxu0 0.0
        %2429 = vmatprep.subr.mxu0 0.0
        %2430 = vmatpush1.msra.mxu0 0.0
        %2431 = vmatprep.subr.mxu0 0.0
        %2432 = vmatpush1.msra.mxu0 0.0
        %2433 = vmatprep.subr.mxu0 0.0
        %2434 = vmatpush1.msra.mxu0 0.0
        %2435 = vmatprep.subr.mxu0 0.0
        %2436 = vmatpush1.msra.mxu0 0.0
        %2437 = vmatprep.subr.mxu0 0.0
        %2438 = vmatpush1.msra.mxu0 0.0
        %2439 = vmatprep.subr.mxu0 0.0
        %2440 = vmatpush1.msra.mxu0 0.0
        %2441 = vmatprep.subr.mxu0 0.0
        %2442 = vmatpush1.msra.mxu0 0.0
        %2443 = vmatprep.subr.mxu0 0.0
        %2444 = vmatpush1.msra.mxu0 0.0
        %2445 = vmatprep.mubr.f32.mxu0 0.0
        %2446 = vmatmul.mubr.f32.gmra.mrb[0].mxu0 %v2376
        %v2447 = vpop.f32.mrb[0].mxu0
        %v2448 = vadd.f32 %v2367, %v2447
        %v2449 = vpop.f32.mrb[0].mxu0
        %v2450 = vadd.f32 %v2367, %v2449
        %2451 = vmatprep.mubr.f32.mxu0 0.0
        %2452 = vmatmul.mubr.f32.gmra.mrb[0].mxu0 %v2379
        %v2453 = vpop.f32.mrb[0].mxu0
        %v2454 = vadd.f32 %v2372, %v2453
        %v2455 = vpop.f32.mrb[0].mxu0
        %v2456 = vadd.f32 %v2372, %v2455
        %2457 = vdwg.mxu0
        %2458 = vmatprep.subr.mxu0 0.0
        %2459 = vmatpush1.msra.mxu0 %v2109
        %2460 = vmatprep.subr.mxu0 0.0
        %2461 = vmatpush1.msra.mxu0 0.0
        %2462 = vmatprep.subr.mxu0 0.0
        %2463 = vmatpush1.msra.mxu0 0.0
        %2464 = vmatprep.subr.mxu0 0.0
        %2465 = vmatpush1.msra.mxu0 0.0
        %2466 = vmatprep.subr.mxu0 0.0
        %2467 = vmatpush1.msra.mxu0 0.0
        %2468 = vmatprep.subr.mxu0 0.0
        %2469 = vmatpush1.msra.mxu0 0.0
        %2470 = vmatprep.subr.mxu0 0.0
        %2471 = vmatpush1.msra.mxu0 0.0
        %2472 = vmatprep.subr.mxu0 0.0
        %2473 = vmatpush1.msra.mxu0 0.0
        %2474 = vmatprep.subr.mxu0 0.0
        %2475 = vmatpush1.msra.mxu0 0.0
        %2476 = vmatprep.subr.mxu0 0.0
        %2477 = vmatpush1.msra.mxu0 0.0
        %2478 = vmatprep.subr.mxu0 0.0
        %2479 = vmatpush1.msra.mxu0 0.0
        %2480 = vmatprep.subr.mxu0 0.0
        %2481 = vmatpush1.msra.mxu0 0.0
        %2482 = vmatprep.subr.mxu0 0.0
        %2483 = vmatpush1.msra.mxu0 0.0
        %2484 = vmatprep.subr.mxu0 0.0
        %2485 = vmatpush1.msra.mxu0 0.0
        %2486 = vmatprep.subr.mxu0 0.0
        %2487 = vmatpush1.msra.mxu0 0.0
        %2488 = vmatprep.subr.mxu0 0.0
        %2489 = vmatpush1.msra.mxu0 0.0
        %2490 = vmatprep.subr.mxu0 0.0
        %2491 = vmatpush1.msra.mxu0 0.0
        %2492 = vmatprep.subr.mxu0 0.0
        %2493 = vmatpush1.msra.mxu0 0.0
        %2494 = vmatprep.subr.mxu0 0.0
        %2495 = vmatpush1.msra.mxu0 0.0
        %2496 = vmatprep.subr.mxu0 0.0
        %2497 = vmatpush1.msra.mxu0 0.0
        %2498 = vmatprep.subr.mxu0 0.0
        %2499 = vmatpush1.msra.mxu0 0.0
        %2500 = vmatprep.subr.mxu0 0.0
        %2501 = vmatpush1.msra.mxu0 0.0
        %2502 = vmatprep.subr.mxu0 0.0
        %2503 = vmatpush1.msra.mxu0 0.0
        %2504 = vmatprep.subr.mxu0 0.0
        %2505 = vmatpush1.msra.mxu0 0.0
        %2506 = vmatprep.subr.mxu0 0.0
        %2507 = vmatpush1.msra.mxu0 0.0
        %2508 = vmatprep.subr.mxu0 0.0
        %2509 = vmatpush1.msra.mxu0 0.0
        %2510 = vmatprep.subr.mxu0 0.0
        %2511 = vmatpush1.msra.mxu0 0.0
        %2512 = vmatprep.subr.mxu0 0.0
        %2513 = vmatpush1.msra.mxu0 0.0
        %2514 = vmatprep.subr.mxu0 0.0
        %2515 = vmatpush1.msra.mxu0 0.0
        %2516 = vmatprep.subr.mxu0 0.0
        %2517 = vmatpush1.msra.mxu0 0.0
        %2518 = vmatprep.subr.mxu0 0.0
        %2519 = vmatpush1.msra.mxu0 0.0
        %2520 = vmatprep.subr.mxu0 0.0
        %2521 = vmatpush1.msra.mxu0 0.0
        %2522 = vmatprep.mubr.f32.mxu0 0.0
        %2523 = vmatmul.mubr.f32.gmra.mrb[0].mxu0 %v2376
        %v2524 = vpop.f32.mrb[0].mxu0
        %v2525 = vadd.f32 %v2367, %v2524
        %v2526 = vpop.f32.mrb[0].mxu0
        %2527 = vmatprep.mubr.f32.mxu0 0.0
        %2528 = vmatmul.mubr.f32.gmra.mrb[0].mxu0 %v2379
        %v2529 = vpop.f32.mrb[0].mxu0
        %v2530 = vadd.f32 %v2372, %v2529
        %v2531 = vpop.f32.mrb[0].mxu0
        %2532 = vdwg.mxu0
        %v2533 = vmax.f32 %v2448, 0.0
        %v2534 = vmax.f32 %v2450, 0.0
        %v2535 = vmax.f32 %v2525, 0.0
        %v2536 = vmax.f32 %v2454, 0.0
        %v2537 = vmax.f32 %v2456, 0.0
        %v2538 = vmax.f32 %v2530, 0.0
        %v2539 = vld [vmem:[%s4] sm:$0x3]
        %vm2540 = vcmask 130048
        %v2542 = vsel %vm2540, %v2539, 0
        %2544 = vmatprep.subr.mxu0 %v2534
        %2545 = vmatpush1.msra.mxu0 %v2533
        %2546 = vmatprep.subr.mxu0 %v2537
        %2547 = vmatpush1.msra.mxu0 %v2536
        %2548 = vmatprep.subr.mxu0 0.0
        %2549 = vmatpush1.msra.mxu0 0.0
        %2550 = vmatprep.subr.mxu0 0.0
        %2551 = vmatpush1.msra.mxu0 0.0
        %2552 = vmatprep.subr.mxu0 0.0
        %2553 = vmatpush1.msra.mxu0 0.0
        %2554 = vmatprep.subr.mxu0 0.0
        %2555 = vmatpush1.msra.mxu0 0.0
        %2556 = vmatprep.subr.mxu0 0.0
        %2557 = vmatpush1.msra.mxu0 0.0
        %2558 = vmatprep.subr.mxu0 0.0
        %2559 = vmatpush1.msra.mxu0 0.0
        %2560 = vmatprep.subr.mxu0 0.0
        %2561 = vmatpush1.msra.mxu0 0.0
        %2562 = vmatprep.subr.mxu0 0.0
        %2563 = vmatpush1.msra.mxu0 0.0
        %2564 = vmatprep.subr.mxu0 0.0
        %2565 = vmatpush1.msra.mxu0 0.0
        %2566 = vmatprep.subr.mxu0 0.0
        %2567 = vmatpush1.msra.mxu0 0.0
        %2568 = vmatprep.subr.mxu0 0.0
        %2569 = vmatpush1.msra.mxu0 0.0
        %2570 = vmatprep.subr.mxu0 0.0
        %2571 = vmatpush1.msra.mxu0 0.0
        %2572 = vmatprep.subr.mxu0 0.0
        %2573 = vmatpush1.msra.mxu0 0.0
        %2574 = vmatprep.subr.mxu0 0.0
        %2575 = vmatpush1.msra.mxu0 0.0
        %2576 = vmatprep.subr.mxu0 0.0
        %2577 = vmatpush1.msra.mxu0 0.0
        %2578 = vmatprep.subr.mxu0 0.0
        %2579 = vmatpush1.msra.mxu0 0.0
        %2580 = vmatprep.subr.mxu0 0.0
        %2581 = vmatpush1.msra.mxu0 0.0
        %2582 = vmatprep.subr.mxu0 0.0
        %2583 = vmatpush1.msra.mxu0 0.0
        %2584 = vmatprep.subr.mxu0 0.0
        %2585 = vmatpush1.msra.mxu0 0.0
        %2586 = vmatprep.subr.mxu0 0.0
        %2587 = vmatpush1.msra.mxu0 0.0
        %2588 = vmatprep.subr.mxu0 0.0
        %2589 = vmatpush1.msra.mxu0 0.0
        %2590 = vmatprep.subr.mxu0 0.0
        %2591 = vmatpush1.msra.mxu0 0.0
        %2592 = vmatprep.subr.mxu0 0.0
        %2593 = vmatpush1.msra.mxu0 0.0
        %2594 = vmatprep.subr.mxu0 0.0
        %2595 = vmatpush1.msra.mxu0 0.0
        %2596 = vmatprep.subr.mxu0 0.0
        %2597 = vmatpush1.msra.mxu0 0.0
        %2598 = vmatprep.subr.mxu0 0.0
        %2599 = vmatpush1.msra.mxu0 0.0
        %2600 = vmatprep.subr.mxu0 0.0
        %2601 = vmatpush1.msra.mxu0 0.0
        %2602 = vmatprep.subr.mxu0 0.0
        %2603 = vmatpush1.msra.mxu0 0.0
        %2604 = vmatprep.subr.mxu0 0.0
        %2605 = vmatpush1.msra.mxu0 0.0
        %2606 = vmatprep.subr.mxu0 0.0
        %2607 = vmatpush1.msra.mxu0 0.0
        %2608 = vmatprep.mubr.f32.mxu0 0.0
        %2609 = vmatmul.mubr.f32.gmra.mrb[0].mxu0 %v2542
        %v2610 = vpop.f32.mrb[0].mxu0
        %v2611 = vadd.f32 0.0, %v2610
        %v2612 = vpop.f32.mrb[0].mxu0
        %v2613 = vadd.f32 0.0, %v2612
        %2614 = vdwg.mxu0
        %2615 = vmatprep.subr.mxu0 0.0
        %2616 = vmatpush1.msra.mxu0 %v2535
        %2617 = vmatprep.subr.mxu0 0.0
        %2618 = vmatpush1.msra.mxu0 %v2538
        %2619 = vmatprep.subr.mxu0 0.0
        %2620 = vmatpush1.msra.mxu0 0.0
        %2621 = vmatprep.subr.mxu0 0.0
        %2622 = vmatpush1.msra.mxu0 0.0
        %2623 = vmatprep.subr.mxu0 0.0
        %2624 = vmatpush1.msra.mxu0 0.0
        %2625 = vmatprep.subr.mxu0 0.0
        %2626 = vmatpush1.msra.mxu0 0.0
        %2627 = vmatprep.subr.mxu0 0.0
        %2628 = vmatpush1.msra.mxu0 0.0
        %2629 = vmatprep.subr.mxu0 0.0
        %2630 = vmatpush1.msra.mxu0 0.0
        %2631 = vmatprep.subr.mxu0 0.0
        %2632 = vmatpush1.msra.mxu0 0.0
        %2633 = vmatprep.subr.mxu0 0.0
        %2634 = vmatpush1.msra.mxu0 0.0
        %2635 = vmatprep.subr.mxu0 0.0
        %2636 = vmatpush1.msra.mxu0 0.0
        %2637 = vmatprep.subr.mxu0 0.0
        %2638 = vmatpush1.msra.mxu0 0.0
        %2639 = vmatprep.subr.mxu0 0.0
        %2640 = vmatpush1.msra.mxu0 0.0
        %2641 = vmatprep.subr.mxu0 0.0
        %2642 = vmatpush1.msra.mxu0 0.0
        %2643 = vmatprep.subr.mxu0 0.0
        %2644 = vmatpush1.msra.mxu0 0.0
        %2645 = vmatprep.subr.mxu0 0.0
        %2646 = vmatpush1.msra.mxu0 0.0
        %2647 = vmatprep.subr.mxu0 0.0
        %2648 = vmatpush1.msra.mxu0 0.0
        %2649 = vmatprep.subr.mxu0 0.0
        %2650 = vmatpush1.msra.mxu0 0.0
        %2651 = vmatprep.subr.mxu0 0.0
        %2652 = vmatpush1.msra.mxu0 0.0
        %2653 = vmatprep.subr.mxu0 0.0
        %2654 = vmatpush1.msra.mxu0 0.0
        %2655 = vmatprep.subr.mxu0 0.0
        %2656 = vmatpush1.msra.mxu0 0.0
        %2657 = vmatprep.subr.mxu0 0.0
        %2658 = vmatpush1.msra.mxu0 0.0
        %2659 = vmatprep.subr.mxu0 0.0
        %2660 = vmatpush1.msra.mxu0 0.0
        %2661 = vmatprep.subr.mxu0 0.0
        %2662 = vmatpush1.msra.mxu0 0.0
        %2663 = vmatprep.subr.mxu0 0.0
        %2664 = vmatpush1.msra.mxu0 0.0
        %2665 = vmatprep.subr.mxu0 0.0
        %2666 = vmatpush1.msra.mxu0 0.0
        %2667 = vmatprep.subr.mxu0 0.0
        %2668 = vmatpush1.msra.mxu0 0.0
        %2669 = vmatprep.subr.mxu0 0.0
        %2670 = vmatpush1.msra.mxu0 0.0
        %2671 = vmatprep.subr.mxu0 0.0
        %2672 = vmatpush1.msra.mxu0 0.0
        %2673 = vmatprep.subr.mxu0 0.0
        %2674 = vmatpush1.msra.mxu0 0.0
        %2675 = vmatprep.subr.mxu0 0.0
        %2676 = vmatpush1.msra.mxu0 0.0
        %2677 = vmatprep.subr.mxu0 0.0
        %2678 = vmatpush1.msra.mxu0 0.0
        %2679 = vmatprep.mubr.f32.mxu0 0.0
        %2680 = vmatmul.mubr.f32.gmra.mrb[0].mxu0 %v2542
        %v2681 = vpop.f32.mrb[0].mxu0
        %v2682 = vadd.f32 0.0, %v2681
        %v2683 = vpop.f32.mrb[0].mxu0
        %2684 = vdwg.mxu0
        %2686 = vset.pattern.permute.xlu0 0
        %2687 = vperm.xlu0 %2686, %v2359
        %v2688 = vpop.permute.xlu0 %2687
        %v2690 = vadd.f32 %v2688, %v2611
        %v2691 = vadd.f32 %v2688, %v2613
        %v2692 = vadd.f32 %v2688, %v2682
        %s2693 = scalar_lea.vmem %s2, 16
        %v2694 = vld [vmem:[%s2693] sm:$0xff]
        %v2695 = vld [vmem:[%s2693 + $0x8] sm:$0xff]
        %s2696 = scalar_lea.vmem %s3, 16
        %v2697 = vld [vmem:[%s2696] sm:$0xff]
        %v2698 = vld [vmem:[%s2696 + $0x8] sm:$0xff]
        %2700 = vset.pattern.permute.xlu0 0
        %2701 = vperm.xlu0 %2700, %v2697
        %v2702 = vpop.permute.xlu0 %2701
        %2705 = vset.pattern.permute.xlu0 0
        %2706 = vperm.xlu0 %2705, %v2698
        %v2707 = vpop.permute.xlu0 %2706
        %v2710 = vsel %vm2374, %v2694, 0
        %v2713 = vsel %vm2374, %v2695, 0
        %2715 = vmatprep.subr.mxu0 %v2191
        %2716 = vmatpush1.msra.mxu0 %v2111
        %2717 = vmatprep.subr.mxu0 0.0
        %2718 = vmatpush1.msra.mxu0 0.0
        %2719 = vmatprep.subr.mxu0 0.0
        %2720 = vmatpush1.msra.mxu0 0.0
        %2721 = vmatprep.subr.mxu0 0.0
        %2722 = vmatpush1.msra.mxu0 0.0
        %2723 = vmatprep.subr.mxu0 0.0
        %2724 = vmatpush1.msra.mxu0 0.0
        %2725 = vmatprep.subr.mxu0 0.0
        %2726 = vmatpush1.msra.mxu0 0.0
        %2727 = vmatprep.subr.mxu0 0.0
        %2728 = vmatpush1.msra.mxu0 0.0
        %2729 = vmatprep.subr.mxu0 0.0
        %2730 = vmatpush1.msra.mxu0 0.0
        %2731 = vmatprep.subr.mxu0 0.0
        %2732 = vmatpush1.msra.mxu0 0.0
        %2733 = vmatprep.subr.mxu0 0.0
        %2734 = vmatpush1.msra.mxu0 0.0
        %2735 = vmatprep.subr.mxu0 0.0
        %2736 = vmatpush1.msra.mxu0 0.0
        %2737 = vmatprep.subr.mxu0 0.0
        %2738 = vmatpush1.msra.mxu0 0.0
        %2739 = vmatprep.subr.mxu0 0.0
        %2740 = vmatpush1.msra.mxu0 0.0
        %2741 = vmatprep.subr.mxu0 0.0
        %2742 = vmatpush1.msra.mxu0 0.0
        %2743 = vmatprep.subr.mxu0 0.0
        %2744 = vmatpush1.msra.mxu0 0.0
        %2745 = vmatprep.subr.mxu0 0.0
        %2746 = vmatpush1.msra.mxu0 0.0
        %2747 = vmatprep.subr.mxu0 0.0
        %2748 = vmatpush1.msra.mxu0 0.0
        %2749 = vmatprep.subr.mxu0 0.0
        %2750 = vmatpush1.msra.mxu0 0.0
        %2751 = vmatprep.subr.mxu0 0.0
        %2752 = vmatpush1.msra.mxu0 0.0
        %2753 = vmatprep.subr.mxu0 0.0
        %2754 = vmatpush1.msra.mxu0 0.0
        %2755 = vmatprep.subr.mxu0 0.0
        %2756 = vmatpush1.msra.mxu0 0.0
        %2757 = vmatprep.subr.mxu0 0.0
        %2758 = vmatpush1.msra.mxu0 0.0
        %2759 = vmatprep.subr.mxu0 0.0
        %2760 = vmatpush1.msra.mxu0 0.0
        %2761 = vmatprep.subr.mxu0 0.0
        %2762 = vmatpush1.msra.mxu0 0.0
        %2763 = vmatprep.subr.mxu0 0.0
        %2764 = vmatpush1.msra.mxu0 0.0
        %2765 = vmatprep.subr.mxu0 0.0
        %2766 = vmatpush1.msra.mxu0 0.0
        %2767 = vmatprep.subr.mxu0 0.0
        %2768 = vmatpush1.msra.mxu0 0.0
        %2769 = vmatprep.subr.mxu0 0.0
        %2770 = vmatpush1.msra.mxu0 0.0
        %2771 = vmatprep.subr.mxu0 0.0
        %2772 = vmatpush1.msra.mxu0 0.0
        %2773 = vmatprep.subr.mxu0 0.0
        %2774 = vmatpush1.msra.mxu0 0.0
        %2775 = vmatprep.subr.mxu0 0.0
        %2776 = vmatpush1.msra.mxu0 0.0
        %2777 = vmatprep.subr.mxu0 0.0
        %2778 = vmatpush1.msra.mxu0 0.0
        %2779 = vmatprep.mubr.f32.mxu0 0.0
        %2780 = vmatmul.mubr.f32.gmra.mrb[0].mxu0 %v2710
        %v2781 = vpop.f32.mrb[0].mxu0
        %v2782 = vadd.f32 %v2702, %v2781
        %v2783 = vpop.f32.mrb[0].mxu0
        %v2784 = vadd.f32 %v2702, %v2783
        %2785 = vmatprep.mubr.f32.mxu0 0.0
        %2786 = vmatmul.mubr.f32.gmra.mrb[0].mxu0 %v2713
        %v2787 = vpop.f32.mrb[0].mxu0
        %v2788 = vadd.f32 %v2707, %v2787
        %v2789 = vpop.f32.mrb[0].mxu0
        %v2790 = vadd.f32 %v2707, %v2789
        %2791 = vdwg.mxu0
        %2792 = vmatprep.subr.mxu0 0.0
        %2793 = vmatpush1.msra.mxu0 %v2193
        %2794 = vmatprep.subr.mxu0 0.0
        %2795 = vmatpush1.msra.mxu0 0.0
        %2796 = vmatprep.subr.mxu0 0.0
        %2797 = vmatpush1.msra.mxu0 0.0
        %2798 = vmatprep.subr.mxu0 0.0
        %2799 = vmatpush1.msra.mxu0 0.0
        %2800 = vmatprep.subr.mxu0 0.0
        %2801 = vmatpush1.msra.mxu0 0.0
        %2802 = vmatprep.subr.mxu0 0.0
        %2803 = vmatpush1.msra.mxu0 0.0
        %2804 = vmatprep.subr.mxu0 0.0
        %2805 = vmatpush1.msra.mxu0 0.0
        %2806 = vmatprep.subr.mxu0 0.0
        %2807 = vmatpush1.msra.mxu0 0.0
        %2808 = vmatprep.subr.mxu0 0.0
        %2809 = vmatpush1.msra.mxu0 0.0
        %2810 = vmatprep.subr.mxu0 0.0
        %2811 = vmatpush1.msra.mxu0 0.0
        %2812 = vmatprep.subr.mxu0 0.0
        %2813 = vmatpush1.msra.mxu0 0.0
        %2814 = vmatprep.subr.mxu0 0.0
        %2815 = vmatpush1.msra.mxu0 0.0
        %2816 = vmatprep.subr.mxu0 0.0
        %2817 = vmatpush1.msra.mxu0 0.0
        %2818 = vmatprep.subr.mxu0 0.0
        %2819 = vmatpush1.msra.mxu0 0.0
        %2820 = vmatprep.subr.mxu0 0.0
        %2821 = vmatpush1.msra.mxu0 0.0
        %2822 = vmatprep.subr.mxu0 0.0
        %2823 = vmatpush1.msra.mxu0 0.0
        %2824 = vmatprep.subr.mxu0 0.0
        %2825 = vmatpush1.msra.mxu0 0.0
        %2826 = vmatprep.subr.mxu0 0.0
        %2827 = vmatpush1.msra.mxu0 0.0
        %2828 = vmatprep.subr.mxu0 0.0
        %2829 = vmatpush1.msra.mxu0 0.0
        %2830 = vmatprep.subr.mxu0 0.0
        %2831 = vmatpush1.msra.mxu0 0.0
        %2832 = vmatprep.subr.mxu0 0.0
        %2833 = vmatpush1.msra.mxu0 0.0
        %2834 = vmatprep.subr.mxu0 0.0
        %2835 = vmatpush1.msra.mxu0 0.0
        %2836 = vmatprep.subr.mxu0 0.0
        %2837 = vmatpush1.msra.mxu0 0.0
        %2838 = vmatprep.subr.mxu0 0.0
        %2839 = vmatpush1.msra.mxu0 0.0
        %2840 = vmatprep.subr.mxu0 0.0
        %2841 = vmatpush1.msra.mxu0 0.0
        %2842 = vmatprep.subr.mxu0 0.0
        %2843 = vmatpush1.msra.mxu0 0.0
        %2844 = vmatprep.subr.mxu0 0.0
        %2845 = vmatpush1.msra.mxu0 0.0
        %2846 = vmatprep.subr.mxu0 0.0
        %2847 = vmatpush1.msra.mxu0 0.0
        %2848 = vmatprep.subr.mxu0 0.0
        %2849 = vmatpush1.msra.mxu0 0.0
        %2850 = vmatprep.subr.mxu0 0.0
        %2851 = vmatpush1.msra.mxu0 0.0
        %2852 = vmatprep.subr.mxu0 0.0
        %2853 = vmatpush1.msra.mxu0 0.0
        %2854 = vmatprep.subr.mxu0 0.0
        %2855 = vmatpush1.msra.mxu0 0.0
        %2856 = vmatprep.mubr.f32.mxu0 0.0
        %2857 = vmatmul.mubr.f32.gmra.mrb[0].mxu0 %v2710
        %v2858 = vpop.f32.mrb[0].mxu0
        %v2859 = vadd.f32 %v2702, %v2858
        %v2860 = vpop.f32.mrb[0].mxu0
        %2861 = vmatprep.mubr.f32.mxu0 0.0
        %2862 = vmatmul.mubr.f32.gmra.mrb[0].mxu0 %v2713
        %v2863 = vpop.f32.mrb[0].mxu0
        %v2864 = vadd.f32 %v2707, %v2863
        %v2865 = vpop.f32.mrb[0].mxu0
        %2866 = vdwg.mxu0
        %v2867 = vmax.f32 %v2782, 0.0
        %v2868 = vmax.f32 %v2784, 0.0
        %v2869 = vmax.f32 %v2859, 0.0
        %v2870 = vmax.f32 %v2788, 0.0
        %v2871 = vmax.f32 %v2790, 0.0
        %v2872 = vmax.f32 %v2864, 0.0
        %s2873 = scalar_lea.vmem %s4, 2
        %v2874 = vld [vmem:[%s2873] sm:$0x3]
        %v2876 = vsel %vm2540, %v2874, 0
        %2878 = vmatprep.subr.mxu0 %v2868
        %2879 = vmatpush1.msra.mxu0 %v2867
        %2880 = vmatprep.subr.mxu0 %v2871
        %2881 = vmatpush1.msra.mxu0 %v2870
        %2882 = vmatprep.subr.mxu0 0.0
        %2883 = vmatpush1.msra.mxu0 0.0
        %2884 = vmatprep.subr.mxu0 0.0
        %2885 = vmatpush1.msra.mxu0 0.0
        %2886 = vmatprep.subr.mxu0 0.0
        %2887 = vmatpush1.msra.mxu0 0.0
        %2888 = vmatprep.subr.mxu0 0.0
        %2889 = vmatpush1.msra.mxu0 0.0
        %2890 = vmatprep.subr.mxu0 0.0
        %2891 = vmatpush1.msra.mxu0 0.0
        %2892 = vmatprep.subr.mxu0 0.0
        %2893 = vmatpush1.msra.mxu0 0.0
        %2894 = vmatprep.subr.mxu0 0.0
        %2895 = vmatpush1.msra.mxu0 0.0
        %2896 = vmatprep.subr.mxu0 0.0
        %2897 = vmatpush1.msra.mxu0 0.0
        %2898 = vmatprep.subr.mxu0 0.0
        %2899 = vmatpush1.msra.mxu0 0.0
        %2900 = vmatprep.subr.mxu0 0.0
        %2901 = vmatpush1.msra.mxu0 0.0
        %2902 = vmatprep.subr.mxu0 0.0
        %2903 = vmatpush1.msra.mxu0 0.0
        %2904 = vmatprep.subr.mxu0 0.0
        %2905 = vmatpush1.msra.mxu0 0.0
        %2906 = vmatprep.subr.mxu0 0.0
        %2907 = vmatpush1.msra.mxu0 0.0
        %2908 = vmatprep.subr.mxu0 0.0
        %2909 = vmatpush1.msra.mxu0 0.0
        %2910 = vmatprep.subr.mxu0 0.0
        %2911 = vmatpush1.msra.mxu0 0.0
        %2912 = vmatprep.subr.mxu0 0.0
        %2913 = vmatpush1.msra.mxu0 0.0
        %2914 = vmatprep.subr.mxu0 0.0
        %2915 = vmatpush1.msra.mxu0 0.0
        %2916 = vmatprep.subr.mxu0 0.0
        %2917 = vmatpush1.msra.mxu0 0.0
        %2918 = vmatprep.subr.mxu0 0.0
        %2919 = vmatpush1.msra.mxu0 0.0
        %2920 = vmatprep.subr.mxu0 0.0
        %2921 = vmatpush1.msra.mxu0 0.0
        %2922 = vmatprep.subr.mxu0 0.0
        %2923 = vmatpush1.msra.mxu0 0.0
        %2924 = vmatprep.subr.mxu0 0.0
        %2925 = vmatpush1.msra.mxu0 0.0
        %2926 = vmatprep.subr.mxu0 0.0
        %2927 = vmatpush1.msra.mxu0 0.0
        %2928 = vmatprep.subr.mxu0 0.0
        %2929 = vmatpush1.msra.mxu0 0.0
        %2930 = vmatprep.subr.mxu0 0.0
        %2931 = vmatpush1.msra.mxu0 0.0
        %2932 = vmatprep.subr.mxu0 0.0
        %2933 = vmatpush1.msra.mxu0 0.0
        %2934 = vmatprep.subr.mxu0 0.0
        %2935 = vmatpush1.msra.mxu0 0.0
        %2936 = vmatprep.subr.mxu0 0.0
        %2937 = vmatpush1.msra.mxu0 0.0
        %2938 = vmatprep.subr.mxu0 0.0
        %2939 = vmatpush1.msra.mxu0 0.0
        %2940 = vmatprep.subr.mxu0 0.0
        %2941 = vmatpush1.msra.mxu0 0.0
        %2942 = vmatprep.mubr.f32.mxu0 0.0
        %2943 = vmatmul.mubr.f32.gmra.mrb[0].mxu0 %v2876
        %v2944 = vpop.f32.mrb[0].mxu0
        %v2945 = vadd.f32 0.0, %v2944
        %v2946 = vpop.f32.mrb[0].mxu0
        %v2947 = vadd.f32 0.0, %v2946
        %2948 = vdwg.mxu0
        %2949 = vmatprep.subr.mxu0 0.0
        %2950 = vmatpush1.msra.mxu0 %v2869
        %2951 = vmatprep.subr.mxu0 0.0
        %2952 = vmatpush1.msra.mxu0 %v2872
        %2953 = vmatprep.subr.mxu0 0.0
        %2954 = vmatpush1.msra.mxu0 0.0
        %2955 = vmatprep.subr.mxu0 0.0
        %2956 = vmatpush1.msra.mxu0 0.0
        %2957 = vmatprep.subr.mxu0 0.0
        %2958 = vmatpush1.msra.mxu0 0.0
        %2959 = vmatprep.subr.mxu0 0.0
        %2960 = vmatpush1.msra.mxu0 0.0
        %2961 = vmatprep.subr.mxu0 0.0
        %2962 = vmatpush1.msra.mxu0 0.0
        %2963 = vmatprep.subr.mxu0 0.0
        %2964 = vmatpush1.msra.mxu0 0.0
        %2965 = vmatprep.subr.mxu0 0.0
        %2966 = vmatpush1.msra.mxu0 0.0
        %2967 = vmatprep.subr.mxu0 0.0
        %2968 = vmatpush1.msra.mxu0 0.0
        %2969 = vmatprep.subr.mxu0 0.0
        %2970 = vmatpush1.msra.mxu0 0.0
        %2971 = vmatprep.subr.mxu0 0.0
        %2972 = vmatpush1.msra.mxu0 0.0
        %2973 = vmatprep.subr.mxu0 0.0
        %2974 = vmatpush1.msra.mxu0 0.0
        %2975 = vmatprep.subr.mxu0 0.0
        %2976 = vmatpush1.msra.mxu0 0.0
        %2977 = vmatprep.subr.mxu0 0.0
        %2978 = vmatpush1.msra.mxu0 0.0
        %2979 = vmatprep.subr.mxu0 0.0
        %2980 = vmatpush1.msra.mxu0 0.0
        %2981 = vmatprep.subr.mxu0 0.0
        %2982 = vmatpush1.msra.mxu0 0.0
        %2983 = vmatprep.subr.mxu0 0.0
        %2984 = vmatpush1.msra.mxu0 0.0
        %2985 = vmatprep.subr.mxu0 0.0
        %2986 = vmatpush1.msra.mxu0 0.0
        %2987 = vmatprep.subr.mxu0 0.0
        %2988 = vmatpush1.msra.mxu0 0.0
        %2989 = vmatprep.subr.mxu0 0.0
        %2990 = vmatpush1.msra.mxu0 0.0
        %2991 = vmatprep.subr.mxu0 0.0
        %2992 = vmatpush1.msra.mxu0 0.0
        %2993 = vmatprep.subr.mxu0 0.0
        %2994 = vmatpush1.msra.mxu0 0.0
        %2995 = vmatprep.subr.mxu0 0.0
        %2996 = vmatpush1.msra.mxu0 0.0
        %2997 = vmatprep.subr.mxu0 0.0
        %2998 = vmatpush1.msra.mxu0 0.0
        %2999 = vmatprep.subr.mxu0 0.0
        %3000 = vmatpush1.msra.mxu0 0.0
        %3001 = vmatprep.subr.mxu0 0.0
        %3002 = vmatpush1.msra.mxu0 0.0
        %3003 = vmatprep.subr.mxu0 0.0
        %3004 = vmatpush1.msra.mxu0 0.0
        %3005 = vmatprep.subr.mxu0 0.0
        %3006 = vmatpush1.msra.mxu0 0.0
        %3007 = vmatprep.subr.mxu0 0.0
        %3008 = vmatpush1.msra.mxu0 0.0
        %3009 = vmatprep.subr.mxu0 0.0
        %3010 = vmatpush1.msra.mxu0 0.0
        %3011 = vmatprep.subr.mxu0 0.0
        %3012 = vmatpush1.msra.mxu0 0.0
        %3013 = vmatprep.mubr.f32.mxu0 0.0
        %3014 = vmatmul.mubr.f32.gmra.mrb[0].mxu0 %v2876
        %v3015 = vpop.f32.mrb[0].mxu0
        %v3016 = vadd.f32 0.0, %v3015
        %v3017 = vpop.f32.mrb[0].mxu0
        %3018 = vdwg.mxu0
        %v3019 = vadd.f32 %v2690, %v2945
        %v3020 = vadd.f32 %v2691, %v2947
        %v3021 = vadd.f32 %v2692, %v3016
        %vm3022 = vcmask 1041408
        %v3023 = vsel %vm3022, %v3019, -inf
        %v3024 = vrot.slane %v3023, 4
        %v3025 = vmax.f32 %v3023, %v3024
        %v3026 = vrot.slane %v3025, 2
        %v3027 = vmax.f32 %v3025, %v3026
        %v3028 = vrot.slane %v3027, 1
        %v3029 = vmax.f32 %v3027, %v3028
        %v3030 = vsel %vm3022, %v3020, -inf
        %v3031 = vrot.slane %v3030, 4
        %v3032 = vmax.f32 %v3030, %v3031
        %v3033 = vrot.slane %v3032, 2
        %v3034 = vmax.f32 %v3032, %v3033
        %v3035 = vrot.slane %v3034, 1
        %v3036 = vmax.f32 %v3034, %v3035
        %v3037 = vsel %vm3022, %v3021, -inf
        %v3038 = vrot.slane %v3037, 4
        %v3039 = vmax.f32 %v3037, %v3038
        %v3040 = vrot.slane %v3039, 2
        %v3041 = vmax.f32 %v3039, %v3040
        %v3042 = vrot.slane %v3041, 1
        %v3043 = vmax.f32 %v3041, %v3042
        %v3044 = vsub.f32 %v3019, %v3029
        %v3045 = vsub.f32 %v3020, %v3036
        %v3046 = vsub.f32 %v3021, %v3043
        %v3047 = vmul.f32 %v3044, 1.442695
        %v3048 = vpow.pop %v3047
        %v3049 = vmul.f32 %v3045, 1.442695
        %v3050 = vpow.pop %v3049
        %v3051 = vmul.f32 %v3046, 1.442695
        %v3052 = vpow.pop %v3051
        %v3053 = vsel %vm3022, %v3048, 0.0
        %v3054 = vrot.slane %v3053, 4
        %v3055 = vadd.f32 %v3053, %v3054
        %v3056 = vrot.slane %v3055, 2
        %v3057 = vadd.f32 %v3055, %v3056
        %v3058 = vrot.slane %v3057, 1
        %v3059 = vadd.f32 %v3057, %v3058
        %v3060 = vsel %vm3022, %v3050, 0.0
        %v3061 = vrot.slane %v3060, 4
        %v3062 = vadd.f32 %v3060, %v3061
        %v3063 = vrot.slane %v3062, 2
        %v3064 = vadd.f32 %v3062, %v3063
        %v3065 = vrot.slane %v3064, 1
        %v3066 = vadd.f32 %v3064, %v3065
        %v3067 = vsel %vm3022, %v3052, 0.0
        %v3068 = vrot.slane %v3067, 4
        %v3069 = vadd.f32 %v3067, %v3068
        %v3070 = vrot.slane %v3069, 2
        %v3071 = vadd.f32 %v3069, %v3070
        %v3072 = vrot.slane %v3071, 1
        %v3073 = vadd.f32 %v3071, %v3072
        %v3074 = vrcp.pop %v3059
        %v3075 = vmul.f32 %v3048, %v3074
        %v3076 = vrcp.pop %v3066
        %v3077 = vmul.f32 %v3050, %v3076
        %v3078 = vrcp.pop %v3073
        %v3079 = vmul.f32 %v3052, %v3078
        %v3080 = vlaneseq
        %v3081 = vshrl.u32 %v3080, 7
        %v3082 = vsub.s32 0, %v3081
        %v3083 = vrot.slane %v3075, %v3082
        %v3084 = vlaneseq
        %v3085 = vshrl.u32 %v3084, 7
        %v3086 = vsub.s32 0, %v3085
        %v3087 = vrot.slane %v3077, %v3086
        %v3088 = vlaneseq
        %v3089 = vshrl.u32 %v3088, 7
        %v3090 = vsub.s32 0, %v3089
        %v3091 = vrot.slane %v3079, %v3090
        %v3092 = vmul.f32 %v2533, %v3083
        %v3093 = vmul.f32 %v2534, %v3087
        %v3094 = vmul.f32 %v2535, %v3091
        %v3095 = vmul.f32 %v2536, %v3083
        %v3096 = vmul.f32 %v2537, %v3087
        %v3097 = vmul.f32 %v2538, %v3091
        %v3098 = vlaneseq
        %v3099 = vshrl.u32 %v3098, 7
        %v3100 = vsub.s32 1, %v3099
        %v3101 = vrot.slane %v3075, %v3100
        %v3102 = vlaneseq
        %v3103 = vshrl.u32 %v3102, 7
        %v3104 = vsub.s32 1, %v3103
        %v3105 = vrot.slane %v3077, %v3104
        %v3106 = vlaneseq
        %v3107 = vshrl.u32 %v3106, 7
        %v3108 = vsub.s32 1, %v3107
        %v3109 = vrot.slane %v3079, %v3108
        %v3110 = vmul.f32 %v2867, %v3101
        %v3111 = vmul.f32 %v2868, %v3105
        %v3112 = vmul.f32 %v2869, %v3109
        %v3113 = vmul.f32 %v2870, %v3101
        %v3114 = vmul.f32 %v2871, %v3105
        %v3115 = vmul.f32 %v2872, %v3109
        %v3116 = vadd.f32 %v3092, %v3110
        %v3117 = vadd.f32 %v3093, %v3111
        %v3118 = vadd.f32 %v3094, %v3112
        %v3119 = vadd.f32 %v3095, %v3113
        %v3120 = vadd.f32 %v3096, %v3114
        %v3121 = vadd.f32 %v3097, %v3115
        %v3122 = vld [vmem:[%s6] sm:$0xff]
        %v3123 = vld [vmem:[%s6 + $0x8] sm:$0xff]
        %v3124 = vld [vmem:[%s7] sm:$0xff]
        %v3125 = vld [vmem:[%s7 + $0x8] sm:$0xff]
        %3127 = vset.pattern.permute.xlu0 0
        %3128 = vperm.xlu0 %3127, %v3124
        %v3129 = vpop.permute.xlu0 %3128
        %3132 = vset.pattern.permute.xlu0 0
        %3133 = vperm.xlu0 %3132, %v3125
        %v3134 = vpop.permute.xlu0 %3133
        %v3137 = vsel %vm2374, %v3122, 0
        %v3140 = vsel %vm2374, %v3123, 0
        %3142 = vmatprep.subr.mxu0 %v2275
        %3143 = vmatpush1.msra.mxu0 %v2273
        %3144 = vmatprep.subr.mxu0 0.0
        %3145 = vmatpush1.msra.mxu0 0.0
        %3146 = vmatprep.subr.mxu0 0.0
        %3147 = vmatpush1.msra.mxu0 0.0
        %3148 = vmatprep.subr.mxu0 0.0
        %3149 = vmatpush1.msra.mxu0 0.0
        %3150 = vmatprep.subr.mxu0 0.0
        %3151 = vmatpush1.msra.mxu0 0.0
        %3152 = vmatprep.subr.mxu0 0.0
        %3153 = vmatpush1.msra.mxu0 0.0
        %3154 = vmatprep.subr.mxu0 0.0
        %3155 = vmatpush1.msra.mxu0 0.0
        %3156 = vmatprep.subr.mxu0 0.0
        %3157 = vmatpush1.msra.mxu0 0.0
        %3158 = vmatprep.subr.mxu0 0.0
        %3159 = vmatpush1.msra.mxu0 0.0
        %3160 = vmatprep.subr.mxu0 0.0
        %3161 = vmatpush1.msra.mxu0 0.0
        %3162 = vmatprep.subr.mxu0 0.0
        %3163 = vmatpush1.msra.mxu0 0.0
        %3164 = vmatprep.subr.mxu0 0.0
        %3165 = vmatpush1.msra.mxu0 0.0
        %3166 = vmatprep.subr.mxu0 0.0
        %3167 = vmatpush1.msra.mxu0 0.0
        %3168 = vmatprep.subr.mxu0 0.0
        %3169 = vmatpush1.msra.mxu0 0.0
        %3170 = vmatprep.subr.mxu0 0.0
        %3171 = vmatpush1.msra.mxu0 0.0
        %3172 = vmatprep.subr.mxu0 0.0
        %3173 = vmatpush1.msra.mxu0 0.0
        %3174 = vmatprep.subr.mxu0 0.0
        %3175 = vmatpush1.msra.mxu0 0.0
        %3176 = vmatprep.subr.mxu0 0.0
        %3177 = vmatpush1.msra.mxu0 0.0
        %3178 = vmatprep.subr.mxu0 0.0
        %3179 = vmatpush1.msra.mxu0 0.0
        %3180 = vmatprep.subr.mxu0 0.0
        %3181 = vmatpush1.msra.mxu0 0.0
        %3182 = vmatprep.subr.mxu0 0.0
        %3183 = vmatpush1.msra.mxu0 0.0
        %3184 = vmatprep.subr.mxu0 0.0
        %3185 = vmatpush1.msra.mxu0 0.0
        %3186 = vmatprep.subr.mxu0 0.0
        %3187 = vmatpush1.msra.mxu0 0.0
        %3188 = vmatprep.subr.mxu0 0.0
        %3189 = vmatpush1.msra.mxu0 0.0
        %3190 = vmatprep.subr.mxu0 0.0
        %3191 = vmatpush1.msra.mxu0 0.0
        %3192 = vmatprep.subr.mxu0 0.0
        %3193 = vmatpush1.msra.mxu0 0.0
        %3194 = vmatprep.subr.mxu0 0.0
        %3195 = vmatpush1.msra.mxu0 0.0
        %3196 = vmatprep.subr.mxu0 0.0
        %3197 = vmatpush1.msra.mxu0 0.0
        %3198 = vmatprep.subr.mxu0 0.0
        %3199 = vmatpush1.msra.mxu0 0.0
        %3200 = vmatprep.subr.mxu0 0.0
        %3201 = vmatpush1.msra.mxu0 0.0
        %3202 = vmatprep.subr.mxu0 0.0
        %3203 = vmatpush1.msra.mxu0 0.0
        %3204 = vmatprep.subr.mxu0 0.0
        %3205 = vmatpush1.msra.mxu0 0.0
        %3206 = vmatprep.mubr.f32.mxu0 0.0
        %3207 = vmatmul.mubr.f32.gmra.mrb[0].mxu0 %v3137
        %v3208 = vpop.f32.mrb[0].mxu0
        %v3209 = vadd.f32 %v3129, %v3208
        %v3210 = vpop.f32.mrb[0].mxu0
        %v3211 = vadd.f32 %v3129, %v3210
        %3212 = vmatprep.mubr.f32.mxu0 0.0
        %3213 = vmatmul.mubr.f32.gmra.mrb[0].mxu0 %v3140
        %v3214 = vpop.f32.mrb[0].mxu0
        %v3215 = vadd.f32 %v3134, %v3214
        %v3216 = vpop.f32.mrb[0].mxu0
        %v3217 = vadd.f32 %v3134, %v3216
        %3218 = vdwg.mxu0
        %3219 = vmatprep.subr.mxu0 0.0
        %3220 = vmatpush1.msra.mxu0 %v2354
        %3221 = vmatprep.subr.mxu0 0.0
        %3222 = vmatpush1.msra.mxu0 0.0
        %3223 = vmatprep.subr.mxu0 0.0
        %3224 = vmatpush1.msra.mxu0 0.0
        %3225 = vmatprep.subr.mxu0 0.0
        %3226 = vmatpush1.msra.mxu0 0.0
        %3227 = vmatprep.subr.mxu0 0.0
        %3228 = vmatpush1.msra.mxu0 0.0
        %3229 = vmatprep.subr.mxu0 0.0
        %3230 = vmatpush1.msra.mxu0 0.0
        %3231 = vmatprep.subr.mxu0 0.0
        %3232 = vmatpush1.msra.mxu0 0.0
        %3233 = vmatprep.subr.mxu0 0.0
        %3234 = vmatpush1.msra.mxu0 0.0
        %3235 = vmatprep.subr.mxu0 0.0
        %3236 = vmatpush1.msra.mxu0 0.0
        %3237 = vmatprep.subr.mxu0 0.0
        %3238 = vmatpush1.msra.mxu0 0.0
        %3239 = vmatprep.subr.mxu0 0.0
        %3240 = vmatpush1.msra.mxu0 0.0
        %3241 = vmatprep.subr.mxu0 0.0
        %3242 = vmatpush1.msra.mxu0 0.0
        %3243 = vmatprep.subr.mxu0 0.0
        %3244 = vmatpush1.msra.mxu0 0.0
        %3245 = vmatprep.subr.mxu0 0.0
        %3246 = vmatpush1.msra.mxu0 0.0
        %3247 = vmatprep.subr.mxu0 0.0
        %3248 = vmatpush1.msra.mxu0 0.0
        %3249 = vmatprep.subr.mxu0 0.0
        %3250 = vmatpush1.msra.mxu0 0.0
        %3251 = vmatprep.subr.mxu0 0.0
        %3252 = vmatpush1.msra.mxu0 0.0
        %3253 = vmatprep.subr.mxu0 0.0
        %3254 = vmatpush1.msra.mxu0 0.0
        %3255 = vmatprep.subr.mxu0 0.0
        %3256 = vmatpush1.msra.mxu0 0.0
        %3257 = vmatprep.subr.mxu0 0.0
        %3258 = vmatpush1.msra.mxu0 0.0
        %3259 = vmatprep.subr.mxu0 0.0
        %3260 = vmatpush1.msra.mxu0 0.0
        %3261 = vmatprep.subr.mxu0 0.0
        %3262 = vmatpush1.msra.mxu0 0.0
        %3263 = vmatprep.subr.mxu0 0.0
        %3264 = vmatpush1.msra.mxu0 0.0
        %3265 = vmatprep.subr.mxu0 0.0
        %3266 = vmatpush1.msra.mxu0 0.0
        %3267 = vmatprep.subr.mxu0 0.0
        %3268 = vmatpush1.msra.mxu0 0.0
        %3269 = vmatprep.subr.mxu0 0.0
        %3270 = vmatpush1.msra.mxu0 0.0
        %3271 = vmatprep.subr.mxu0 0.0
        %3272 = vmatpush1.msra.mxu0 0.0
        %3273 = vmatprep.subr.mxu0 0.0
        %3274 = vmatpush1.msra.mxu0 0.0
        %3275 = vmatprep.subr.mxu0 0.0
        %3276 = vmatpush1.msra.mxu0 0.0
        %3277 = vmatprep.subr.mxu0 0.0
        %3278 = vmatpush1.msra.mxu0 0.0
        %3279 = vmatprep.subr.mxu0 0.0
        %3280 = vmatpush1.msra.mxu0 0.0
        %3281 = vmatprep.subr.mxu0 0.0
        %3282 = vmatpush1.msra.mxu0 0.0
        %3283 = vmatprep.mubr.f32.mxu0 0.0
        %3284 = vmatmul.mubr.f32.gmra.mrb[0].mxu0 %v3137
        %v3285 = vpop.f32.mrb[0].mxu0
        %v3286 = vadd.f32 %v3129, %v3285
        %v3287 = vpop.f32.mrb[0].mxu0
        %3288 = vmatprep.mubr.f32.mxu0 0.0
        %3289 = vmatmul.mubr.f32.gmra.mrb[0].mxu0 %v3140
        %v3290 = vpop.f32.mrb[0].mxu0
        %v3291 = vadd.f32 %v3134, %v3290
        %v3292 = vpop.f32.mrb[0].mxu0
        %3293 = vdwg.mxu0
        %v3294 = vld [vmem:[%s8] sm:$0xff]
        %v3295 = vld [vmem:[%s9] sm:$0xff]
        %v3297 = vsel %vm2540, %v3295, 0
        %3299 = vmatprep.subr.mxu0 %v3211
        %3300 = vmatpush1.msra.mxu0 %v3209
        %3301 = vmatprep.subr.mxu0 %v3217
        %3302 = vmatpush1.msra.mxu0 %v3215
        %3303 = vmatprep.subr.mxu0 0.0
        %3304 = vmatpush1.msra.mxu0 0.0
        %3305 = vmatprep.subr.mxu0 0.0
        %3306 = vmatpush1.msra.mxu0 0.0
        %3307 = vmatprep.subr.mxu0 0.0
        %3308 = vmatpush1.msra.mxu0 0.0
        %3309 = vmatprep.subr.mxu0 0.0
        %3310 = vmatpush1.msra.mxu0 0.0
        %3311 = vmatprep.subr.mxu0 0.0
        %3312 = vmatpush1.msra.mxu0 0.0
        %3313 = vmatprep.subr.mxu0 0.0
        %3314 = vmatpush1.msra.mxu0 0.0
        %3315 = vmatprep.subr.mxu0 0.0
        %3316 = vmatpush1.msra.mxu0 0.0
        %3317 = vmatprep.subr.mxu0 0.0
        %3318 = vmatpush1.msra.mxu0 0.0
        %3319 = vmatprep.subr.mxu0 0.0
        %3320 = vmatpush1.msra.mxu0 0.0
        %3321 = vmatprep.subr.mxu0 0.0
        %3322 = vmatpush1.msra.mxu0 0.0
        %3323 = vmatprep.subr.mxu0 0.0
        %3324 = vmatpush1.msra.mxu0 0.0
        %3325 = vmatprep.subr.mxu0 0.0
        %3326 = vmatpush1.msra.mxu0 0.0
        %3327 = vmatprep.subr.mxu0 0.0
        %3328 = vmatpush1.msra.mxu0 0.0
        %3329 = vmatprep.subr.mxu0 0.0
        %3330 = vmatpush1.msra.mxu0 0.0
        %3331 = vmatprep.subr.mxu0 0.0
        %3332 = vmatpush1.msra.mxu0 0.0
        %3333 = vmatprep.subr.mxu0 0.0
        %3334 = vmatpush1.msra.mxu0 0.0
        %3335 = vmatprep.subr.mxu0 0.0
        %3336 = vmatpush1.msra.mxu0 0.0
        %3337 = vmatprep.subr.mxu0 0.0
        %3338 = vmatpush1.msra.mxu0 0.0
        %3339 = vmatprep.subr.mxu0 0.0
        %3340 = vmatpush1.msra.mxu0 0.0
        %3341 = vmatprep.subr.mxu0 0.0
        %3342 = vmatpush1.msra.mxu0 0.0
        %3343 = vmatprep.subr.mxu0 0.0
        %3344 = vmatpush1.msra.mxu0 0.0
        %3345 = vmatprep.subr.mxu0 0.0
        %3346 = vmatpush1.msra.mxu0 0.0
        %3347 = vmatprep.subr.mxu0 0.0
        %3348 = vmatpush1.msra.mxu0 0.0
        %3349 = vmatprep.subr.mxu0 0.0
        %3350 = vmatpush1.msra.mxu0 0.0
        %3351 = vmatprep.subr.mxu0 0.0
        %3352 = vmatpush1.msra.mxu0 0.0
        %3353 = vmatprep.subr.mxu0 0.0
        %3354 = vmatpush1.msra.mxu0 0.0
        %3355 = vmatprep.subr.mxu0 0.0
        %3356 = vmatpush1.msra.mxu0 0.0
        %3357 = vmatprep.subr.mxu0 0.0
        %3358 = vmatpush1.msra.mxu0 0.0
        %3359 = vmatprep.subr.mxu0 0.0
        %3360 = vmatpush1.msra.mxu0 0.0
        %3361 = vmatprep.subr.mxu0 0.0
        %3362 = vmatpush1.msra.mxu0 0.0
        %3363 = vmatprep.mubr.f32.mxu0 0.0
        %3364 = vmatmul.mubr.f32.gmra.mrb[0].mxu0 %v3297
        %v3365 = vpop.f32.mrb[0].mxu0
        %v3366 = vadd.f32 0.0, %v3365
        %v3367 = vpop.f32.mrb[0].mxu0
        %v3368 = vadd.f32 0.0, %v3367
        %3369 = vdwg.mxu0
        %3370 = vmatprep.subr.mxu0 0.0
        %3371 = vmatpush1.msra.mxu0 %v3286
        %3372 = vmatprep.subr.mxu0 0.0
        %3373 = vmatpush1.msra.mxu0 %v3291
        %3374 = vmatprep.subr.mxu0 0.0
        %3375 = vmatpush1.msra.mxu0 0.0
        %3376 = vmatprep.subr.mxu0 0.0
        %3377 = vmatpush1.msra.mxu0 0.0
        %3378 = vmatprep.subr.mxu0 0.0
        %3379 = vmatpush1.msra.mxu0 0.0
        %3380 = vmatprep.subr.mxu0 0.0
        %3381 = vmatpush1.msra.mxu0 0.0
        %3382 = vmatprep.subr.mxu0 0.0
        %3383 = vmatpush1.msra.mxu0 0.0
        %3384 = vmatprep.subr.mxu0 0.0
        %3385 = vmatpush1.msra.mxu0 0.0
        %3386 = vmatprep.subr.mxu0 0.0
        %3387 = vmatpush1.msra.mxu0 0.0
        %3388 = vmatprep.subr.mxu0 0.0
        %3389 = vmatpush1.msra.mxu0 0.0
        %3390 = vmatprep.subr.mxu0 0.0
        %3391 = vmatpush1.msra.mxu0 0.0
        %3392 = vmatprep.subr.mxu0 0.0
        %3393 = vmatpush1.msra.mxu0 0.0
        %3394 = vmatprep.subr.mxu0 0.0
        %3395 = vmatpush1.msra.mxu0 0.0
        %3396 = vmatprep.subr.mxu0 0.0
        %3397 = vmatpush1.msra.mxu0 0.0
        %3398 = vmatprep.subr.mxu0 0.0
        %3399 = vmatpush1.msra.mxu0 0.0
        %3400 = vmatprep.subr.mxu0 0.0
        %3401 = vmatpush1.msra.mxu0 0.0
        %3402 = vmatprep.subr.mxu0 0.0
        %3403 = vmatpush1.msra.mxu0 0.0
        %3404 = vmatprep.subr.mxu0 0.0
        %3405 = vmatpush1.msra.mxu0 0.0
        %3406 = vmatprep.subr.mxu0 0.0
        %3407 = vmatpush1.msra.mxu0 0.0
        %3408 = vmatprep.subr.mxu0 0.0
        %3409 = vmatpush1.msra.mxu0 0.0
        %3410 = vmatprep.subr.mxu0 0.0
        %3411 = vmatpush1.msra.mxu0 0.0
        %3412 = vmatprep.subr.mxu0 0.0
        %3413 = vmatpush1.msra.mxu0 0.0
        %3414 = vmatprep.subr.mxu0 0.0
        %3415 = vmatpush1.msra.mxu0 0.0
        %3416 = vmatprep.subr.mxu0 0.0
        %3417 = vmatpush1.msra.mxu0 0.0
        %3418 = vmatprep.subr.mxu0 0.0
        %3419 = vmatpush1.msra.mxu0 0.0
        %3420 = vmatprep.subr.mxu0 0.0
        %3421 = vmatpush1.msra.mxu0 0.0
        %3422 = vmatprep.subr.mxu0 0.0
        %3423 = vmatpush1.msra.mxu0 0.0
        %3424 = vmatprep.subr.mxu0 0.0
        %3425 = vmatpush1.msra.mxu0 0.0
        %3426 = vmatprep.subr.mxu0 0.0
        %3427 = vmatpush1.msra.mxu0 0.0
        %3428 = vmatprep.subr.mxu0 0.0
        %3429 = vmatpush1.msra.mxu0 0.0
        %3430 = vmatprep.subr.mxu0 0.0
        %3431 = vmatpush1.msra.mxu0 0.0
        %3432 = vmatprep.subr.mxu0 0.0
        %3433 = vmatpush1.msra.mxu0 0.0
        %3434 = vmatprep.mubr.f32.mxu0 0.0
        %3435 = vmatmul.mubr.f32.gmra.mrb[0].mxu0 %v3297
        %v3436 = vpop.f32.mrb[0].mxu0
        %v3437 = vadd.f32 0.0, %v3436
        %v3438 = vpop.f32.mrb[0].mxu0
        %3439 = vdwg.mxu0
        %v3441 = vsel %vm2540, %v3294, 0
        %3443 = vmatprep.subr.mxu0 %v3117
        %3444 = vmatpush1.msra.mxu0 %v3116
        %3445 = vmatprep.subr.mxu0 %v3120
        %3446 = vmatpush1.msra.mxu0 %v3119
        %3447 = vmatprep.subr.mxu0 0.0
        %3448 = vmatpush1.msra.mxu0 0.0
        %3449 = vmatprep.subr.mxu0 0.0
        %3450 = vmatpush1.msra.mxu0 0.0
        %3451 = vmatprep.subr.mxu0 0.0
        %3452 = vmatpush1.msra.mxu0 0.0
        %3453 = vmatprep.subr.mxu0 0.0
        %3454 = vmatpush1.msra.mxu0 0.0
        %3455 = vmatprep.subr.mxu0 0.0
        %3456 = vmatpush1.msra.mxu0 0.0
        %3457 = vmatprep.subr.mxu0 0.0
        %3458 = vmatpush1.msra.mxu0 0.0
        %3459 = vmatprep.subr.mxu0 0.0
        %3460 = vmatpush1.msra.mxu0 0.0
        %3461 = vmatprep.subr.mxu0 0.0
        %3462 = vmatpush1.msra.mxu0 0.0
        %3463 = vmatprep.subr.mxu0 0.0
        %3464 = vmatpush1.msra.mxu0 0.0
        %3465 = vmatprep.subr.mxu0 0.0
        %3466 = vmatpush1.msra.mxu0 0.0
        %3467 = vmatprep.subr.mxu0 0.0
        %3468 = vmatpush1.msra.mxu0 0.0
        %3469 = vmatprep.subr.mxu0 0.0
        %3470 = vmatpush1.msra.mxu0 0.0
        %3471 = vmatprep.subr.mxu0 0.0
        %3472 = vmatpush1.msra.mxu0 0.0
        %3473 = vmatprep.subr.mxu0 0.0
        %3474 = vmatpush1.msra.mxu0 0.0
        %3475 = vmatprep.subr.mxu0 0.0
        %3476 = vmatpush1.msra.mxu0 0.0
        %3477 = vmatprep.subr.mxu0 0.0
        %3478 = vmatpush1.msra.mxu0 0.0
        %3479 = vmatprep.subr.mxu0 0.0
        %3480 = vmatpush1.msra.mxu0 0.0
        %3481 = vmatprep.subr.mxu0 0.0
        %3482 = vmatpush1.msra.mxu0 0.0
        %3483 = vmatprep.subr.mxu0 0.0
        %3484 = vmatpush1.msra.mxu0 0.0
        %3485 = vmatprep.subr.mxu0 0.0
        %3486 = vmatpush1.msra.mxu0 0.0
        %3487 = vmatprep.subr.mxu0 0.0
        %3488 = vmatpush1.msra.mxu0 0.0
        %3489 = vmatprep.subr.mxu0 0.0
        %3490 = vmatpush1.msra.mxu0 0.0
        %3491 = vmatprep.subr.mxu0 0.0
        %3492 = vmatpush1.msra.mxu0 0.0
        %3493 = vmatprep.subr.mxu0 0.0
        %3494 = vmatpush1.msra.mxu0 0.0
        %3495 = vmatprep.subr.mxu0 0.0
        %3496 = vmatpush1.msra.mxu0 0.0
        %3497 = vmatprep.subr.mxu0 0.0
        %3498 = vmatpush1.msra.mxu0 0.0
        %3499 = vmatprep.subr.mxu0 0.0
        %3500 = vmatpush1.msra.mxu0 0.0
        %3501 = vmatprep.subr.mxu0 0.0
        %3502 = vmatpush1.msra.mxu0 0.0
        %3503 = vmatprep.subr.mxu0 0.0
        %3504 = vmatpush1.msra.mxu0 0.0
        %3505 = vmatprep.subr.mxu0 0.0
        %3506 = vmatpush1.msra.mxu0 0.0
        %3507 = vmatprep.mubr.f32.mxu0 0.0
        %3508 = vmatmul.mubr.f32.gmra.mrb[0].mxu0 %v3441
        %v3509 = vpop.f32.mrb[0].mxu0
        %v3510 = vadd.f32 %v3366, %v3509
        %v3511 = vpop.f32.mrb[0].mxu0
        %v3512 = vadd.f32 %v3368, %v3511
        %3513 = vdwg.mxu0
        %3514 = vmatprep.subr.mxu0 0.0
        %3515 = vmatpush1.msra.mxu0 %v3118
        %3516 = vmatprep.subr.mxu0 0.0
        %3517 = vmatpush1.msra.mxu0 %v3121
        %3518 = vmatprep.subr.mxu0 0.0
        %3519 = vmatpush1.msra.mxu0 0.0
        %3520 = vmatprep.subr.mxu0 0.0
        %3521 = vmatpush1.msra.mxu0 0.0
        %3522 = vmatprep.subr.mxu0 0.0
        %3523 = vmatpush1.msra.mxu0 0.0
        %3524 = vmatprep.subr.mxu0 0.0
        %3525 = vmatpush1.msra.mxu0 0.0
        %3526 = vmatprep.subr.mxu0 0.0
        %3527 = vmatpush1.msra.mxu0 0.0
        %3528 = vmatprep.subr.mxu0 0.0
        %3529 = vmatpush1.msra.mxu0 0.0
        %3530 = vmatprep.subr.mxu0 0.0
        %3531 = vmatpush1.msra.mxu0 0.0
        %3532 = vmatprep.subr.mxu0 0.0
        %3533 = vmatpush1.msra.mxu0 0.0
        %3534 = vmatprep.subr.mxu0 0.0
        %3535 = vmatpush1.msra.mxu0 0.0
        %3536 = vmatprep.subr.mxu0 0.0
        %3537 = vmatpush1.msra.mxu0 0.0
        %3538 = vmatprep.subr.mxu0 0.0
        %3539 = vmatpush1.msra.mxu0 0.0
        %3540 = vmatprep.subr.mxu0 0.0
        %3541 = vmatpush1.msra.mxu0 0.0
        %3542 = vmatprep.subr.mxu0 0.0
        %3543 = vmatpush1.msra.mxu0 0.0
        %3544 = vmatprep.subr.mxu0 0.0
        %3545 = vmatpush1.msra.mxu0 0.0
        %3546 = vmatprep.subr.mxu0 0.0
        %3547 = vmatpush1.msra.mxu0 0.0
        %3548 = vmatprep.subr.mxu0 0.0
        %3549 = vmatpush1.msra.mxu0 0.0
        %3550 = vmatprep.subr.mxu0 0.0
        %3551 = vmatpush1.msra.mxu0 0.0
        %3552 = vmatprep.subr.mxu0 0.0
        %3553 = vmatpush1.msra.mxu0 0.0
        %3554 = vmatprep.subr.mxu0 0.0
        %3555 = vmatpush1.msra.mxu0 0.0
        %3556 = vmatprep.subr.mxu0 0.0
        %3557 = vmatpush1.msra.mxu0 0.0
        %3558 = vmatprep.subr.mxu0 0.0
        %3559 = vmatpush1.msra.mxu0 0.0
        %3560 = vmatprep.subr.mxu0 0.0
        %3561 = vmatpush1.msra.mxu0 0.0
        %3562 = vmatprep.subr.mxu0 0.0
        %3563 = vmatpush1.msra.mxu0 0.0
        %3564 = vmatprep.subr.mxu0 0.0
        %3565 = vmatpush1.msra.mxu0 0.0
        %3566 = vmatprep.subr.mxu0 0.0
        %3567 = vmatpush1.msra.mxu0 0.0
        %3568 = vmatprep.subr.mxu0 0.0
        %3569 = vmatpush1.msra.mxu0 0.0
        %3570 = vmatprep.subr.mxu0 0.0
        %3571 = vmatpush1.msra.mxu0 0.0
        %3572 = vmatprep.subr.mxu0 0.0
        %3573 = vmatpush1.msra.mxu0 0.0
        %3574 = vmatprep.subr.mxu0 0.0
        %3575 = vmatpush1.msra.mxu0 0.0
        %3576 = vmatprep.subr.mxu0 0.0
        %3577 = vmatpush1.msra.mxu0 0.0
        %3578 = vmatprep.mubr.f32.mxu0 0.0
        %3579 = vmatmul.mubr.f32.gmra.mrb[0].mxu0 %v3441
        %v3580 = vpop.f32.mrb[0].mxu0
        %v3581 = vadd.f32 %v3437, %v3580
        %v3582 = vpop.f32.mrb[0].mxu0
        %3583 = vdwg.mxu0
        %v3584 = vld [vmem:[%s10] sm:$0xff]
        %3586 = vset.pattern.permute.xlu0 0
        %3587 = vperm.xlu0 %3586, %v3584
        %v3588 = vpop.permute.xlu0 %3587
        %v3590 = vadd.f32 %v3510, %v3588
        %v3591 = vadd.f32 %v3512, %v3588
        %v3592 = vadd.f32 %v3581, %v3588
        %v3593 = vsub.f32 %v601, %v3590
        %v3594 = vsub.f32 %v602, %v3591
        %v3595 = vsub.f32 %v603, %v3592
        %v3596 = vld [vmem:[%s11] sm:$0xff]
        %v3597 = vld [vmem:[%s11 + $0x8] sm:$0xff]
        %v3598 = vld [vmem:[%s12] sm:$0xff]
        %v3599 = vld [vmem:[%s12 + $0x8] sm:$0xff]
        %3601 = vset.pattern.permute.xlu0 0
        %3602 = vperm.xlu0 %3601, %v3598
        %v3603 = vpop.permute.xlu0 %3602
        %3606 = vset.pattern.permute.xlu0 0
        %3607 = vperm.xlu0 %3606, %v3599
        %v3608 = vpop.permute.xlu0 %3607
        %v3611 = vsel %vm2374, %v3596, 0
        %v3614 = vsel %vm2374, %v3597, 0
        %3616 = vmatprep.subr.mxu0 %v3594
        %3617 = vmatpush1.msra.mxu0 %v3593
        %3618 = vmatprep.subr.mxu0 0.0
        %3619 = vmatpush1.msra.mxu0 0.0
        %3620 = vmatprep.subr.mxu0 0.0
        %3621 = vmatpush1.msra.mxu0 0.0
        %3622 = vmatprep.subr.mxu0 0.0
        %3623 = vmatpush1.msra.mxu0 0.0
        %3624 = vmatprep.subr.mxu0 0.0
        %3625 = vmatpush1.msra.mxu0 0.0
        %3626 = vmatprep.subr.mxu0 0.0
        %3627 = vmatpush1.msra.mxu0 0.0
        %3628 = vmatprep.subr.mxu0 0.0
        %3629 = vmatpush1.msra.mxu0 0.0
        %3630 = vmatprep.subr.mxu0 0.0
        %3631 = vmatpush1.msra.mxu0 0.0
        %3632 = vmatprep.subr.mxu0 0.0
        %3633 = vmatpush1.msra.mxu0 0.0
        %3634 = vmatprep.subr.mxu0 0.0
        %3635 = vmatpush1.msra.mxu0 0.0
        %3636 = vmatprep.subr.mxu0 0.0
        %3637 = vmatpush1.msra.mxu0 0.0
        %3638 = vmatprep.subr.mxu0 0.0
        %3639 = vmatpush1.msra.mxu0 0.0
        %3640 = vmatprep.subr.mxu0 0.0
        %3641 = vmatpush1.msra.mxu0 0.0
        %3642 = vmatprep.subr.mxu0 0.0
        %3643 = vmatpush1.msra.mxu0 0.0
        %3644 = vmatprep.subr.mxu0 0.0
        %3645 = vmatpush1.msra.mxu0 0.0
        %3646 = vmatprep.subr.mxu0 0.0
        %3647 = vmatpush1.msra.mxu0 0.0
        %3648 = vmatprep.subr.mxu0 0.0
        %3649 = vmatpush1.msra.mxu0 0.0
        %3650 = vmatprep.subr.mxu0 0.0
        %3651 = vmatpush1.msra.mxu0 0.0
        %3652 = vmatprep.subr.mxu0 0.0
        %3653 = vmatpush1.msra.mxu0 0.0
        %3654 = vmatprep.subr.mxu0 0.0
        %3655 = vmatpush1.msra.mxu0 0.0
        %3656 = vmatprep.subr.mxu0 0.0
        %3657 = vmatpush1.msra.mxu0 0.0
        %3658 = vmatprep.subr.mxu0 0.0
        %3659 = vmatpush1.msra.mxu0 0.0
        %3660 = vmatprep.subr.mxu0 0.0
        %3661 = vmatpush1.msra.mxu0 0.0
        %3662 = vmatprep.subr.mxu0 0.0
        %3663 = vmatpush1.msra.mxu0 0.0
        %3664 = vmatprep.subr.mxu0 0.0
        %3665 = vmatpush1.msra.mxu0 0.0
        %3666 = vmatprep.subr.mxu0 0.0
        %3667 = vmatpush1.msra.mxu0 0.0
        %3668 = vmatprep.subr.mxu0 0.0
        %3669 = vmatpush1.msra.mxu0 0.0
        %3670 = vmatprep.subr.mxu0 0.0
        %3671 = vmatpush1.msra.mxu0 0.0
        %3672 = vmatprep.subr.mxu0 0.0
        %3673 = vmatpush1.msra.mxu0 0.0
        %3674 = vmatprep.subr.mxu0 0.0
        %3675 = vmatpush1.msra.mxu0 0.0
        %3676 = vmatprep.subr.mxu0 0.0
        %3677 = vmatpush1.msra.mxu0 0.0
        %3678 = vmatprep.subr.mxu0 0.0
        %3679 = vmatpush1.msra.mxu0 0.0
        %3680 = vmatprep.mubr.f32.mxu0 0.0
        %3681 = vmatmul.mubr.f32.gmra.mrb[0].mxu0 %v3611
        %v3682 = vpop.f32.mrb[0].mxu0
        %v3683 = vadd.f32 %v3603, %v3682
        %v3684 = vpop.f32.mrb[0].mxu0
        %v3685 = vadd.f32 %v3603, %v3684
        %3686 = vmatprep.mubr.f32.mxu0 0.0
        %3687 = vmatmul.mubr.f32.gmra.mrb[0].mxu0 %v3614
        %v3688 = vpop.f32.mrb[0].mxu0
        %v3689 = vadd.f32 %v3608, %v3688
        %v3690 = vpop.f32.mrb[0].mxu0
        %v3691 = vadd.f32 %v3608, %v3690
        %3692 = vdwg.mxu0
        %3693 = vmatprep.subr.mxu0 0.0
        %3694 = vmatpush1.msra.mxu0 %v3595
        %3695 = vmatprep.subr.mxu0 0.0
        %3696 = vmatpush1.msra.mxu0 0.0
        %3697 = vmatprep.subr.mxu0 0.0
        %3698 = vmatpush1.msra.mxu0 0.0
        %3699 = vmatprep.subr.mxu0 0.0
        %3700 = vmatpush1.msra.mxu0 0.0
        %3701 = vmatprep.subr.mxu0 0.0
        %3702 = vmatpush1.msra.mxu0 0.0
        %3703 = vmatprep.subr.mxu0 0.0
        %3704 = vmatpush1.msra.mxu0 0.0
        %3705 = vmatprep.subr.mxu0 0.0
        %3706 = vmatpush1.msra.mxu0 0.0
        %3707 = vmatprep.subr.mxu0 0.0
        %3708 = vmatpush1.msra.mxu0 0.0
        %3709 = vmatprep.subr.mxu0 0.0
        %3710 = vmatpush1.msra.mxu0 0.0
        %3711 = vmatprep.subr.mxu0 0.0
        %3712 = vmatpush1.msra.mxu0 0.0
        %3713 = vmatprep.subr.mxu0 0.0
        %3714 = vmatpush1.msra.mxu0 0.0
        %3715 = vmatprep.subr.mxu0 0.0
        %3716 = vmatpush1.msra.mxu0 0.0
        %3717 = vmatprep.subr.mxu0 0.0
        %3718 = vmatpush1.msra.mxu0 0.0
        %3719 = vmatprep.subr.mxu0 0.0
        %3720 = vmatpush1.msra.mxu0 0.0
        %3721 = vmatprep.subr.mxu0 0.0
        %3722 = vmatpush1.msra.mxu0 0.0
        %3723 = vmatprep.subr.mxu0 0.0
        %3724 = vmatpush1.msra.mxu0 0.0
        %3725 = vmatprep.subr.mxu0 0.0
        %3726 = vmatpush1.msra.mxu0 0.0
        %3727 = vmatprep.subr.mxu0 0.0
        %3728 = vmatpush1.msra.mxu0 0.0
        %3729 = vmatprep.subr.mxu0 0.0
        %3730 = vmatpush1.msra.mxu0 0.0
        %3731 = vmatprep.subr.mxu0 0.0
        %3732 = vmatpush1.msra.mxu0 0.0
        %3733 = vmatprep.subr.mxu0 0.0
        %3734 = vmatpush1.msra.mxu0 0.0
        %3735 = vmatprep.subr.mxu0 0.0
        %3736 = vmatpush1.msra.mxu0 0.0
        %3737 = vmatprep.subr.mxu0 0.0
        %3738 = vmatpush1.msra.mxu0 0.0
        %3739 = vmatprep.subr.mxu0 0.0
        %3740 = vmatpush1.msra.mxu0 0.0
        %3741 = vmatprep.subr.mxu0 0.0
        %3742 = vmatpush1.msra.mxu0 0.0
        %3743 = vmatprep.subr.mxu0 0.0
        %3744 = vmatpush1.msra.mxu0 0.0
        %3745 = vmatprep.subr.mxu0 0.0
        %3746 = vmatpush1.msra.mxu0 0.0
        %3747 = vmatprep.subr.mxu0 0.0
        %3748 = vmatpush1.msra.mxu0 0.0
        %3749 = vmatprep.subr.mxu0 0.0
        %3750 = vmatpush1.msra.mxu0 0.0
        %3751 = vmatprep.subr.mxu0 0.0
        %3752 = vmatpush1.msra.mxu0 0.0
        %3753 = vmatprep.subr.mxu0 0.0
        %3754 = vmatpush1.msra.mxu0 0.0
        %3755 = vmatprep.subr.mxu0 0.0
        %3756 = vmatpush1.msra.mxu0 0.0
        %3757 = vmatprep.mubr.f32.mxu0 0.0
        %3758 = vmatmul.mubr.f32.gmra.mrb[0].mxu0 %v3611
        %v3759 = vpop.f32.mrb[0].mxu0
        %v3760 = vadd.f32 %v3603, %v3759
        %v3761 = vpop.f32.mrb[0].mxu0
        %3762 = vmatprep.mubr.f32.mxu0 0.0
        %3763 = vmatmul.mubr.f32.gmra.mrb[0].mxu0 %v3614
        %v3764 = vpop.f32.mrb[0].mxu0
        %v3765 = vadd.f32 %v3608, %v3764
        %v3766 = vpop.f32.mrb[0].mxu0
        %3767 = vdwg.mxu0
        %v3768 = vld [vmem:[%s13] sm:$0xff]
        %v3769 = vld [vmem:[%s14] sm:$0xff]
        %v3771 = vsel %vm2540, %v3769, 0
        %3773 = vmatprep.subr.mxu0 %v3211
        %3774 = vmatpush1.msra.mxu0 %v3209
        %3775 = vmatprep.subr.mxu0 %v3217
        %3776 = vmatpush1.msra.mxu0 %v3215
        %3777 = vmatprep.subr.mxu0 0.0
        %3778 = vmatpush1.msra.mxu0 0.0
        %3779 = vmatprep.subr.mxu0 0.0
        %3780 = vmatpush1.msra.mxu0 0.0
        %3781 = vmatprep.subr.mxu0 0.0
        %3782 = vmatpush1.msra.mxu0 0.0
        %3783 = vmatprep.subr.mxu0 0.0
        %3784 = vmatpush1.msra.mxu0 0.0
        %3785 = vmatprep.subr.mxu0 0.0
        %3786 = vmatpush1.msra.mxu0 0.0
        %3787 = vmatprep.subr.mxu0 0.0
        %3788 = vmatpush1.msra.mxu0 0.0
        %3789 = vmatprep.subr.mxu0 0.0
        %3790 = vmatpush1.msra.mxu0 0.0
        %3791 = vmatprep.subr.mxu0 0.0
        %3792 = vmatpush1.msra.mxu0 0.0
        %3793 = vmatprep.subr.mxu0 0.0
        %3794 = vmatpush1.msra.mxu0 0.0
        %3795 = vmatprep.subr.mxu0 0.0
        %3796 = vmatpush1.msra.mxu0 0.0
        %3797 = vmatprep.subr.mxu0 0.0
        %3798 = vmatpush1.msra.mxu0 0.0
        %3799 = vmatprep.subr.mxu0 0.0
        %3800 = vmatpush1.msra.mxu0 0.0
        %3801 = vmatprep.subr.mxu0 0.0
        %3802 = vmatpush1.msra.mxu0 0.0
        %3803 = vmatprep.subr.mxu0 0.0
        %3804 = vmatpush1.msra.mxu0 0.0
        %3805 = vmatprep.subr.mxu0 0.0
        %3806 = vmatpush1.msra.mxu0 0.0
        %3807 = vmatprep.subr.mxu0 0.0
        %3808 = vmatpush1.msra.mxu0 0.0
        %3809 = vmatprep.subr.mxu0 0.0
        %3810 = vmatpush1.msra.mxu0 0.0
        %3811 = vmatprep.subr.mxu0 0.0
        %3812 = vmatpush1.msra.mxu0 0.0
        %3813 = vmatprep.subr.mxu0 0.0
        %3814 = vmatpush1.msra.mxu0 0.0
        %3815 = vmatprep.subr.mxu0 0.0
        %3816 = vmatpush1.msra.mxu0 0.0
        %3817 = vmatprep.subr.mxu0 0.0
        %3818 = vmatpush1.msra.mxu0 0.0
        %3819 = vmatprep.subr.mxu0 0.0
        %3820 = vmatpush1.msra.mxu0 0.0
        %3821 = vmatprep.subr.mxu0 0.0
        %3822 = vmatpush1.msra.mxu0 0.0
        %3823 = vmatprep.subr.mxu0 0.0
        %3824 = vmatpush1.msra.mxu0 0.0
        %3825 = vmatprep.subr.mxu0 0.0
        %3826 = vmatpush1.msra.mxu0 0.0
        %3827 = vmatprep.subr.mxu0 0.0
        %3828 = vmatpush1.msra.mxu0 0.0
        %3829 = vmatprep.subr.mxu0 0.0
        %3830 = vmatpush1.msra.mxu0 0.0
        %3831 = vmatprep.subr.mxu0 0.0
        %3832 = vmatpush1.msra.mxu0 0.0
        %3833 = vmatprep.subr.mxu0 0.0
        %3834 = vmatpush1.msra.mxu0 0.0
        %3835 = vmatprep.subr.mxu0 0.0
        %3836 = vmatpush1.msra.mxu0 0.0
        %3837 = vmatprep.mubr.f32.mxu0 0.0
        %3838 = vmatmul.mubr.f32.gmra.mrb[0].mxu0 %v3771
        %v3839 = vpop.f32.mrb[0].mxu0
        %v3840 = vadd.f32 0.0, %v3839
        %v3841 = vpop.f32.mrb[0].mxu0
        %v3842 = vadd.f32 0.0, %v3841
        %3843 = vdwg.mxu0
        %3844 = vmatprep.subr.mxu0 0.0
        %3845 = vmatpush1.msra.mxu0 %v3286
        %3846 = vmatprep.subr.mxu0 0.0
        %3847 = vmatpush1.msra.mxu0 %v3291
        %3848 = vmatprep.subr.mxu0 0.0
        %3849 = vmatpush1.msra.mxu0 0.0
        %3850 = vmatprep.subr.mxu0 0.0
        %3851 = vmatpush1.msra.mxu0 0.0
        %3852 = vmatprep.subr.mxu0 0.0
        %3853 = vmatpush1.msra.mxu0 0.0
        %3854 = vmatprep.subr.mxu0 0.0
        %3855 = vmatpush1.msra.mxu0 0.0
        %3856 = vmatprep.subr.mxu0 0.0
        %3857 = vmatpush1.msra.mxu0 0.0
        %3858 = vmatprep.subr.mxu0 0.0
        %3859 = vmatpush1.msra.mxu0 0.0
        %3860 = vmatprep.subr.mxu0 0.0
        %3861 = vmatpush1.msra.mxu0 0.0
        %3862 = vmatprep.subr.mxu0 0.0
        %3863 = vmatpush1.msra.mxu0 0.0
        %3864 = vmatprep.subr.mxu0 0.0
        %3865 = vmatpush1.msra.mxu0 0.0
        %3866 = vmatprep.subr.mxu0 0.0
        %3867 = vmatpush1.msra.mxu0 0.0
        %3868 = vmatprep.subr.mxu0 0.0
        %3869 = vmatpush1.msra.mxu0 0.0
        %3870 = vmatprep.subr.mxu0 0.0
        %3871 = vmatpush1.msra.mxu0 0.0
        %3872 = vmatprep.subr.mxu0 0.0
        %3873 = vmatpush1.msra.mxu0 0.0
        %3874 = vmatprep.subr.mxu0 0.0
        %3875 = vmatpush1.msra.mxu0 0.0
        %3876 = vmatprep.subr.mxu0 0.0
        %3877 = vmatpush1.msra.mxu0 0.0
        %3878 = vmatprep.subr.mxu0 0.0
        %3879 = vmatpush1.msra.mxu0 0.0
        %3880 = vmatprep.subr.mxu0 0.0
        %3881 = vmatpush1.msra.mxu0 0.0
        %3882 = vmatprep.subr.mxu0 0.0
        %3883 = vmatpush1.msra.mxu0 0.0
        %3884 = vmatprep.subr.mxu0 0.0
        %3885 = vmatpush1.msra.mxu0 0.0
        %3886 = vmatprep.subr.mxu0 0.0
        %3887 = vmatpush1.msra.mxu0 0.0
        %3888 = vmatprep.subr.mxu0 0.0
        %3889 = vmatpush1.msra.mxu0 0.0
        %3890 = vmatprep.subr.mxu0 0.0
        %3891 = vmatpush1.msra.mxu0 0.0
        %3892 = vmatprep.subr.mxu0 0.0
        %3893 = vmatpush1.msra.mxu0 0.0
        %3894 = vmatprep.subr.mxu0 0.0
        %3895 = vmatpush1.msra.mxu0 0.0
        %3896 = vmatprep.subr.mxu0 0.0
        %3897 = vmatpush1.msra.mxu0 0.0
        %3898 = vmatprep.subr.mxu0 0.0
        %3899 = vmatpush1.msra.mxu0 0.0
        %3900 = vmatprep.subr.mxu0 0.0
        %3901 = vmatpush1.msra.mxu0 0.0
        %3902 = vmatprep.subr.mxu0 0.0
        %3903 = vmatpush1.msra.mxu0 0.0
        %3904 = vmatprep.subr.mxu0 0.0
        %3905 = vmatpush1.msra.mxu0 0.0
        %3906 = vmatprep.subr.mxu0 0.0
        %3907 = vmatpush1.msra.mxu0 0.0
        %3908 = vmatprep.mubr.f32.mxu0 0.0
        %3909 = vmatmul.mubr.f32.gmra.mrb[0].mxu0 %v3771
        %v3910 = vpop.f32.mrb[0].mxu0
        %v3911 = vadd.f32 0.0, %v3910
        %v3912 = vpop.f32.mrb[0].mxu0
        %3913 = vdwg.mxu0
        %v3915 = vsel %vm2540, %v3768, 0
        %3917 = vmatprep.subr.mxu0 %v3117
        %3918 = vmatpush1.msra.mxu0 %v3116
        %3919 = vmatprep.subr.mxu0 %v3120
        %3920 = vmatpush1.msra.mxu0 %v3119
        %3921 = vmatprep.subr.mxu0 0.0
        %3922 = vmatpush1.msra.mxu0 0.0
        %3923 = vmatprep.subr.mxu0 0.0
        %3924 = vmatpush1.msra.mxu0 0.0
        %3925 = vmatprep.subr.mxu0 0.0
        %3926 = vmatpush1.msra.mxu0 0.0
        %3927 = vmatprep.subr.mxu0 0.0
        %3928 = vmatpush1.msra.mxu0 0.0
        %3929 = vmatprep.subr.mxu0 0.0
        %3930 = vmatpush1.msra.mxu0 0.0
        %3931 = vmatprep.subr.mxu0 0.0
        %3932 = vmatpush1.msra.mxu0 0.0
        %3933 = vmatprep.subr.mxu0 0.0
        %3934 = vmatpush1.msra.mxu0 0.0
        %3935 = vmatprep.subr.mxu0 0.0
        %3936 = vmatpush1.msra.mxu0 0.0
        %3937 = vmatprep.subr.mxu0 0.0
        %3938 = vmatpush1.msra.mxu0 0.0
        %3939 = vmatprep.subr.mxu0 0.0
        %3940 = vmatpush1.msra.mxu0 0.0
        %3941 = vmatprep.subr.mxu0 0.0
        %3942 = vmatpush1.msra.mxu0 0.0
        %3943 = vmatprep.subr.mxu0 0.0
        %3944 = vmatpush1.msra.mxu0 0.0
        %3945 = vmatprep.subr.mxu0 0.0
        %3946 = vmatpush1.msra.mxu0 0.0
        %3947 = vmatprep.subr.mxu0 0.0
        %3948 = vmatpush1.msra.mxu0 0.0
        %3949 = vmatprep.subr.mxu0 0.0
        %3950 = vmatpush1.msra.mxu0 0.0
        %3951 = vmatprep.subr.mxu0 0.0
        %3952 = vmatpush1.msra.mxu0 0.0
        %3953 = vmatprep.subr.mxu0 0.0
        %3954 = vmatpush1.msra.mxu0 0.0
        %3955 = vmatprep.subr.mxu0 0.0
        %3956 = vmatpush1.msra.mxu0 0.0
        %3957 = vmatprep.subr.mxu0 0.0
        %3958 = vmatpush1.msra.mxu0 0.0
        %3959 = vmatprep.subr.mxu0 0.0
        %3960 = vmatpush1.msra.mxu0 0.0
        %3961 = vmatprep.subr.mxu0 0.0
        %3962 = vmatpush1.msra.mxu0 0.0
        %3963 = vmatprep.subr.mxu0 0.0
        %3964 = vmatpush1.msra.mxu0 0.0
        %3965 = vmatprep.subr.mxu0 0.0
        %3966 = vmatpush1.msra.mxu0 0.0
        %3967 = vmatprep.subr.mxu0 0.0
        %3968 = vmatpush1.msra.mxu0 0.0
        %3969 = vmatprep.subr.mxu0 0.0
        %3970 = vmatpush1.msra.mxu0 0.0
        %3971 = vmatprep.subr.mxu0 0.0
        %3972 = vmatpush1.msra.mxu0 0.0
        %3973 = vmatprep.subr.mxu0 0.0
        %3974 = vmatpush1.msra.mxu0 0.0
        %3975 = vmatprep.subr.mxu0 0.0
        %3976 = vmatpush1.msra.mxu0 0.0
        %3977 = vmatprep.subr.mxu0 0.0
        %3978 = vmatpush1.msra.mxu0 0.0
        %3979 = vmatprep.subr.mxu0 0.0
        %3980 = vmatpush1.msra.mxu0 0.0
        %3981 = vmatprep.mubr.f32.mxu0 0.0
        %3982 = vmatmul.mubr.f32.gmra.mrb[0].mxu0 %v3915
        %v3983 = vpop.f32.mrb[0].mxu0
        %v3984 = vadd.f32 %v3840, %v3983
        %v3985 = vpop.f32.mrb[0].mxu0
        %v3986 = vadd.f32 %v3842, %v3985
        %3987 = vdwg.mxu0
        %3988 = vmatprep.subr.mxu0 0.0
        %3989 = vmatpush1.msra.mxu0 %v3118
        %3990 = vmatprep.subr.mxu0 0.0
        %3991 = vmatpush1.msra.mxu0 %v3121
        %3992 = vmatprep.subr.mxu0 0.0
        %3993 = vmatpush1.msra.mxu0 0.0
        %3994 = vmatprep.subr.mxu0 0.0
        %3995 = vmatpush1.msra.mxu0 0.0
        %3996 = vmatprep.subr.mxu0 0.0
        %3997 = vmatpush1.msra.mxu0 0.0
        %3998 = vmatprep.subr.mxu0 0.0
        %3999 = vmatpush1.msra.mxu0 0.0
        %4000 = vmatprep.subr.mxu0 0.0
        %4001 = vmatpush1.msra.mxu0 0.0
        %4002 = vmatprep.subr.mxu0 0.0
        %4003 = vmatpush1.msra.mxu0 0.0
        %4004 = vmatprep.subr.mxu0 0.0
        %4005 = vmatpush1.msra.mxu0 0.0
        %4006 = vmatprep.subr.mxu0 0.0
        %4007 = vmatpush1.msra.mxu0 0.0
        %4008 = vmatprep.subr.mxu0 0.0
        %4009 = vmatpush1.msra.mxu0 0.0
        %4010 = vmatprep.subr.mxu0 0.0
        %4011 = vmatpush1.msra.mxu0 0.0
        %4012 = vmatprep.subr.mxu0 0.0
        %4013 = vmatpush1.msra.mxu0 0.0
        %4014 = vmatprep.subr.mxu0 0.0
        %4015 = vmatpush1.msra.mxu0 0.0
        %4016 = vmatprep.subr.mxu0 0.0
        %4017 = vmatpush1.msra.mxu0 0.0
        %4018 = vmatprep.subr.mxu0 0.0
        %4019 = vmatpush1.msra.mxu0 0.0
        %4020 = vmatprep.subr.mxu0 0.0
        %4021 = vmatpush1.msra.mxu0 0.0
        %4022 = vmatprep.subr.mxu0 0.0
        %4023 = vmatpush1.msra.mxu0 0.0
        %4024 = vmatprep.subr.mxu0 0.0
        %4025 = vmatpush1.msra.mxu0 0.0
        %4026 = vmatprep.subr.mxu0 0.0
        %4027 = vmatpush1.msra.mxu0 0.0
        %4028 = vmatprep.subr.mxu0 0.0
        %4029 = vmatpush1.msra.mxu0 0.0
        %4030 = vmatprep.subr.mxu0 0.0
        %4031 = vmatpush1.msra.mxu0 0.0
        %4032 = vmatprep.subr.mxu0 0.0
        %4033 = vmatpush1.msra.mxu0 0.0
        %4034 = vmatprep.subr.mxu0 0.0
        %4035 = vmatpush1.msra.mxu0 0.0
        %4036 = vmatprep.subr.mxu0 0.0
        %4037 = vmatpush1.msra.mxu0 0.0
        %4038 = vmatprep.subr.mxu0 0.0
        %4039 = vmatpush1.msra.mxu0 0.0
        %4040 = vmatprep.subr.mxu0 0.0
        %4041 = vmatpush1.msra.mxu0 0.0
        %4042 = vmatprep.subr.mxu0 0.0
        %4043 = vmatpush1.msra.mxu0 0.0
        %4044 = vmatprep.subr.mxu0 0.0
        %4045 = vmatpush1.msra.mxu0 0.0
        %4046 = vmatprep.subr.mxu0 0.0
        %4047 = vmatpush1.msra.mxu0 0.0
        %4048 = vmatprep.subr.mxu0 0.0
        %4049 = vmatpush1.msra.mxu0 0.0
        %4050 = vmatprep.subr.mxu0 0.0
        %4051 = vmatpush1.msra.mxu0 0.0
        %4052 = vmatprep.mubr.f32.mxu0 0.0
        %4053 = vmatmul.mubr.f32.gmra.mrb[0].mxu0 %v3915
        %v4054 = vpop.f32.mrb[0].mxu0
        %v4055 = vadd.f32 %v3911, %v4054
        %v4056 = vpop.f32.mrb[0].mxu0
        %4057 = vdwg.mxu0
        %v4058 = vld [vmem:[%s15] sm:$0xff]
        %v4060 = vsel %vm2540, %v4058, 0
        %4062 = vmatprep.subr.mxu0 %v3685
        %4063 = vmatpush1.msra.mxu0 %v3683
        %4064 = vmatprep.subr.mxu0 %v3691
        %4065 = vmatpush1.msra.mxu0 %v3689
        %4066 = vmatprep.subr.mxu0 0.0
        %4067 = vmatpush1.msra.mxu0 0.0
        %4068 = vmatprep.subr.mxu0 0.0
        %4069 = vmatpush1.msra.mxu0 0.0
        %4070 = vmatprep.subr.mxu0 0.0
        %4071 = vmatpush1.msra.mxu0 0.0
        %4072 = vmatprep.subr.mxu0 0.0
        %4073 = vmatpush1.msra.mxu0 0.0
        %4074 = vmatprep.subr.mxu0 0.0
        %4075 = vmatpush1.msra.mxu0 0.0
        %4076 = vmatprep.subr.mxu0 0.0
        %4077 = vmatpush1.msra.mxu0 0.0
        %4078 = vmatprep.subr.mxu0 0.0
        %4079 = vmatpush1.msra.mxu0 0.0
        %4080 = vmatprep.subr.mxu0 0.0
        %4081 = vmatpush1.msra.mxu0 0.0
        %4082 = vmatprep.subr.mxu0 0.0
        %4083 = vmatpush1.msra.mxu0 0.0
        %4084 = vmatprep.subr.mxu0 0.0
        %4085 = vmatpush1.msra.mxu0 0.0
        %4086 = vmatprep.subr.mxu0 0.0
        %4087 = vmatpush1.msra.mxu0 0.0
        %4088 = vmatprep.subr.mxu0 0.0
        %4089 = vmatpush1.msra.mxu0 0.0
        %4090 = vmatprep.subr.mxu0 0.0
        %4091 = vmatpush1.msra.mxu0 0.0
        %4092 = vmatprep.subr.mxu0 0.0
        %4093 = vmatpush1.msra.mxu0 0.0
        %4094 = vmatprep.subr.mxu0 0.0
        %4095 = vmatpush1.msra.mxu0 0.0
        %4096 = vmatprep.subr.mxu0 0.0
        %4097 = vmatpush1.msra.mxu0 0.0
        %4098 = vmatprep.subr.mxu0 0.0
        %4099 = vmatpush1.msra.mxu0 0.0
        %4100 = vmatprep.subr.mxu0 0.0
        %4101 = vmatpush1.msra.mxu0 0.0
        %4102 = vmatprep.subr.mxu0 0.0
        %4103 = vmatpush1.msra.mxu0 0.0
        %4104 = vmatprep.subr.mxu0 0.0
        %4105 = vmatpush1.msra.mxu0 0.0
        %4106 = vmatprep.subr.mxu0 0.0
        %4107 = vmatpush1.msra.mxu0 0.0
        %4108 = vmatprep.subr.mxu0 0.0
        %4109 = vmatpush1.msra.mxu0 0.0
        %4110 = vmatprep.subr.mxu0 0.0
        %4111 = vmatpush1.msra.mxu0 0.0
        %4112 = vmatprep.subr.mxu0 0.0
        %4113 = vmatpush1.msra.mxu0 0.0
        %4114 = vmatprep.subr.mxu0 0.0
        %4115 = vmatpush1.msra.mxu0 0.0
        %4116 = vmatprep.subr.mxu0 0.0
        %4117 = vmatpush1.msra.mxu0 0.0
        %4118 = vmatprep.subr.mxu0 0.0
        %4119 = vmatpush1.msra.mxu0 0.0
        %4120 = vmatprep.subr.mxu0 0.0
        %4121 = vmatpush1.msra.mxu0 0.0
        %4122 = vmatprep.subr.mxu0 0.0
        %4123 = vmatpush1.msra.mxu0 0.0
        %4124 = vmatprep.subr.mxu0 0.0
        %4125 = vmatpush1.msra.mxu0 0.0
        %4126 = vmatprep.mubr.f32.mxu0 0.0
        %4127 = vmatmul.mubr.f32.gmra.mrb[0].mxu0 %v4060
        %v4128 = vpop.f32.mrb[0].mxu0
        %v4129 = vadd.f32 0.0, %v4128
        %v4130 = vpop.f32.mrb[0].mxu0
        %v4131 = vadd.f32 0.0, %v4130
        %4132 = vdwg.mxu0
        %4133 = vmatprep.subr.mxu0 0.0
        %4134 = vmatpush1.msra.mxu0 %v3760
        %4135 = vmatprep.subr.mxu0 0.0
        %4136 = vmatpush1.msra.mxu0 %v3765
        %4137 = vmatprep.subr.mxu0 0.0
        %4138 = vmatpush1.msra.mxu0 0.0
        %4139 = vmatprep.subr.mxu0 0.0
        %4140 = vmatpush1.msra.mxu0 0.0
        %4141 = vmatprep.subr.mxu0 0.0
        %4142 = vmatpush1.msra.mxu0 0.0
        %4143 = vmatprep.subr.mxu0 0.0
        %4144 = vmatpush1.msra.mxu0 0.0
        %4145 = vmatprep.subr.mxu0 0.0
        %4146 = vmatpush1.msra.mxu0 0.0
        %4147 = vmatprep.subr.mxu0 0.0
        %4148 = vmatpush1.msra.mxu0 0.0
        %4149 = vmatprep.subr.mxu0 0.0
        %4150 = vmatpush1.msra.mxu0 0.0
        %4151 = vmatprep.subr.mxu0 0.0
        %4152 = vmatpush1.msra.mxu0 0.0
        %4153 = vmatprep.subr.mxu0 0.0
        %4154 = vmatpush1.msra.mxu0 0.0
        %4155 = vmatprep.subr.mxu0 0.0
        %4156 = vmatpush1.msra.mxu0 0.0
        %4157 = vmatprep.subr.mxu0 0.0
        %4158 = vmatpush1.msra.mxu0 0.0
        %4159 = vmatprep.subr.mxu0 0.0
        %4160 = vmatpush1.msra.mxu0 0.0
        %4161 = vmatprep.subr.mxu0 0.0
        %4162 = vmatpush1.msra.mxu0 0.0
        %4163 = vmatprep.subr.mxu0 0.0
        %4164 = vmatpush1.msra.mxu0 0.0
        %4165 = vmatprep.subr.mxu0 0.0
        %4166 = vmatpush1.msra.mxu0 0.0
        %4167 = vmatprep.subr.mxu0 0.0
        %4168 = vmatpush1.msra.mxu0 0.0
        %4169 = vmatprep.subr.mxu0 0.0
        %4170 = vmatpush1.msra.mxu0 0.0
        %4171 = vmatprep.subr.mxu0 0.0
        %4172 = vmatpush1.msra.mxu0 0.0
        %4173 = vmatprep.subr.mxu0 0.0
        %4174 = vmatpush1.msra.mxu0 0.0
        %4175 = vmatprep.subr.mxu0 0.0
        %4176 = vmatpush1.msra.mxu0 0.0
        %4177 = vmatprep.subr.mxu0 0.0
        %4178 = vmatpush1.msra.mxu0 0.0
        %4179 = vmatprep.subr.mxu0 0.0
        %4180 = vmatpush1.msra.mxu0 0.0
        %4181 = vmatprep.subr.mxu0 0.0
        %4182 = vmatpush1.msra.mxu0 0.0
        %4183 = vmatprep.subr.mxu0 0.0
        %4184 = vmatpush1.msra.mxu0 0.0
        %4185 = vmatprep.subr.mxu0 0.0
        %4186 = vmatpush1.msra.mxu0 0.0
        %4187 = vmatprep.subr.mxu0 0.0
        %4188 = vmatpush1.msra.mxu0 0.0
        %4189 = vmatprep.subr.mxu0 0.0
        %4190 = vmatpush1.msra.mxu0 0.0
        %4191 = vmatprep.subr.mxu0 0.0
        %4192 = vmatpush1.msra.mxu0 0.0
        %4193 = vmatprep.subr.mxu0 0.0
        %4194 = vmatpush1.msra.mxu0 0.0
        %4195 = vmatprep.subr.mxu0 0.0
        %4196 = vmatpush1.msra.mxu0 0.0
        %4197 = vmatprep.mubr.f32.mxu0 0.0
        %4198 = vmatmul.mubr.f32.gmra.mrb[0].mxu0 %v4060
        %v4199 = vpop.f32.mrb[0].mxu0
        %v4200 = vadd.f32 0.0, %v4199
        %v4201 = vpop.f32.mrb[0].mxu0
        %4202 = vdwg.mxu0
        %v4203 = vadd.f32 %v3984, %v4129
        %v4204 = vadd.f32 %v3986, %v4131
        %v4205 = vadd.f32 %v4055, %v4200
        %v4206 = vld [vmem:[%s16] sm:$0xff]
        %4208 = vset.pattern.permute.xlu0 0
        %4209 = vperm.xlu0 %4208, %v4206
        %v4210 = vpop.permute.xlu0 %4209
        %v4212 = vadd.f32 %v4203, %v4210
        %v4213 = vadd.f32 %v4204, %v4210
        %v4214 = vadd.f32 %v4205, %v4210
        %4215 = vst [vmem:[%s587] sm:$0xff] %v4212
        %4216 = vst [vmem:[%s587 + $0x8] sm:$0xff] %v4213
        %4217 = vst [vmem:[%s587 + $0x10] sm:$0xff] %v4214
        %v4221 = vcombine.low %v3075, %v3077
        %v4223 = vunpack.c.l.s4 1983009808
        %v4224 = vunpack.c.0.s8 %v4223
        %v4225 = vlaneseq
        %v4226 = vshrl.u32 %v4225, 7
        %v4227 = vsub.s32 %v4224, %v4226
        %v4228 = vrot.slane %v4221, %v4227
        %v4230 = vunpack.c.l.s4 1983009808
        %v4231 = vunpack.c.0.s8 %v4230
        %v4232 = vlaneseq
        %v4233 = vshrl.u32 %v4232, 7
        %v4234 = vsub.s32 %v4231, %v4233
        %v4235 = vrot.slane %v3079, %v4234
        %v4236 = vcombine.low %v4228, %v4235
        %4238 = vst [vmem:[%s594] sm:$0x3f] %v4236
        %s4239 = sand.u32 %s407, 1
        %s4240 = scalar_lea.sflag [#allocation4], %s4239
        %s4241 = sand.u32 %s407, 1
        %s4242 = smul.addr %s4241, 24
        %s4243 = scalar_lea.vmem [#allocation5], %s4242
        %s4244 = sand.u32 %s433, 1
        %s4245 = scalar_lea.sflag [#allocation7], %s4244
        %s4246 = sand.u32 %s433, 1
        %s4247 = smul.addr %s4246, 6
        %s4248 = scalar_lea.vmem [#allocation6], %s4247
        // Predicated region
        $region93: #{tpu_custom_call.1} parent=87 // pred_check
          %p4249 = pneg %p417
        $region94: #{tpu_custom_call.1} parent=87 // pred_check_branch
          %4251 = sbr.rel (%p4249) target = $region96
        $region95: #{tpu_custom_call.1} parent=87 // pred_region
          %s4253 = ssub.s32 384, 384
          %4254 = vsyncadd %s4240, %s4253
          %s4255 = smul.addr %s37, 3
          %s4256 = smul.addr %s4255, 128
          %s4257 = scalar_lea.hbm %s17, %s4256
          %s4259 = sshll.u32 %s4243, 4
          %s4260 = int_to_ptr.vmem [resolvable:$true] %s4259
          %4262 = dma.vmem_to_hbm [thread:$0]  %s4260, 384, %s4257, %s4240
        $region96: #{tpu_custom_call.1} parent=87 // pred_fallthru
          _
        // Predicated region
        $region97: #{tpu_custom_call.1} parent=87 // pred_check
          %p4263 = pneg %p443
        $region98: #{tpu_custom_call.1} parent=87 // pred_check_branch
          %4265 = sbr.rel (%p4263) target = $region100
        $region99: #{tpu_custom_call.1} parent=87 // pred_region
          %s4267 = ssub.s32 96, 96
          %4268 = vsyncadd %s4245, %s4267
          %s4269 = smul.addr %s37, 3
          %s4270 = smul.addr %s4269, 32
          %s4271 = scalar_lea.hbm %s18, %s4270
          %s4273 = sshll.u32 %s4248, 4
          %s4274 = int_to_ptr.vmem [resolvable:$true] %s4273
          %4276 = dma.vmem_to_hbm [thread:$0]  %s4274, 96, %s4271, %s4245
        $region100: #{tpu_custom_call.1} parent=87 // pred_fallthru
          _
      $region88: #{tpu_custom_call.1} parent=5 // pred_fallthru
        _
      %p4277 = scmp.le.s32.totalorder 2, %s32
      // Predicated region
      $region101: #{tpu_custom_call.1} parent=5 // pred_check
        %p4278 = pneg %p4277
      $region102: #{tpu_custom_call.1} parent=5 // pred_check_branch
        %4280 = sbr.rel (%p4278) target = $region104
      $region103: #{tpu_custom_call.1} parent=5 // pred_region
        %s4281 = ssub.s32 %s32, 2
        // Predicated region
        $region105: #{tpu_custom_call.1} parent=103 // pred_check
          %p4282 = pneg %p423
        $region106: #{tpu_custom_call.1} parent=103 // pred_check_branch
          %4284 = sbr.rel (%p4282) target = $region108
        $region107: #{tpu_custom_call.1} parent=103 // pred_region
          %s4285 = sand.u32 %s408, 1
          %s4286 = scalar_lea.sflag [#allocation4], %s4285
          %s4287 = sand.u32 %s408, 1
          %s4288 = smul.addr %s4287, 24
          %s4289 = scalar_lea.vmem [#allocation5], %s4288
          %4290 = dma.done %s4286, 384
        $region108: #{tpu_custom_call.1} parent=103 // pred_fallthru
          _
        // Predicated region
        $region109: #{tpu_custom_call.1} parent=103 // pred_check
          %p4291 = pneg %p449
        $region110: #{tpu_custom_call.1} parent=103 // pred_check_branch
          %4293 = sbr.rel (%p4291) target = $region112
        $region111: #{tpu_custom_call.1} parent=103 // pred_region
          %s4294 = sand.u32 %s434, 1
          %s4295 = scalar_lea.sflag [#allocation7], %s4294
          %s4296 = sand.u32 %s434, 1
          %s4297 = smul.addr %s4296, 6
          %s4298 = scalar_lea.vmem [#allocation6], %s4297
          %4299 = dma.done %s4295, 96
        $region112: #{tpu_custom_call.1} parent=103 // pred_fallthru
          _
      $region104: #{tpu_custom_call.1} parent=5 // pred_fallthru
        _
    $region6: #{tpu_custom_call.1} parent=1 // loop_footer
      %s36 = sadd.s32 1, %s32
    $region7: #{tpu_custom_call.1} parent=1 // loop_footer_branch
      %31 = sbr.rel target = $region3
    $region8: #{tpu_custom_call.1} parent=1 // loop_exit
      _
    %4300 = vsyncpa [#allocation3], 1
    %s4301 = scalar_lea.sflag [#allocation3], 1
    %4302 = vsyncpa %s4301, 1
    %4303 = vsyncpa [#allocation4], 1
    %s4304 = scalar_lea.sflag [#allocation4], 1
    %4305 = vsyncpa %s4304, 1
    %4306 = vsyncpa [#allocation7], 1
    %s4307 = scalar_lea.sflag [#allocation7], 1
    %4308 = vsyncpa %s4307, 1

</llo_original>
